<compile_context>
chip_gen: v6e
topology: v6e:2x2x1
jax: 0.10.0
libtpu: 0.0.40
codegen_flags: <defaults>
</compile_context>

<pallas_src>
import math
import numpy as np
import jax
import jax.numpy as jnp
from jax.experimental import pallas as pl
from jax.experimental.pallas import tpu as pltpu

# ---- config: TransformerGlow with hidden_size=32, n_flow=3, n_block=3 ----
B = 8            # batch
S = 8            # sequence length
HIDDEN = 32      # transformer hidden size == Glow in_channel (C0)
N_FLOW = 3
N_BLOCK = 3
FILT = 32        # AdditiveCoupling filter_size

LOG_2PI = math.log(2.0 * math.pi)


# ---------------------------------------------------------------------------
# Static structure of the flow: for every (block, flow) the logical->stored
# channel permutation after that flow's InvConv2d reversal, the contiguous
# stored-lane range that is "active" in each block, and the permutation that
# assembles z = cat(all_eps + [z_final]) from the stored layout.
# ---------------------------------------------------------------------------
def _flow_structure():
    perms, active, z_parts = [], [], []
    cur = np.arange(HIDDEN)
    for b in range(N_BLOCK):
        c = cur.shape[0]
        half = c // 2
        srt = np.sort(cur)
        assert np.array_equal(srt, np.arange(srt[0], srt[0] + c)), \
            "active channel set must be a contiguous lane range"
        active.append((int(srt[0]), int(srt[0]) + c))
        pb = []
        for _ in range(N_FLOW):
            cur = cur[::-1].copy()          # InvConv2d == channel reversal
            pb.append(cur.copy())
        perms.append(pb)
        if b != N_BLOCK - 1:
            z_parts.append(cur[half:].copy())   # eps of the split (logical order)
            cur = cur[:half].copy()
        else:
            z_parts.append(cur.copy())          # final z (logical order)
    return perms, active, np.concatenate(z_parts)


PERMS, ACTIVE_RANGES, ZPERM = _flow_structure()


# ---------------------------------------------------------------------------
# Host-side parameter folding (pure numpy, runs once):
#   W1_eff[b,f]  : (32, FILT)  x1-rows permuted into stored positions, rest 0
#   W2[b,f]      : (FILT, FILT) unchanged
#   Wz_eff[b,f]  : (FILT, 32)  ZeroConv weight * exp(3*scale), scattered into
#                               the stored x2 positions, rest 0
#   bz_eff[b,f]  : (1, 32)     ZeroConv bias   * exp(3*scale), scattered, rest 0
#   Pz           : (32, 32)    permutation matrix: z = x_stored @ Pz
# ---------------------------------------------------------------------------
def _fold_params(W1, W2, Wz, bz, sz):
    W1e = np.zeros((N_BLOCK, N_FLOW, HIDDEN, FILT), np.float32)
    W2a = np.zeros((N_BLOCK, N_FLOW, FILT, FILT), np.float32)
    Wze = np.zeros((N_BLOCK, N_FLOW, FILT, HIDDEN), np.float32)
    bze = np.zeros((N_BLOCK, N_FLOW, 1, HIDDEN), np.float32)
    c = HIDDEN
    for b in range(N_BLOCK):
        half = c // 2
        for f in range(N_FLOW):
            perm = PERMS[b][f]                              # logical -> stored
            W1e[b, f][perm[:half], :] = np.asarray(W1[b][f], np.float32)
            W2a[b, f] = np.asarray(W2[b][f], np.float32)
            scale = np.exp(3.0 * np.asarray(sz[b][f], np.float32))       # (half,)
            Wze[b, f][:, perm[half:]] = np.asarray(Wz[b][f], np.float32) * scale[None, :]
            bze[b, f][0, perm[half:]] = np.asarray(bz[b][f], np.float32) * scale
        c = half
    Pz = np.zeros((HIDDEN, HIDDEN), np.float32)
    Pz[ZPERM, np.arange(HIDDEN)] = 1.0
    return (jnp.asarray(W1e), jnp.asarray(W2a), jnp.asarray(Wze),
            jnp.asarray(bze), jnp.asarray(Pz))


# ---------------------------------------------------------------------------
# Pallas kernel
# ---------------------------------------------------------------------------
def glow_kernel(hid_ref, mask_ref, w1_ref, w2_ref, wz_ref, bz_ref, pz_ref,
                z_ref, loss_ref):
    hid = hid_ref[...]                                   # (B, S, HIDDEN) f32
    mask = mask_ref[...]                                 # (B, S) f32

    # ---- simple_pooling('mean') (guarded against all-zero mask rows) ----
    lengths = jnp.maximum(jnp.sum(mask, axis=1, keepdims=True), 1.0)   # (B, 1)
    x = jnp.sum(hid * mask[:, :, None], axis=1) / lengths              # (B, C0)

    obj = jnp.zeros((x.shape[0], 1), jnp.float32)
    lane = jax.lax.broadcasted_iota(jnp.int32, (1, HIDDEN), 1)

    for b in range(N_BLOCK):
        lo, hi = ACTIVE_RANGES[b]
        full = (lo == 0 and hi == HIDDEN)
        abool = None if full else ((lane >= lo) & (lane < hi))
        for f in range(N_FLOW):
            # --- Flow.actnorm (ddi data-dependent init, logdet=True),
            #     restricted to this block's active stored channels ---
            mean = jnp.mean(x, axis=0, keepdims=True)
            std = jnp.sqrt(jnp.mean((x - mean) ** 2, axis=0, keepdims=True))
            inv = pl.reciprocal(std + 1e-6)              # == exp(logs)
            logs = -jnp.log(std + 1e-6)                  # only for the logdet
            if full:
                obj = obj + jnp.sum(logs)
                x = inv * (x - mean)
            else:
                obj = obj + jnp.sum(jnp.where(abool, logs, 0.0))
                x = jnp.where(abool, inv * (x - mean), x)

            # --- Flow.invconv + Flow.coupling ---
            # The channel reversal and the x1/x2 split are folded into the
            # (zero-padded, permuted) weights, so x stays full-width in one
            # fixed lane layout: 3 small MXU matmuls per flow, no slices.
            h = jnp.dot(x, w1_ref[b, f], preferred_element_type=jnp.float32)
            hm = jnp.mean(h, axis=0, keepdims=True)
            hs = jnp.sqrt(jnp.mean((h - hm) ** 2, axis=0, keepdims=True))
            h = jnp.maximum(pl.reciprocal(hs + 1e-6) * (h - hm), 0.0)
            h = jnp.dot(h, w2_ref[b, f], preferred_element_type=jnp.float32)
            hm = jnp.mean(h, axis=0, keepdims=True)
            hs = jnp.sqrt(jnp.mean((h - hm) ** 2, axis=0, keepdims=True))
            h = jnp.maximum(pl.reciprocal(hs + 1e-6) * (h - hm), 0.0)
            # ZeroConv2d with exp(3*scale) pre-folded; its output is already
            # scattered into the stored x2 lanes (zeros everywhere else), so
            # the coupling is a plain full-width add.
            shift = jnp.dot(h, wz_ref[b, f], preferred_element_type=jnp.float32) \
                    + bz_ref[b, f]
            x = x + shift
        # Block split: nothing moves.  The split-off half simply freezes (the
        # next block's active mask excludes its lanes) and its N(0,1) log-prob
        # is picked up by the single full-width prior below.

    # N(0,1) prior over all stored channels == split log_p terms + final prior.
    obj = obj + jnp.sum(-0.5 * x * x - 0.5 * LOG_2PI, axis=1, keepdims=True)
    loss = jnp.mean(-obj) * (1.0 / (math.log(2.0) * 1 * 1 * HIDDEN))

    # z = cat(all_eps + [z_final], dim=1): a static permutation of the stored
    # channels, applied as one tiny matmul -> a single lane-dense store.
    z_ref[...] = jnp.dot(x, pz_ref[...], preferred_element_type=jnp.float32)
    loss_ref[0, 0] = loss


def transformer_glow_forward(hidden_states, attention_mask, folded_params):
    w1e, w2a, wze, bze, pz = folded_params
    nb = hidden_states.shape[0]
    z, loss = pl.pallas_call(
        glow_kernel,
        out_shape=(
            jax.ShapeDtypeStruct((nb, HIDDEN), jnp.float32),
            jax.ShapeDtypeStruct((1, 1), jnp.float32),
        ),
        in_specs=[pl.BlockSpec(memory_space=pltpu.MemorySpace.VMEM)] * 7,
        out_specs=(
            pl.BlockSpec(memory_space=pltpu.MemorySpace.VMEM),
            pl.BlockSpec(memory_space=pltpu.MemorySpace.SMEM),
        ),
    )(hidden_states, attention_mask, w1e, w2a, wze, bze, pz)
    return z, loss[0, 0]


# ---------------------------------------------------------------------------
# Pure-JAX reference (mirrors the PyTorch module semantics, unfolded weights)
# ---------------------------------------------------------------------------
def glow_reference(hid, mask, W1, W2, Wz, bz, sz):
    lengths = jnp.sum(mask, axis=1, keepdims=True)
    x = jnp.sum(hid * mask[:, :, None], axis=1) / lengths
    c0 = x.shape[1]
    obj = jnp.zeros((x.shape[0], 1), jnp.float32)
    eps_parts = []
    for b in range(N_BLOCK):
        c = x.shape[1]
        half = c // 2
        for f in range(N_FLOW):
            m = x.mean(0, keepdims=True)
            s = jnp.sqrt(((x - m) ** 2).mean(0, keepdims=True))
            logs = jnp.log(1.0 / (s + 1e-6))
            obj = obj + jnp.sum(logs)
            x = jnp.exp(logs) * (x - m)
            x = x[:, ::-1]                              # InvConv2d reversal
            x1, x2 = x[:, :half], x[:, half:]
            h = x1 @ W1[b][f]
            m = h.mean(0, keepdims=True)
            s = jnp.sqrt(((h - m) ** 2).mean(0, keepdims=True))
            h = jnp.maximum(jnp.exp(jnp.log(1.0 / (s + 1e-6))) * (h - m), 0.0)
            h = h @ W2[b][f]
            m = h.mean(0, keepdims=True)
            s = jnp.sqrt(((h - m) ** 2).mean(0, keepdims=True))
            h = jnp.maximum(jnp.exp(jnp.log(1.0 / (s + 1e-6))) * (h - m), 0.0)
            shift = (h @ Wz[b][f] + bz[b][f][None, :]) * jnp.exp(sz[b][f][None, :] * 3.0)
            x = jnp.concatenate([x1, x2 + shift], axis=1)
        if b != N_BLOCK - 1:
            x1, x2 = x[:, :half], x[:, half:]
            obj = obj + jnp.sum(-0.5 * x2 * x2 - 0.5 * LOG_2PI, axis=1, keepdims=True)
            eps_parts.append(x2)
            x = x1
    obj = obj + jnp.sum(-0.5 * x * x - 0.5 * LOG_2PI, axis=1, keepdims=True)
    loss = jnp.mean(-obj / (math.log(2.0) * c0))
    z = jnp.concatenate(eps_parts + [x], axis=1)
    return z, loss


if __name__ == "__main__":
    key = jax.random.PRNGKey(0)
    k_hid, k_par = jax.random.split(key)

    # TODO(synk): the pretrained HuggingFace transformer backbone is not
    # translatable to a Pallas kernel; synthetic hidden_states stand in for it.
    hidden_states = jax.random.normal(k_hid, (B, S, HIDDEN), dtype=jnp.float32)
    lens = jnp.array([S, S - 3, S - 1, S - 2, S, S - 4, S - 1, 2], jnp.int32)[:B]
    attention_mask = (jnp.arange(S)[None, :] < lens[:, None]).astype(jnp.float32)

    # Glow parameters in "PyTorch layout" (1x1 conv weights stored (in, out)).
    # AdditiveCoupling convs ~ N(0, 0.05).  ZeroConv2d initializes its weight,
    # bias and scale to zero; small non-zero values are used here so the folded
    # shift path is exercised numerically (trained weights are arbitrary).
    # ActNorm loc/logscale params are omitted: with ddi=True and initialized==0
    # the first forward overwrites them with data-dependent values.
    W1, W2, Wz, bz, sz = [], [], [], [], []
    c = HIDDEN
    pk = k_par
    for b in range(N_BLOCK):
        half = c // 2
        W1.append([]); W2.append([]); Wz.append([]); bz.append([]); sz.append([])
        for f in range(N_FLOW):
            pk, k1, k2, k3, k4, k5 = jax.random.split(pk, 6)
            W1[b].append(0.05 * jax.random.normal(k1, (half, FILT), jnp.float32))
            W2[b].append(0.05 * jax.random.normal(k2, (FILT, FILT), jnp.float32))
            Wz[b].append(0.02 * jax.random.normal(k3, (FILT, half), jnp.float32))
            bz[b].append(0.02 * jax.random.normal(k4, (half,), jnp.float32))
            sz[b].append(0.02 * jax.random.normal(k5, (half,), jnp.float32))
        c = half

    folded = _fold_params(W1, W2, Wz, bz, sz)
    z, loss = transformer_glow_forward(hidden_states, attention_mask, folded)
    jax.block_until_ready((z, loss))

    z_ref, loss_ref = glow_reference(hidden_states, attention_mask,
                                     W1, W2, Wz, bz, sz)
    np.testing.assert_allclose(np.asarray(z), np.asarray(z_ref),
                               rtol=1e-3, atol=1e-3)
    np.testing.assert_allclose(float(loss), float(loss_ref),
                               rtol=1e-3, atol=1e-3)
    print("KERNEL_OK")
</pallas_src>

<mosaic_0001>
module attributes {stable_mosaic.version = 11 : i64} {
  func.func @glow_kernel(%arg0: memref<8x8x32xf32, #tpu.memory_space<vmem>>, %arg1: memref<8x8xf32, #tpu.memory_space<vmem>>, %arg2: memref<3x3x32x32xf32, #tpu.memory_space<vmem>>, %arg3: memref<3x3x32x32xf32, #tpu.memory_space<vmem>>, %arg4: memref<3x3x32x32xf32, #tpu.memory_space<vmem>>, %arg5: memref<3x3x1x32xf32, #tpu.memory_space<vmem>>, %arg6: memref<32x32xf32, #tpu.memory_space<vmem>>, %arg7: memref<8x32xf32, #tpu.memory_space<vmem>>, %arg8: memref<1x1xf32, #tpu.memory_space<smem>>) attributes {dimension_semantics = [], scalar_prefetch = 0 : i64, scratch_operands = 0 : i64, tpu.core_type = #tpu.core_type<tc>} {
    %c0 = arith.constant 0 : index
    %c0_0 = arith.constant 0 : index
    %c0_1 = arith.constant 0 : index
    %0 = vector.load %arg0[%c0, %c0_0, %c0_1] : memref<8x8x32xf32, #tpu.memory_space<vmem>>, vector<8x8x32xf32>
    %c0_2 = arith.constant 0 : index
    %c0_3 = arith.constant 0 : index
    %1 = vector.load %arg1[%c0_2, %c0_3] : memref<8x8xf32, #tpu.memory_space<vmem>>, vector<8x8xf32>
    %cst = arith.constant dense<0.000000e+00> : vector<8xf32>
    %2 = vector.multi_reduction <add>, %1, %cst [1] : vector<8x8xf32> to vector<8xf32>
    %3 = vector.shape_cast %2 : vector<8xf32> to vector<8x1xf32>
    %cst_4 = arith.constant 1.000000e+00 : f32
    %4 = vector.broadcast %cst_4 : f32 to vector<8x1xf32>
    %5 = arith.maximumf %3, %4 : vector<8x1xf32>
    %6 = vector.shape_cast %1 : vector<8x8xf32> to vector<8x8x1xf32>
    %7 = vector.broadcast %6 : vector<8x8x1xf32> to vector<8x8x32xf32>
    %8 = arith.mulf %0, %7 : vector<8x8x32xf32>
    %cst_5 = arith.constant dense<0.000000e+00> : vector<8x32xf32>
    %9 = vector.multi_reduction <add>, %8, %cst_5 [1] : vector<8x8x32xf32> to vector<8x32xf32>
    %10 = vector.broadcast %5 : vector<8x1xf32> to vector<8x32xf32>
    %11 = arith.divf %9, %10 : vector<8x32xf32>
    %cst_6 = arith.constant 0.000000e+00 : f32
    %12 = vector.broadcast %cst_6 : f32 to vector<8x1xf32>
    %13 = tpu.iota {dimensions = array<i32: 1>} : vector<1x32xi32>
    %cst_7 = arith.constant dense<0.000000e+00> : vector<32xf32>
    %14 = vector.multi_reduction <add>, %11, %cst_7 [0] : vector<8x32xf32> to vector<32xf32>
    %15 = vector.shape_cast %14 : vector<32xf32> to vector<1x32xf32>
    %cst_8 = arith.constant 8.000000e+00 : f32
    %16 = vector.broadcast %cst_8 : f32 to vector<1x32xf32>
    %17 = arith.divf %15, %16 : vector<1x32xf32>
    %18 = vector.broadcast %17 : vector<1x32xf32> to vector<8x32xf32>
    %19 = arith.subf %11, %18 : vector<8x32xf32>
    %20 = arith.mulf %19, %19 : vector<8x32xf32>
    %cst_9 = arith.constant dense<0.000000e+00> : vector<32xf32>
    %21 = vector.multi_reduction <add>, %20, %cst_9 [0] : vector<8x32xf32> to vector<32xf32>
    %22 = vector.shape_cast %21 : vector<32xf32> to vector<1x32xf32>
    %cst_10 = arith.constant 8.000000e+00 : f32
    %23 = vector.broadcast %cst_10 : f32 to vector<1x32xf32>
    %24 = arith.divf %22, %23 : vector<1x32xf32>
    %25 = math.sqrt %24 : vector<1x32xf32>
    %cst_11 = arith.constant 9.99999997E-7 : f32
    %26 = vector.broadcast %cst_11 : f32 to vector<1x32xf32>
    %27 = arith.addf %25, %26 : vector<1x32xf32>
    %28 = tpu.reciprocal %27 : vector<1x32xf32> -> vector<1x32xf32>
    %cst_12 = arith.constant 9.99999997E-7 : f32
    %29 = vector.broadcast %cst_12 : f32 to vector<1x32xf32>
    %30 = arith.addf %25, %29 : vector<1x32xf32>
    %31 = math.log %30 : vector<1x32xf32>
    %cst_13 = arith.constant 0.000000e+00 : f32
    %32 = vector.broadcast %cst_13 : f32 to vector<1x32xf32>
    %33 = arith.subf %32, %31 : vector<1x32xf32>
    %34 = vector.shape_cast %33 : vector<1x32xf32> to vector<1x1x32xf32>
    %cst_14 = arith.constant dense<0.000000e+00> : vector<1xf32>
    %35 = vector.multi_reduction <add>, %34, %cst_14 [1, 2] : vector<1x1x32xf32> to vector<1xf32>
    %36 = vector.shape_cast %35 : vector<1xf32> to vector<1x1x1xf32>
    %37 = vector.extract %36[0, 0, 0] : f32 from vector<1x1x1xf32>
    %38 = vector.broadcast %37 : f32 to vector<8x1xf32>
    %39 = arith.addf %12, %38 : vector<8x1xf32>
    %40 = vector.broadcast %17 : vector<1x32xf32> to vector<8x32xf32>
    %41 = arith.subf %11, %40 : vector<8x32xf32>
    %42 = vector.broadcast %28 : vector<1x32xf32> to vector<8x32xf32>
    %43 = arith.mulf %42, %41 : vector<8x32xf32>
    %c0_15 = arith.constant 0 : index
    %c0_16 = arith.constant 0 : index
    %c0_17 = arith.constant 0 : index
    %c0_18 = arith.constant 0 : index
    %44 = vector.load %arg2[%c0_15, %c0_16, %c0_17, %c0_18] : memref<3x3x32x32xf32, #tpu.memory_space<vmem>>, vector<1x1x32x32xf32>
    %45 = vector.shape_cast %44 : vector<1x1x32x32xf32> to vector<32x32xf32>
    %cst_19 = arith.constant dense<0.000000e+00> : vector<8x32xf32>
    %46 = tpu.matmul %43, %45, %cst_19 {dimension_numbers = #tpu.dot_dimension_numbers<[1], [0], [0], [1], [0, 0, 1, 1], [], []>} : vector<8x32xf32>, vector<32x32xf32>, vector<8x32xf32> -> vector<8x32xf32>
    %cst_20 = arith.constant dense<0.000000e+00> : vector<32xf32>
    %47 = vector.multi_reduction <add>, %46, %cst_20 [0] : vector<8x32xf32> to vector<32xf32>
    %48 = vector.shape_cast %47 : vector<32xf32> to vector<1x32xf32>
    %cst_21 = arith.constant 8.000000e+00 : f32
    %49 = vector.broadcast %cst_21 : f32 to vector<1x32xf32>
    %50 = arith.divf %48, %49 : vector<1x32xf32>
    %51 = vector.broadcast %50 : vector<1x32xf32> to vector<8x32xf32>
    %52 = arith.subf %46, %51 : vector<8x32xf32>
    %53 = arith.mulf %52, %52 : vector<8x32xf32>
    %cst_22 = arith.constant dense<0.000000e+00> : vector<32xf32>
    %54 = vector.multi_reduction <add>, %53, %cst_22 [0] : vector<8x32xf32> to vector<32xf32>
    %55 = vector.shape_cast %54 : vector<32xf32> to vector<1x32xf32>
    %cst_23 = arith.constant 8.000000e+00 : f32
    %56 = vector.broadcast %cst_23 : f32 to vector<1x32xf32>
    %57 = arith.divf %55, %56 : vector<1x32xf32>
    %58 = math.sqrt %57 : vector<1x32xf32>
    %cst_24 = arith.constant 9.99999997E-7 : f32
    %59 = vector.broadcast %cst_24 : f32 to vector<1x32xf32>
    %60 = arith.addf %58, %59 : vector<1x32xf32>
    %61 = tpu.reciprocal %60 : vector<1x32xf32> -> vector<1x32xf32>
    %62 = vector.broadcast %50 : vector<1x32xf32> to vector<8x32xf32>
    %63 = arith.subf %46, %62 : vector<8x32xf32>
    %64 = vector.broadcast %61 : vector<1x32xf32> to vector<8x32xf32>
    %65 = arith.mulf %64, %63 : vector<8x32xf32>
    %cst_25 = arith.constant 0.000000e+00 : f32
    %66 = vector.broadcast %cst_25 : f32 to vector<8x32xf32>
    %67 = arith.maximumf %65, %66 : vector<8x32xf32>
    %c0_26 = arith.constant 0 : index
    %c0_27 = arith.constant 0 : index
    %c0_28 = arith.constant 0 : index
    %c0_29 = arith.constant 0 : index
    %68 = vector.load %arg3[%c0_26, %c0_27, %c0_28, %c0_29] : memref<3x3x32x32xf32, #tpu.memory_space<vmem>>, vector<1x1x32x32xf32>
    %69 = vector.shape_cast %68 : vector<1x1x32x32xf32> to vector<32x32xf32>
    %cst_30 = arith.constant dense<0.000000e+00> : vector<8x32xf32>
    %70 = tpu.matmul %67, %69, %cst_30 {dimension_numbers = #tpu.dot_dimension_numbers<[1], [0], [0], [1], [0, 0, 1, 1], [], []>} : vector<8x32xf32>, vector<32x32xf32>, vector<8x32xf32> -> vector<8x32xf32>
    %cst_31 = arith.constant dense<0.000000e+00> : vector<32xf32>
    %71 = vector.multi_reduction <add>, %70, %cst_31 [0] : vector<8x32xf32> to vector<32xf32>
    %72 = vector.shape_cast %71 : vector<32xf32> to vector<1x32xf32>
    %cst_32 = arith.constant 8.000000e+00 : f32
    %73 = vector.broadcast %cst_32 : f32 to vector<1x32xf32>
    %74 = arith.divf %72, %73 : vector<1x32xf32>
    %75 = vector.broadcast %74 : vector<1x32xf32> to vector<8x32xf32>
    %76 = arith.subf %70, %75 : vector<8x32xf32>
    %77 = arith.mulf %76, %76 : vector<8x32xf32>
    %cst_33 = arith.constant dense<0.000000e+00> : vector<32xf32>
    %78 = vector.multi_reduction <add>, %77, %cst_33 [0] : vector<8x32xf32> to vector<32xf32>
    %79 = vector.shape_cast %78 : vector<32xf32> to vector<1x32xf32>
    %cst_34 = arith.constant 8.000000e+00 : f32
    %80 = vector.broadcast %cst_34 : f32 to vector<1x32xf32>
    %81 = arith.divf %79, %80 : vector<1x32xf32>
    %82 = math.sqrt %81 : vector<1x32xf32>
    %cst_35 = arith.constant 9.99999997E-7 : f32
    %83 = vector.broadcast %cst_35 : f32 to vector<1x32xf32>
    %84 = arith.addf %82, %83 : vector<1x32xf32>
    %85 = tpu.reciprocal %84 : vector<1x32xf32> -> vector<1x32xf32>
    %86 = vector.broadcast %74 : vector<1x32xf32> to vector<8x32xf32>
    %87 = arith.subf %70, %86 : vector<8x32xf32>
    %88 = vector.broadcast %85 : vector<1x32xf32> to vector<8x32xf32>
    %89 = arith.mulf %88, %87 : vector<8x32xf32>
    %cst_36 = arith.constant 0.000000e+00 : f32
    %90 = vector.broadcast %cst_36 : f32 to vector<8x32xf32>
    %91 = arith.maximumf %89, %90 : vector<8x32xf32>
    %c0_37 = arith.constant 0 : index
    %c0_38 = arith.constant 0 : index
    %c0_39 = arith.constant 0 : index
    %c0_40 = arith.constant 0 : index
    %92 = vector.load %arg4[%c0_37, %c0_38, %c0_39, %c0_40] : memref<3x3x32x32xf32, #tpu.memory_space<vmem>>, vector<1x1x32x32xf32>
    %93 = vector.shape_cast %92 : vector<1x1x32x32xf32> to vector<32x32xf32>
    %cst_41 = arith.constant dense<0.000000e+00> : vector<8x32xf32>
    %94 = tpu.matmul %91, %93, %cst_41 {dimension_numbers = #tpu.dot_dimension_numbers<[1], [0], [0], [1], [0, 0, 1, 1], [], []>} : vector<8x32xf32>, vector<32x32xf32>, vector<8x32xf32> -> vector<8x32xf32>
    %c0_42 = arith.constant 0 : index
    %c0_43 = arith.constant 0 : index
    %c0_44 = arith.constant 0 : index
    %c0_45 = arith.constant 0 : index
    %95 = vector.load %arg5[%c0_42, %c0_43, %c0_44, %c0_45] : memref<3x3x1x32xf32, #tpu.memory_space<vmem>>, vector<1x1x1x32xf32>
    %96 = vector.shape_cast %95 : vector<1x1x1x32xf32> to vector<1x32xf32>
    %97 = vector.broadcast %96 : vector<1x32xf32> to vector<8x32xf32>
    %98 = arith.addf %94, %97 : vector<8x32xf32>
    %99 = arith.addf %43, %98 : vector<8x32xf32>
    %cst_46 = arith.constant dense<0.000000e+00> : vector<32xf32>
    %100 = vector.multi_reduction <add>, %99, %cst_46 [0] : vector<8x32xf32> to vector<32xf32>
    %101 = vector.shape_cast %100 : vector<32xf32> to vector<1x32xf32>
    %cst_47 = arith.constant 8.000000e+00 : f32
    %102 = vector.broadcast %cst_47 : f32 to vector<1x32xf32>
    %103 = arith.divf %101, %102 : vector<1x32xf32>
    %104 = vector.broadcast %103 : vector<1x32xf32> to vector<8x32xf32>
    %105 = arith.subf %99, %104 : vector<8x32xf32>
    %106 = arith.mulf %105, %105 : vector<8x32xf32>
    %cst_48 = arith.constant dense<0.000000e+00> : vector<32xf32>
    %107 = vector.multi_reduction <add>, %106, %cst_48 [0] : vector<8x32xf32> to vector<32xf32>
    %108 = vector.shape_cast %107 : vector<32xf32> to vector<1x32xf32>
    %cst_49 = arith.constant 8.000000e+00 : f32
    %109 = vector.broadcast %cst_49 : f32 to vector<1x32xf32>
    %110 = arith.divf %108, %109 : vector<1x32xf32>
    %111 = math.sqrt %110 : vector<1x32xf32>
    %cst_50 = arith.constant 9.99999997E-7 : f32
    %112 = vector.broadcast %cst_50 : f32 to vector<1x32xf32>
    %113 = arith.addf %111, %112 : vector<1x32xf32>
    %114 = tpu.reciprocal %113 : vector<1x32xf32> -> vector<1x32xf32>
    %cst_51 = arith.constant 9.99999997E-7 : f32
    %115 = vector.broadcast %cst_51 : f32 to vector<1x32xf32>
    %116 = arith.addf %111, %115 : vector<1x32xf32>
    %117 = math.log %116 : vector<1x32xf32>
    %cst_52 = arith.constant 0.000000e+00 : f32
    %118 = vector.broadcast %cst_52 : f32 to vector<1x32xf32>
    %119 = arith.subf %118, %117 : vector<1x32xf32>
    %120 = vector.shape_cast %119 : vector<1x32xf32> to vector<1x1x32xf32>
    %cst_53 = arith.constant dense<0.000000e+00> : vector<1xf32>
    %121 = vector.multi_reduction <add>, %120, %cst_53 [1, 2] : vector<1x1x32xf32> to vector<1xf32>
    %122 = vector.shape_cast %121 : vector<1xf32> to vector<1x1x1xf32>
    %123 = vector.extract %122[0, 0, 0] : f32 from vector<1x1x1xf32>
    %124 = vector.broadcast %123 : f32 to vector<8x1xf32>
    %125 = arith.addf %39, %124 : vector<8x1xf32>
    %126 = vector.broadcast %103 : vector<1x32xf32> to vector<8x32xf32>
    %127 = arith.subf %99, %126 : vector<8x32xf32>
    %128 = vector.broadcast %114 : vector<1x32xf32> to vector<8x32xf32>
    %129 = arith.mulf %128, %127 : vector<8x32xf32>
    %c0_54 = arith.constant 0 : index
    %c1 = arith.constant 1 : index
    %c0_55 = arith.constant 0 : index
    %c0_56 = arith.constant 0 : index
    %130 = vector.load %arg2[%c0_54, %c1, %c0_55, %c0_56] : memref<3x3x32x32xf32, #tpu.memory_space<vmem>>, vector<1x1x32x32xf32>
    %131 = vector.shape_cast %130 : vector<1x1x32x32xf32> to vector<32x32xf32>
    %cst_57 = arith.constant dense<0.000000e+00> : vector<8x32xf32>
    %132 = tpu.matmul %129, %131, %cst_57 {dimension_numbers = #tpu.dot_dimension_numbers<[1], [0], [0], [1], [0, 0, 1, 1], [], []>} : vector<8x32xf32>, vector<32x32xf32>, vector<8x32xf32> -> vector<8x32xf32>
    %cst_58 = arith.constant dense<0.000000e+00> : vector<32xf32>
    %133 = vector.multi_reduction <add>, %132, %cst_58 [0] : vector<8x32xf32> to vector<32xf32>
    %134 = vector.shape_cast %133 : vector<32xf32> to vector<1x32xf32>
    %cst_59 = arith.constant 8.000000e+00 : f32
    %135 = vector.broadcast %cst_59 : f32 to vector<1x32xf32>
    %136 = arith.divf %134, %135 : vector<1x32xf32>
    %137 = vector.broadcast %136 : vector<1x32xf32> to vector<8x32xf32>
    %138 = arith.subf %132, %137 : vector<8x32xf32>
    %139 = arith.mulf %138, %138 : vector<8x32xf32>
    %cst_60 = arith.constant dense<0.000000e+00> : vector<32xf32>
    %140 = vector.multi_reduction <add>, %139, %cst_60 [0] : vector<8x32xf32> to vector<32xf32>
    %141 = vector.shape_cast %140 : vector<32xf32> to vector<1x32xf32>
    %cst_61 = arith.constant 8.000000e+00 : f32
    %142 = vector.broadcast %cst_61 : f32 to vector<1x32xf32>
    %143 = arith.divf %141, %142 : vector<1x32xf32>
    %144 = math.sqrt %143 : vector<1x32xf32>
    %cst_62 = arith.constant 9.99999997E-7 : f32
    %145 = vector.broadcast %cst_62 : f32 to vector<1x32xf32>
    %146 = arith.addf %144, %145 : vector<1x32xf32>
    %147 = tpu.reciprocal %146 : vector<1x32xf32> -> vector<1x32xf32>
    %148 = vector.broadcast %136 : vector<1x32xf32> to vector<8x32xf32>
    %149 = arith.subf %132, %148 : vector<8x32xf32>
    %150 = vector.broadcast %147 : vector<1x32xf32> to vector<8x32xf32>
    %151 = arith.mulf %150, %149 : vector<8x32xf32>
    %cst_63 = arith.constant 0.000000e+00 : f32
    %152 = vector.broadcast %cst_63 : f32 to vector<8x32xf32>
    %153 = arith.maximumf %151, %152 : vector<8x32xf32>
    %c0_64 = arith.constant 0 : index
    %c1_65 = arith.constant 1 : index
    %c0_66 = arith.constant 0 : index
    %c0_67 = arith.constant 0 : index
    %154 = vector.load %arg3[%c0_64, %c1_65, %c0_66, %c0_67] : memref<3x3x32x32xf32, #tpu.memory_space<vmem>>, vector<1x1x32x32xf32>
    %155 = vector.shape_cast %154 : vector<1x1x32x32xf32> to vector<32x32xf32>
    %cst_68 = arith.constant dense<0.000000e+00> : vector<8x32xf32>
    %156 = tpu.matmul %153, %155, %cst_68 {dimension_numbers = #tpu.dot_dimension_numbers<[1], [0], [0], [1], [0, 0, 1, 1], [], []>} : vector<8x32xf32>, vector<32x32xf32>, vector<8x32xf32> -> vector<8x32xf32>
    %cst_69 = arith.constant dense<0.000000e+00> : vector<32xf32>
    %157 = vector.multi_reduction <add>, %156, %cst_69 [0] : vector<8x32xf32> to vector<32xf32>
    %158 = vector.shape_cast %157 : vector<32xf32> to vector<1x32xf32>
    %cst_70 = arith.constant 8.000000e+00 : f32
    %159 = vector.broadcast %cst_70 : f32 to vector<1x32xf32>
    %160 = arith.divf %158, %159 : vector<1x32xf32>
    %161 = vector.broadcast %160 : vector<1x32xf32> to vector<8x32xf32>
    %162 = arith.subf %156, %161 : vector<8x32xf32>
    %163 = arith.mulf %162, %162 : vector<8x32xf32>
    %cst_71 = arith.constant dense<0.000000e+00> : vector<32xf32>
    %164 = vector.multi_reduction <add>, %163, %cst_71 [0] : vector<8x32xf32> to vector<32xf32>
    %165 = vector.shape_cast %164 : vector<32xf32> to vector<1x32xf32>
    %cst_72 = arith.constant 8.000000e+00 : f32
    %166 = vector.broadcast %cst_72 : f32 to vector<1x32xf32>
    %167 = arith.divf %165, %166 : vector<1x32xf32>
    %168 = math.sqrt %167 : vector<1x32xf32>
    %cst_73 = arith.constant 9.99999997E-7 : f32
    %169 = vector.broadcast %cst_73 : f32 to vector<1x32xf32>
    %170 = arith.addf %168, %169 : vector<1x32xf32>
    %171 = tpu.reciprocal %170 : vector<1x32xf32> -> vector<1x32xf32>
    %172 = vector.broadcast %160 : vector<1x32xf32> to vector<8x32xf32>
    %173 = arith.subf %156, %172 : vector<8x32xf32>
    %174 = vector.broadcast %171 : vector<1x32xf32> to vector<8x32xf32>
    %175 = arith.mulf %174, %173 : vector<8x32xf32>
    %cst_74 = arith.constant 0.000000e+00 : f32
    %176 = vector.broadcast %cst_74 : f32 to vector<8x32xf32>
    %177 = arith.maximumf %175, %176 : vector<8x32xf32>
    %c0_75 = arith.constant 0 : index
    %c1_76 = arith.constant 1 : index
    %c0_77 = arith.constant 0 : index
    %c0_78 = arith.constant 0 : index
    %178 = vector.load %arg4[%c0_75, %c1_76, %c0_77, %c0_78] : memref<3x3x32x32xf32, #tpu.memory_space<vmem>>, vector<1x1x32x32xf32>
    %179 = vector.shape_cast %178 : vector<1x1x32x32xf32> to vector<32x32xf32>
    %cst_79 = arith.constant dense<0.000000e+00> : vector<8x32xf32>
    %180 = tpu.matmul %177, %179, %cst_79 {dimension_numbers = #tpu.dot_dimension_numbers<[1], [0], [0], [1], [0, 0, 1, 1], [], []>} : vector<8x32xf32>, vector<32x32xf32>, vector<8x32xf32> -> vector<8x32xf32>
    %c0_80 = arith.constant 0 : index
    %c1_81 = arith.constant 1 : index
    %c0_82 = arith.constant 0 : index
    %c0_83 = arith.constant 0 : index
    %181 = vector.load %arg5[%c0_80, %c1_81, %c0_82, %c0_83] : memref<3x3x1x32xf32, #tpu.memory_space<vmem>>, vector<1x1x1x32xf32>
    %182 = vector.shape_cast %181 : vector<1x1x1x32xf32> to vector<1x32xf32>
    %183 = vector.broadcast %182 : vector<1x32xf32> to vector<8x32xf32>
    %184 = arith.addf %180, %183 : vector<8x32xf32>
    %185 = arith.addf %129, %184 : vector<8x32xf32>
    %cst_84 = arith.constant dense<0.000000e+00> : vector<32xf32>
    %186 = vector.multi_reduction <add>, %185, %cst_84 [0] : vector<8x32xf32> to vector<32xf32>
    %187 = vector.shape_cast %186 : vector<32xf32> to vector<1x32xf32>
    %cst_85 = arith.constant 8.000000e+00 : f32
    %188 = vector.broadcast %cst_85 : f32 to vector<1x32xf32>
    %189 = arith.divf %187, %188 : vector<1x32xf32>
    %190 = vector.broadcast %189 : vector<1x32xf32> to vector<8x32xf32>
    %191 = arith.subf %185, %190 : vector<8x32xf32>
    %192 = arith.mulf %191, %191 : vector<8x32xf32>
    %cst_86 = arith.constant dense<0.000000e+00> : vector<32xf32>
    %193 = vector.multi_reduction <add>, %192, %cst_86 [0] : vector<8x32xf32> to vector<32xf32>
    %194 = vector.shape_cast %193 : vector<32xf32> to vector<1x32xf32>
    %cst_87 = arith.constant 8.000000e+00 : f32
    %195 = vector.broadcast %cst_87 : f32 to vector<1x32xf32>
    %196 = arith.divf %194, %195 : vector<1x32xf32>
    %197 = math.sqrt %196 : vector<1x32xf32>
    %cst_88 = arith.constant 9.99999997E-7 : f32
    %198 = vector.broadcast %cst_88 : f32 to vector<1x32xf32>
    %199 = arith.addf %197, %198 : vector<1x32xf32>
    %200 = tpu.reciprocal %199 : vector<1x32xf32> -> vector<1x32xf32>
    %cst_89 = arith.constant 9.99999997E-7 : f32
    %201 = vector.broadcast %cst_89 : f32 to vector<1x32xf32>
    %202 = arith.addf %197, %201 : vector<1x32xf32>
    %203 = math.log %202 : vector<1x32xf32>
    %cst_90 = arith.constant 0.000000e+00 : f32
    %204 = vector.broadcast %cst_90 : f32 to vector<1x32xf32>
    %205 = arith.subf %204, %203 : vector<1x32xf32>
    %206 = vector.shape_cast %205 : vector<1x32xf32> to vector<1x1x32xf32>
    %cst_91 = arith.constant dense<0.000000e+00> : vector<1xf32>
    %207 = vector.multi_reduction <add>, %206, %cst_91 [1, 2] : vector<1x1x32xf32> to vector<1xf32>
    %208 = vector.shape_cast %207 : vector<1xf32> to vector<1x1x1xf32>
    %209 = vector.extract %208[0, 0, 0] : f32 from vector<1x1x1xf32>
    %210 = vector.broadcast %209 : f32 to vector<8x1xf32>
    %211 = arith.addf %125, %210 : vector<8x1xf32>
    %212 = vector.broadcast %189 : vector<1x32xf32> to vector<8x32xf32>
    %213 = arith.subf %185, %212 : vector<8x32xf32>
    %214 = vector.broadcast %200 : vector<1x32xf32> to vector<8x32xf32>
    %215 = arith.mulf %214, %213 : vector<8x32xf32>
    %c0_92 = arith.constant 0 : index
    %c2 = arith.constant 2 : index
    %c0_93 = arith.constant 0 : index
    %c0_94 = arith.constant 0 : index
    %216 = vector.load %arg2[%c0_92, %c2, %c0_93, %c0_94] : memref<3x3x32x32xf32, #tpu.memory_space<vmem>>, vector<1x1x32x32xf32>
    %217 = vector.shape_cast %216 : vector<1x1x32x32xf32> to vector<32x32xf32>
    %cst_95 = arith.constant dense<0.000000e+00> : vector<8x32xf32>
    %218 = tpu.matmul %215, %217, %cst_95 {dimension_numbers = #tpu.dot_dimension_numbers<[1], [0], [0], [1], [0, 0, 1, 1], [], []>} : vector<8x32xf32>, vector<32x32xf32>, vector<8x32xf32> -> vector<8x32xf32>
    %cst_96 = arith.constant dense<0.000000e+00> : vector<32xf32>
    %219 = vector.multi_reduction <add>, %218, %cst_96 [0] : vector<8x32xf32> to vector<32xf32>
    %220 = vector.shape_cast %219 : vector<32xf32> to vector<1x32xf32>
    %cst_97 = arith.constant 8.000000e+00 : f32
    %221 = vector.broadcast %cst_97 : f32 to vector<1x32xf32>
    %222 = arith.divf %220, %221 : vector<1x32xf32>
    %223 = vector.broadcast %222 : vector<1x32xf32> to vector<8x32xf32>
    %224 = arith.subf %218, %223 : vector<8x32xf32>
    %225 = arith.mulf %224, %224 : vector<8x32xf32>
    %cst_98 = arith.constant dense<0.000000e+00> : vector<32xf32>
    %226 = vector.multi_reduction <add>, %225, %cst_98 [0] : vector<8x32xf32> to vector<32xf32>
    %227 = vector.shape_cast %226 : vector<32xf32> to vector<1x32xf32>
    %cst_99 = arith.constant 8.000000e+00 : f32
    %228 = vector.broadcast %cst_99 : f32 to vector<1x32xf32>
    %229 = arith.divf %227, %228 : vector<1x32xf32>
    %230 = math.sqrt %229 : vector<1x32xf32>
    %cst_100 = arith.constant 9.99999997E-7 : f32
    %231 = vector.broadcast %cst_100 : f32 to vector<1x32xf32>
    %232 = arith.addf %230, %231 : vector<1x32xf32>
    %233 = tpu.reciprocal %232 : vector<1x32xf32> -> vector<1x32xf32>
    %234 = vector.broadcast %222 : vector<1x32xf32> to vector<8x32xf32>
    %235 = arith.subf %218, %234 : vector<8x32xf32>
    %236 = vector.broadcast %233 : vector<1x32xf32> to vector<8x32xf32>
    %237 = arith.mulf %236, %235 : vector<8x32xf32>
    %cst_101 = arith.constant 0.000000e+00 : f32
    %238 = vector.broadcast %cst_101 : f32 to vector<8x32xf32>
    %239 = arith.maximumf %237, %238 : vector<8x32xf32>
    %c0_102 = arith.constant 0 : index
    %c2_103 = arith.constant 2 : index
    %c0_104 = arith.constant 0 : index
    %c0_105 = arith.constant 0 : index
    %240 = vector.load %arg3[%c0_102, %c2_103, %c0_104, %c0_105] : memref<3x3x32x32xf32, #tpu.memory_space<vmem>>, vector<1x1x32x32xf32>
    %241 = vector.shape_cast %240 : vector<1x1x32x32xf32> to vector<32x32xf32>
    %cst_106 = arith.constant dense<0.000000e+00> : vector<8x32xf32>
    %242 = tpu.matmul %239, %241, %cst_106 {dimension_numbers = #tpu.dot_dimension_numbers<[1], [0], [0], [1], [0, 0, 1, 1], [], []>} : vector<8x32xf32>, vector<32x32xf32>, vector<8x32xf32> -> vector<8x32xf32>
    %cst_107 = arith.constant dense<0.000000e+00> : vector<32xf32>
    %243 = vector.multi_reduction <add>, %242, %cst_107 [0] : vector<8x32xf32> to vector<32xf32>
    %244 = vector.shape_cast %243 : vector<32xf32> to vector<1x32xf32>
    %cst_108 = arith.constant 8.000000e+00 : f32
    %245 = vector.broadcast %cst_108 : f32 to vector<1x32xf32>
    %246 = arith.divf %244, %245 : vector<1x32xf32>
    %247 = vector.broadcast %246 : vector<1x32xf32> to vector<8x32xf32>
    %248 = arith.subf %242, %247 : vector<8x32xf32>
    %249 = arith.mulf %248, %248 : vector<8x32xf32>
    %cst_109 = arith.constant dense<0.000000e+00> : vector<32xf32>
    %250 = vector.multi_reduction <add>, %249, %cst_109 [0] : vector<8x32xf32> to vector<32xf32>
    %251 = vector.shape_cast %250 : vector<32xf32> to vector<1x32xf32>
    %cst_110 = arith.constant 8.000000e+00 : f32
    %252 = vector.broadcast %cst_110 : f32 to vector<1x32xf32>
    %253 = arith.divf %251, %252 : vector<1x32xf32>
    %254 = math.sqrt %253 : vector<1x32xf32>
    %cst_111 = arith.constant 9.99999997E-7 : f32
    %255 = vector.broadcast %cst_111 : f32 to vector<1x32xf32>
    %256 = arith.addf %254, %255 : vector<1x32xf32>
    %257 = tpu.reciprocal %256 : vector<1x32xf32> -> vector<1x32xf32>
    %258 = vector.broadcast %246 : vector<1x32xf32> to vector<8x32xf32>
    %259 = arith.subf %242, %258 : vector<8x32xf32>
    %260 = vector.broadcast %257 : vector<1x32xf32> to vector<8x32xf32>
    %261 = arith.mulf %260, %259 : vector<8x32xf32>
    %cst_112 = arith.constant 0.000000e+00 : f32
    %262 = vector.broadcast %cst_112 : f32 to vector<8x32xf32>
    %263 = arith.maximumf %261, %262 : vector<8x32xf32>
    %c0_113 = arith.constant 0 : index
    %c2_114 = arith.constant 2 : index
    %c0_115 = arith.constant 0 : index
    %c0_116 = arith.constant 0 : index
    %264 = vector.load %arg4[%c0_113, %c2_114, %c0_115, %c0_116] : memref<3x3x32x32xf32, #tpu.memory_space<vmem>>, vector<1x1x32x32xf32>
    %265 = vector.shape_cast %264 : vector<1x1x32x32xf32> to vector<32x32xf32>
    %cst_117 = arith.constant dense<0.000000e+00> : vector<8x32xf32>
    %266 = tpu.matmul %263, %265, %cst_117 {dimension_numbers = #tpu.dot_dimension_numbers<[1], [0], [0], [1], [0, 0, 1, 1], [], []>} : vector<8x32xf32>, vector<32x32xf32>, vector<8x32xf32> -> vector<8x32xf32>
    %c0_118 = arith.constant 0 : index
    %c2_119 = arith.constant 2 : index
    %c0_120 = arith.constant 0 : index
    %c0_121 = arith.constant 0 : index
    %267 = vector.load %arg5[%c0_118, %c2_119, %c0_120, %c0_121] : memref<3x3x1x32xf32, #tpu.memory_space<vmem>>, vector<1x1x1x32xf32>
    %268 = vector.shape_cast %267 : vector<1x1x1x32xf32> to vector<1x32xf32>
    %269 = vector.broadcast %268 : vector<1x32xf32> to vector<8x32xf32>
    %270 = arith.addf %266, %269 : vector<8x32xf32>
    %271 = arith.addf %215, %270 : vector<8x32xf32>
    %c16_i32 = arith.constant 16 : i32
    %272 = vector.broadcast %c16_i32 : i32 to vector<1x32xi32>
    %273 = arith.cmpi sge, %13, %272 : vector<1x32xi32>
    %c32_i32 = arith.constant 32 : i32
    %274 = vector.broadcast %c32_i32 : i32 to vector<1x32xi32>
    %275 = arith.cmpi slt, %13, %274 : vector<1x32xi32>
    %276 = arith.andi %273, %275 : vector<1x32xi1>
    %cst_122 = arith.constant dense<0.000000e+00> : vector<32xf32>
    %277 = vector.multi_reduction <add>, %271, %cst_122 [0] : vector<8x32xf32> to vector<32xf32>
    %278 = vector.shape_cast %277 : vector<32xf32> to vector<1x32xf32>
    %cst_123 = arith.constant 8.000000e+00 : f32
    %279 = vector.broadcast %cst_123 : f32 to vector<1x32xf32>
    %280 = arith.divf %278, %279 : vector<1x32xf32>
    %281 = vector.broadcast %280 : vector<1x32xf32> to vector<8x32xf32>
    %282 = arith.subf %271, %281 : vector<8x32xf32>
    %283 = arith.mulf %282, %282 : vector<8x32xf32>
    %cst_124 = arith.constant dense<0.000000e+00> : vector<32xf32>
    %284 = vector.multi_reduction <add>, %283, %cst_124 [0] : vector<8x32xf32> to vector<32xf32>
    %285 = vector.shape_cast %284 : vector<32xf32> to vector<1x32xf32>
    %cst_125 = arith.constant 8.000000e+00 : f32
    %286 = vector.broadcast %cst_125 : f32 to vector<1x32xf32>
    %287 = arith.divf %285, %286 : vector<1x32xf32>
    %288 = math.sqrt %287 : vector<1x32xf32>
    %cst_126 = arith.constant 9.99999997E-7 : f32
    %289 = vector.broadcast %cst_126 : f32 to vector<1x32xf32>
    %290 = arith.addf %288, %289 : vector<1x32xf32>
    %291 = tpu.reciprocal %290 : vector<1x32xf32> -> vector<1x32xf32>
    %cst_127 = arith.constant 9.99999997E-7 : f32
    %292 = vector.broadcast %cst_127 : f32 to vector<1x32xf32>
    %293 = arith.addf %288, %292 : vector<1x32xf32>
    %294 = math.log %293 : vector<1x32xf32>
    %cst_128 = arith.constant 0.000000e+00 : f32
    %295 = vector.broadcast %cst_128 : f32 to vector<1x32xf32>
    %296 = arith.subf %295, %294 : vector<1x32xf32>
    %cst_129 = arith.constant 0.000000e+00 : f32
    %297 = vector.broadcast %cst_129 : f32 to vector<1x32xf32>
    %298 = arith.select %276, %296, %297 : vector<1x32xi1>, vector<1x32xf32>
    %299 = vector.shape_cast %298 : vector<1x32xf32> to vector<1x1x32xf32>
    %cst_130 = arith.constant dense<0.000000e+00> : vector<1xf32>
    %300 = vector.multi_reduction <add>, %299, %cst_130 [1, 2] : vector<1x1x32xf32> to vector<1xf32>
    %301 = vector.shape_cast %300 : vector<1xf32> to vector<1x1x1xf32>
    %302 = vector.extract %301[0, 0, 0] : f32 from vector<1x1x1xf32>
    %303 = vector.broadcast %302 : f32 to vector<8x1xf32>
    %304 = arith.addf %211, %303 : vector<8x1xf32>
    %305 = vector.broadcast %280 : vector<1x32xf32> to vector<8x32xf32>
    %306 = arith.subf %271, %305 : vector<8x32xf32>
    %307 = vector.broadcast %291 : vector<1x32xf32> to vector<8x32xf32>
    %308 = arith.mulf %307, %306 : vector<8x32xf32>
    %309 = vector.shape_cast %276 : vector<1x32xi1> to vector<1x32xi1>
    %310 = vector.broadcast %309 : vector<1x32xi1> to vector<8x32xi1>
    %311 = arith.select %310, %308, %271 : vector<8x32xi1>, vector<8x32xf32>
    %c1_131 = arith.constant 1 : index
    %c0_132 = arith.constant 0 : index
    %c0_133 = arith.constant 0 : index
    %c0_134 = arith.constant 0 : index
    %312 = vector.load %arg2[%c1_131, %c0_132, %c0_133, %c0_134] : memref<3x3x32x32xf32, #tpu.memory_space<vmem>>, vector<1x1x32x32xf32>
    %313 = vector.shape_cast %312 : vector<1x1x32x32xf32> to vector<32x32xf32>
    %cst_135 = arith.constant dense<0.000000e+00> : vector<8x32xf32>
    %314 = tpu.matmul %311, %313, %cst_135 {dimension_numbers = #tpu.dot_dimension_numbers<[1], [0], [0], [1], [0, 0, 1, 1], [], []>} : vector<8x32xf32>, vector<32x32xf32>, vector<8x32xf32> -> vector<8x32xf32>
    %cst_136 = arith.constant dense<0.000000e+00> : vector<32xf32>
    %315 = vector.multi_reduction <add>, %314, %cst_136 [0] : vector<8x32xf32> to vector<32xf32>
    %316 = vector.shape_cast %315 : vector<32xf32> to vector<1x32xf32>
    %cst_137 = arith.constant 8.000000e+00 : f32
    %317 = vector.broadcast %cst_137 : f32 to vector<1x32xf32>
    %318 = arith.divf %316, %317 : vector<1x32xf32>
    %319 = vector.broadcast %318 : vector<1x32xf32> to vector<8x32xf32>
    %320 = arith.subf %314, %319 : vector<8x32xf32>
    %321 = arith.mulf %320, %320 : vector<8x32xf32>
    %cst_138 = arith.constant dense<0.000000e+00> : vector<32xf32>
    %322 = vector.multi_reduction <add>, %321, %cst_138 [0] : vector<8x32xf32> to vector<32xf32>
    %323 = vector.shape_cast %322 : vector<32xf32> to vector<1x32xf32>
    %cst_139 = arith.constant 8.000000e+00 : f32
    %324 = vector.broadcast %cst_139 : f32 to vector<1x32xf32>
    %325 = arith.divf %323, %324 : vector<1x32xf32>
    %326 = math.sqrt %325 : vector<1x32xf32>
    %cst_140 = arith.constant 9.99999997E-7 : f32
    %327 = vector.broadcast %cst_140 : f32 to vector<1x32xf32>
    %328 = arith.addf %326, %327 : vector<1x32xf32>
    %329 = tpu.reciprocal %328 : vector<1x32xf32> -> vector<1x32xf32>
    %330 = vector.broadcast %318 : vector<1x32xf32> to vector<8x32xf32>
    %331 = arith.subf %314, %330 : vector<8x32xf32>
    %332 = vector.broadcast %329 : vector<1x32xf32> to vector<8x32xf32>
    %333 = arith.mulf %332, %331 : vector<8x32xf32>
    %cst_141 = arith.constant 0.000000e+00 : f32
    %334 = vector.broadcast %cst_141 : f32 to vector<8x32xf32>
    %335 = arith.maximumf %333, %334 : vector<8x32xf32>
    %c1_142 = arith.constant 1 : index
    %c0_143 = arith.constant 0 : index
    %c0_144 = arith.constant 0 : index
    %c0_145 = arith.constant 0 : index
    %336 = vector.load %arg3[%c1_142, %c0_143, %c0_144, %c0_145] : memref<3x3x32x32xf32, #tpu.memory_space<vmem>>, vector<1x1x32x32xf32>
    %337 = vector.shape_cast %336 : vector<1x1x32x32xf32> to vector<32x32xf32>
    %cst_146 = arith.constant dense<0.000000e+00> : vector<8x32xf32>
    %338 = tpu.matmul %335, %337, %cst_146 {dimension_numbers = #tpu.dot_dimension_numbers<[1], [0], [0], [1], [0, 0, 1, 1], [], []>} : vector<8x32xf32>, vector<32x32xf32>, vector<8x32xf32> -> vector<8x32xf32>
    %cst_147 = arith.constant dense<0.000000e+00> : vector<32xf32>
    %339 = vector.multi_reduction <add>, %338, %cst_147 [0] : vector<8x32xf32> to vector<32xf32>
    %340 = vector.shape_cast %339 : vector<32xf32> to vector<1x32xf32>
    %cst_148 = arith.constant 8.000000e+00 : f32
    %341 = vector.broadcast %cst_148 : f32 to vector<1x32xf32>
    %342 = arith.divf %340, %341 : vector<1x32xf32>
    %343 = vector.broadcast %342 : vector<1x32xf32> to vector<8x32xf32>
    %344 = arith.subf %338, %343 : vector<8x32xf32>
    %345 = arith.mulf %344, %344 : vector<8x32xf32>
    %cst_149 = arith.constant dense<0.000000e+00> : vector<32xf32>
    %346 = vector.multi_reduction <add>, %345, %cst_149 [0] : vector<8x32xf32> to vector<32xf32>
    %347 = vector.shape_cast %346 : vector<32xf32> to vector<1x32xf32>
    %cst_150 = arith.constant 8.000000e+00 : f32
    %348 = vector.broadcast %cst_150 : f32 to vector<1x32xf32>
    %349 = arith.divf %347, %348 : vector<1x32xf32>
    %350 = math.sqrt %349 : vector<1x32xf32>
    %cst_151 = arith.constant 9.99999997E-7 : f32
    %351 = vector.broadcast %cst_151 : f32 to vector<1x32xf32>
    %352 = arith.addf %350, %351 : vector<1x32xf32>
    %353 = tpu.reciprocal %352 : vector<1x32xf32> -> vector<1x32xf32>
    %354 = vector.broadcast %342 : vector<1x32xf32> to vector<8x32xf32>
    %355 = arith.subf %338, %354 : vector<8x32xf32>
    %356 = vector.broadcast %353 : vector<1x32xf32> to vector<8x32xf32>
    %357 = arith.mulf %356, %355 : vector<8x32xf32>
    %cst_152 = arith.constant 0.000000e+00 : f32
    %358 = vector.broadcast %cst_152 : f32 to vector<8x32xf32>
    %359 = arith.maximumf %357, %358 : vector<8x32xf32>
    %c1_153 = arith.constant 1 : index
    %c0_154 = arith.constant 0 : index
    %c0_155 = arith.constant 0 : index
    %c0_156 = arith.constant 0 : index
    %360 = vector.load %arg4[%c1_153, %c0_154, %c0_155, %c0_156] : memref<3x3x32x32xf32, #tpu.memory_space<vmem>>, vector<1x1x32x32xf32>
    %361 = vector.shape_cast %360 : vector<1x1x32x32xf32> to vector<32x32xf32>
    %cst_157 = arith.constant dense<0.000000e+00> : vector<8x32xf32>
    %362 = tpu.matmul %359, %361, %cst_157 {dimension_numbers = #tpu.dot_dimension_numbers<[1], [0], [0], [1], [0, 0, 1, 1], [], []>} : vector<8x32xf32>, vector<32x32xf32>, vector<8x32xf32> -> vector<8x32xf32>
    %c1_158 = arith.constant 1 : index
    %c0_159 = arith.constant 0 : index
    %c0_160 = arith.constant 0 : index
    %c0_161 = arith.constant 0 : index
    %363 = vector.load %arg5[%c1_158, %c0_159, %c0_160, %c0_161] : memref<3x3x1x32xf32, #tpu.memory_space<vmem>>, vector<1x1x1x32xf32>
    %364 = vector.shape_cast %363 : vector<1x1x1x32xf32> to vector<1x32xf32>
    %365 = vector.broadcast %364 : vector<1x32xf32> to vector<8x32xf32>
    %366 = arith.addf %362, %365 : vector<8x32xf32>
    %367 = arith.addf %311, %366 : vector<8x32xf32>
    %cst_162 = arith.constant dense<0.000000e+00> : vector<32xf32>
    %368 = vector.multi_reduction <add>, %367, %cst_162 [0] : vector<8x32xf32> to vector<32xf32>
    %369 = vector.shape_cast %368 : vector<32xf32> to vector<1x32xf32>
    %cst_163 = arith.constant 8.000000e+00 : f32
    %370 = vector.broadcast %cst_163 : f32 to vector<1x32xf32>
    %371 = arith.divf %369, %370 : vector<1x32xf32>
    %372 = vector.broadcast %371 : vector<1x32xf32> to vector<8x32xf32>
    %373 = arith.subf %367, %372 : vector<8x32xf32>
    %374 = arith.mulf %373, %373 : vector<8x32xf32>
    %cst_164 = arith.constant dense<0.000000e+00> : vector<32xf32>
    %375 = vector.multi_reduction <add>, %374, %cst_164 [0] : vector<8x32xf32> to vector<32xf32>
    %376 = vector.shape_cast %375 : vector<32xf32> to vector<1x32xf32>
    %cst_165 = arith.constant 8.000000e+00 : f32
    %377 = vector.broadcast %cst_165 : f32 to vector<1x32xf32>
    %378 = arith.divf %376, %377 : vector<1x32xf32>
    %379 = math.sqrt %378 : vector<1x32xf32>
    %cst_166 = arith.constant 9.99999997E-7 : f32
    %380 = vector.broadcast %cst_166 : f32 to vector<1x32xf32>
    %381 = arith.addf %379, %380 : vector<1x32xf32>
    %382 = tpu.reciprocal %381 : vector<1x32xf32> -> vector<1x32xf32>
    %cst_167 = arith.constant 9.99999997E-7 : f32
    %383 = vector.broadcast %cst_167 : f32 to vector<1x32xf32>
    %384 = arith.addf %379, %383 : vector<1x32xf32>
    %385 = math.log %384 : vector<1x32xf32>
    %cst_168 = arith.constant 0.000000e+00 : f32
    %386 = vector.broadcast %cst_168 : f32 to vector<1x32xf32>
    %387 = arith.subf %386, %385 : vector<1x32xf32>
    %cst_169 = arith.constant 0.000000e+00 : f32
    %388 = vector.broadcast %cst_169 : f32 to vector<1x32xf32>
    %389 = arith.select %276, %387, %388 : vector<1x32xi1>, vector<1x32xf32>
    %390 = vector.shape_cast %389 : vector<1x32xf32> to vector<1x1x32xf32>
    %cst_170 = arith.constant dense<0.000000e+00> : vector<1xf32>
    %391 = vector.multi_reduction <add>, %390, %cst_170 [1, 2] : vector<1x1x32xf32> to vector<1xf32>
    %392 = vector.shape_cast %391 : vector<1xf32> to vector<1x1x1xf32>
    %393 = vector.extract %392[0, 0, 0] : f32 from vector<1x1x1xf32>
    %394 = vector.broadcast %393 : f32 to vector<8x1xf32>
    %395 = arith.addf %304, %394 : vector<8x1xf32>
    %396 = vector.broadcast %371 : vector<1x32xf32> to vector<8x32xf32>
    %397 = arith.subf %367, %396 : vector<8x32xf32>
    %398 = vector.broadcast %382 : vector<1x32xf32> to vector<8x32xf32>
    %399 = arith.mulf %398, %397 : vector<8x32xf32>
    %400 = vector.shape_cast %276 : vector<1x32xi1> to vector<1x32xi1>
    %401 = vector.broadcast %400 : vector<1x32xi1> to vector<8x32xi1>
    %402 = arith.select %401, %399, %367 : vector<8x32xi1>, vector<8x32xf32>
    %c1_171 = arith.constant 1 : index
    %c1_172 = arith.constant 1 : index
    %c0_173 = arith.constant 0 : index
    %c0_174 = arith.constant 0 : index
    %403 = vector.load %arg2[%c1_171, %c1_172, %c0_173, %c0_174] : memref<3x3x32x32xf32, #tpu.memory_space<vmem>>, vector<1x1x32x32xf32>
    %404 = vector.shape_cast %403 : vector<1x1x32x32xf32> to vector<32x32xf32>
    %cst_175 = arith.constant dense<0.000000e+00> : vector<8x32xf32>
    %405 = tpu.matmul %402, %404, %cst_175 {dimension_numbers = #tpu.dot_dimension_numbers<[1], [0], [0], [1], [0, 0, 1, 1], [], []>} : vector<8x32xf32>, vector<32x32xf32>, vector<8x32xf32> -> vector<8x32xf32>
    %cst_176 = arith.constant dense<0.000000e+00> : vector<32xf32>
    %406 = vector.multi_reduction <add>, %405, %cst_176 [0] : vector<8x32xf32> to vector<32xf32>
    %407 = vector.shape_cast %406 : vector<32xf32> to vector<1x32xf32>
    %cst_177 = arith.constant 8.000000e+00 : f32
    %408 = vector.broadcast %cst_177 : f32 to vector<1x32xf32>
    %409 = arith.divf %407, %408 : vector<1x32xf32>
    %410 = vector.broadcast %409 : vector<1x32xf32> to vector<8x32xf32>
    %411 = arith.subf %405, %410 : vector<8x32xf32>
    %412 = arith.mulf %411, %411 : vector<8x32xf32>
    %cst_178 = arith.constant dense<0.000000e+00> : vector<32xf32>
    %413 = vector.multi_reduction <add>, %412, %cst_178 [0] : vector<8x32xf32> to vector<32xf32>
    %414 = vector.shape_cast %413 : vector<32xf32> to vector<1x32xf32>
    %cst_179 = arith.constant 8.000000e+00 : f32
    %415 = vector.broadcast %cst_179 : f32 to vector<1x32xf32>
    %416 = arith.divf %414, %415 : vector<1x32xf32>
    %417 = math.sqrt %416 : vector<1x32xf32>
    %cst_180 = arith.constant 9.99999997E-7 : f32
    %418 = vector.broadcast %cst_180 : f32 to vector<1x32xf32>
    %419 = arith.addf %417, %418 : vector<1x32xf32>
    %420 = tpu.reciprocal %419 : vector<1x32xf32> -> vector<1x32xf32>
    %421 = vector.broadcast %409 : vector<1x32xf32> to vector<8x32xf32>
    %422 = arith.subf %405, %421 : vector<8x32xf32>
    %423 = vector.broadcast %420 : vector<1x32xf32> to vector<8x32xf32>
    %424 = arith.mulf %423, %422 : vector<8x32xf32>
    %cst_181 = arith.constant 0.000000e+00 : f32
    %425 = vector.broadcast %cst_181 : f32 to vector<8x32xf32>
    %426 = arith.maximumf %424, %425 : vector<8x32xf32>
    %c1_182 = arith.constant 1 : index
    %c1_183 = arith.constant 1 : index
    %c0_184 = arith.constant 0 : index
    %c0_185 = arith.constant 0 : index
    %427 = vector.load %arg3[%c1_182, %c1_183, %c0_184, %c0_185] : memref<3x3x32x32xf32, #tpu.memory_space<vmem>>, vector<1x1x32x32xf32>
    %428 = vector.shape_cast %427 : vector<1x1x32x32xf32> to vector<32x32xf32>
    %cst_186 = arith.constant dense<0.000000e+00> : vector<8x32xf32>
    %429 = tpu.matmul %426, %428, %cst_186 {dimension_numbers = #tpu.dot_dimension_numbers<[1], [0], [0], [1], [0, 0, 1, 1], [], []>} : vector<8x32xf32>, vector<32x32xf32>, vector<8x32xf32> -> vector<8x32xf32>
    %cst_187 = arith.constant dense<0.000000e+00> : vector<32xf32>
    %430 = vector.multi_reduction <add>, %429, %cst_187 [0] : vector<8x32xf32> to vector<32xf32>
    %431 = vector.shape_cast %430 : vector<32xf32> to vector<1x32xf32>
    %cst_188 = arith.constant 8.000000e+00 : f32
    %432 = vector.broadcast %cst_188 : f32 to vector<1x32xf32>
    %433 = arith.divf %431, %432 : vector<1x32xf32>
    %434 = vector.broadcast %433 : vector<1x32xf32> to vector<8x32xf32>
    %435 = arith.subf %429, %434 : vector<8x32xf32>
    %436 = arith.mulf %435, %435 : vector<8x32xf32>
    %cst_189 = arith.constant dense<0.000000e+00> : vector<32xf32>
    %437 = vector.multi_reduction <add>, %436, %cst_189 [0] : vector<8x32xf32> to vector<32xf32>
    %438 = vector.shape_cast %437 : vector<32xf32> to vector<1x32xf32>
    %cst_190 = arith.constant 8.000000e+00 : f32
    %439 = vector.broadcast %cst_190 : f32 to vector<1x32xf32>
    %440 = arith.divf %438, %439 : vector<1x32xf32>
    %441 = math.sqrt %440 : vector<1x32xf32>
    %cst_191 = arith.constant 9.99999997E-7 : f32
    %442 = vector.broadcast %cst_191 : f32 to vector<1x32xf32>
    %443 = arith.addf %441, %442 : vector<1x32xf32>
    %444 = tpu.reciprocal %443 : vector<1x32xf32> -> vector<1x32xf32>
    %445 = vector.broadcast %433 : vector<1x32xf32> to vector<8x32xf32>
    %446 = arith.subf %429, %445 : vector<8x32xf32>
    %447 = vector.broadcast %444 : vector<1x32xf32> to vector<8x32xf32>
    %448 = arith.mulf %447, %446 : vector<8x32xf32>
    %cst_192 = arith.constant 0.000000e+00 : f32
    %449 = vector.broadcast %cst_192 : f32 to vector<8x32xf32>
    %450 = arith.maximumf %448, %449 : vector<8x32xf32>
    %c1_193 = arith.constant 1 : index
    %c1_194 = arith.constant 1 : index
    %c0_195 = arith.constant 0 : index
    %c0_196 = arith.constant 0 : index
    %451 = vector.load %arg4[%c1_193, %c1_194, %c0_195, %c0_196] : memref<3x3x32x32xf32, #tpu.memory_space<vmem>>, vector<1x1x32x32xf32>
    %452 = vector.shape_cast %451 : vector<1x1x32x32xf32> to vector<32x32xf32>
    %cst_197 = arith.constant dense<0.000000e+00> : vector<8x32xf32>
    %453 = tpu.matmul %450, %452, %cst_197 {dimension_numbers = #tpu.dot_dimension_numbers<[1], [0], [0], [1], [0, 0, 1, 1], [], []>} : vector<8x32xf32>, vector<32x32xf32>, vector<8x32xf32> -> vector<8x32xf32>
    %c1_198 = arith.constant 1 : index
    %c1_199 = arith.constant 1 : index
    %c0_200 = arith.constant 0 : index
    %c0_201 = arith.constant 0 : index
    %454 = vector.load %arg5[%c1_198, %c1_199, %c0_200, %c0_201] : memref<3x3x1x32xf32, #tpu.memory_space<vmem>>, vector<1x1x1x32xf32>
    %455 = vector.shape_cast %454 : vector<1x1x1x32xf32> to vector<1x32xf32>
    %456 = vector.broadcast %455 : vector<1x32xf32> to vector<8x32xf32>
    %457 = arith.addf %453, %456 : vector<8x32xf32>
    %458 = arith.addf %402, %457 : vector<8x32xf32>
    %cst_202 = arith.constant dense<0.000000e+00> : vector<32xf32>
    %459 = vector.multi_reduction <add>, %458, %cst_202 [0] : vector<8x32xf32> to vector<32xf32>
    %460 = vector.shape_cast %459 : vector<32xf32> to vector<1x32xf32>
    %cst_203 = arith.constant 8.000000e+00 : f32
    %461 = vector.broadcast %cst_203 : f32 to vector<1x32xf32>
    %462 = arith.divf %460, %461 : vector<1x32xf32>
    %463 = vector.broadcast %462 : vector<1x32xf32> to vector<8x32xf32>
    %464 = arith.subf %458, %463 : vector<8x32xf32>
    %465 = arith.mulf %464, %464 : vector<8x32xf32>
    %cst_204 = arith.constant dense<0.000000e+00> : vector<32xf32>
    %466 = vector.multi_reduction <add>, %465, %cst_204 [0] : vector<8x32xf32> to vector<32xf32>
    %467 = vector.shape_cast %466 : vector<32xf32> to vector<1x32xf32>
    %cst_205 = arith.constant 8.000000e+00 : f32
    %468 = vector.broadcast %cst_205 : f32 to vector<1x32xf32>
    %469 = arith.divf %467, %468 : vector<1x32xf32>
    %470 = math.sqrt %469 : vector<1x32xf32>
    %cst_206 = arith.constant 9.99999997E-7 : f32
    %471 = vector.broadcast %cst_206 : f32 to vector<1x32xf32>
    %472 = arith.addf %470, %471 : vector<1x32xf32>
    %473 = tpu.reciprocal %472 : vector<1x32xf32> -> vector<1x32xf32>
    %cst_207 = arith.constant 9.99999997E-7 : f32
    %474 = vector.broadcast %cst_207 : f32 to vector<1x32xf32>
    %475 = arith.addf %470, %474 : vector<1x32xf32>
    %476 = math.log %475 : vector<1x32xf32>
    %cst_208 = arith.constant 0.000000e+00 : f32
    %477 = vector.broadcast %cst_208 : f32 to vector<1x32xf32>
    %478 = arith.subf %477, %476 : vector<1x32xf32>
    %cst_209 = arith.constant 0.000000e+00 : f32
    %479 = vector.broadcast %cst_209 : f32 to vector<1x32xf32>
    %480 = arith.select %276, %478, %479 : vector<1x32xi1>, vector<1x32xf32>
    %481 = vector.shape_cast %480 : vector<1x32xf32> to vector<1x1x32xf32>
    %cst_210 = arith.constant dense<0.000000e+00> : vector<1xf32>
    %482 = vector.multi_reduction <add>, %481, %cst_210 [1, 2] : vector<1x1x32xf32> to vector<1xf32>
    %483 = vector.shape_cast %482 : vector<1xf32> to vector<1x1x1xf32>
    %484 = vector.extract %483[0, 0, 0] : f32 from vector<1x1x1xf32>
    %485 = vector.broadcast %484 : f32 to vector<8x1xf32>
    %486 = arith.addf %395, %485 : vector<8x1xf32>
    %487 = vector.broadcast %462 : vector<1x32xf32> to vector<8x32xf32>
    %488 = arith.subf %458, %487 : vector<8x32xf32>
    %489 = vector.broadcast %473 : vector<1x32xf32> to vector<8x32xf32>
    %490 = arith.mulf %489, %488 : vector<8x32xf32>
    %491 = vector.shape_cast %276 : vector<1x32xi1> to vector<1x32xi1>
    %492 = vector.broadcast %491 : vector<1x32xi1> to vector<8x32xi1>
    %493 = arith.select %492, %490, %458 : vector<8x32xi1>, vector<8x32xf32>
    %c1_211 = arith.constant 1 : index
    %c2_212 = arith.constant 2 : index
    %c0_213 = arith.constant 0 : index
    %c0_214 = arith.constant 0 : index
    %494 = vector.load %arg2[%c1_211, %c2_212, %c0_213, %c0_214] : memref<3x3x32x32xf32, #tpu.memory_space<vmem>>, vector<1x1x32x32xf32>
    %495 = vector.shape_cast %494 : vector<1x1x32x32xf32> to vector<32x32xf32>
    %cst_215 = arith.constant dense<0.000000e+00> : vector<8x32xf32>
    %496 = tpu.matmul %493, %495, %cst_215 {dimension_numbers = #tpu.dot_dimension_numbers<[1], [0], [0], [1], [0, 0, 1, 1], [], []>} : vector<8x32xf32>, vector<32x32xf32>, vector<8x32xf32> -> vector<8x32xf32>
    %cst_216 = arith.constant dense<0.000000e+00> : vector<32xf32>
    %497 = vector.multi_reduction <add>, %496, %cst_216 [0] : vector<8x32xf32> to vector<32xf32>
    %498 = vector.shape_cast %497 : vector<32xf32> to vector<1x32xf32>
    %cst_217 = arith.constant 8.000000e+00 : f32
    %499 = vector.broadcast %cst_217 : f32 to vector<1x32xf32>
    %500 = arith.divf %498, %499 : vector<1x32xf32>
    %501 = vector.broadcast %500 : vector<1x32xf32> to vector<8x32xf32>
    %502 = arith.subf %496, %501 : vector<8x32xf32>
    %503 = arith.mulf %502, %502 : vector<8x32xf32>
    %cst_218 = arith.constant dense<0.000000e+00> : vector<32xf32>
    %504 = vector.multi_reduction <add>, %503, %cst_218 [0] : vector<8x32xf32> to vector<32xf32>
    %505 = vector.shape_cast %504 : vector<32xf32> to vector<1x32xf32>
    %cst_219 = arith.constant 8.000000e+00 : f32
    %506 = vector.broadcast %cst_219 : f32 to vector<1x32xf32>
    %507 = arith.divf %505, %506 : vector<1x32xf32>
    %508 = math.sqrt %507 : vector<1x32xf32>
    %cst_220 = arith.constant 9.99999997E-7 : f32
    %509 = vector.broadcast %cst_220 : f32 to vector<1x32xf32>
    %510 = arith.addf %508, %509 : vector<1x32xf32>
    %511 = tpu.reciprocal %510 : vector<1x32xf32> -> vector<1x32xf32>
    %512 = vector.broadcast %500 : vector<1x32xf32> to vector<8x32xf32>
    %513 = arith.subf %496, %512 : vector<8x32xf32>
    %514 = vector.broadcast %511 : vector<1x32xf32> to vector<8x32xf32>
    %515 = arith.mulf %514, %513 : vector<8x32xf32>
    %cst_221 = arith.constant 0.000000e+00 : f32
    %516 = vector.broadcast %cst_221 : f32 to vector<8x32xf32>
    %517 = arith.maximumf %515, %516 : vector<8x32xf32>
    %c1_222 = arith.constant 1 : index
    %c2_223 = arith.constant 2 : index
    %c0_224 = arith.constant 0 : index
    %c0_225 = arith.constant 0 : index
    %518 = vector.load %arg3[%c1_222, %c2_223, %c0_224, %c0_225] : memref<3x3x32x32xf32, #tpu.memory_space<vmem>>, vector<1x1x32x32xf32>
    %519 = vector.shape_cast %518 : vector<1x1x32x32xf32> to vector<32x32xf32>
    %cst_226 = arith.constant dense<0.000000e+00> : vector<8x32xf32>
    %520 = tpu.matmul %517, %519, %cst_226 {dimension_numbers = #tpu.dot_dimension_numbers<[1], [0], [0], [1], [0, 0, 1, 1], [], []>} : vector<8x32xf32>, vector<32x32xf32>, vector<8x32xf32> -> vector<8x32xf32>
    %cst_227 = arith.constant dense<0.000000e+00> : vector<32xf32>
    %521 = vector.multi_reduction <add>, %520, %cst_227 [0] : vector<8x32xf32> to vector<32xf32>
    %522 = vector.shape_cast %521 : vector<32xf32> to vector<1x32xf32>
    %cst_228 = arith.constant 8.000000e+00 : f32
    %523 = vector.broadcast %cst_228 : f32 to vector<1x32xf32>
    %524 = arith.divf %522, %523 : vector<1x32xf32>
    %525 = vector.broadcast %524 : vector<1x32xf32> to vector<8x32xf32>
    %526 = arith.subf %520, %525 : vector<8x32xf32>
    %527 = arith.mulf %526, %526 : vector<8x32xf32>
    %cst_229 = arith.constant dense<0.000000e+00> : vector<32xf32>
    %528 = vector.multi_reduction <add>, %527, %cst_229 [0] : vector<8x32xf32> to vector<32xf32>
    %529 = vector.shape_cast %528 : vector<32xf32> to vector<1x32xf32>
    %cst_230 = arith.constant 8.000000e+00 : f32
    %530 = vector.broadcast %cst_230 : f32 to vector<1x32xf32>
    %531 = arith.divf %529, %530 : vector<1x32xf32>
    %532 = math.sqrt %531 : vector<1x32xf32>
    %cst_231 = arith.constant 9.99999997E-7 : f32
    %533 = vector.broadcast %cst_231 : f32 to vector<1x32xf32>
    %534 = arith.addf %532, %533 : vector<1x32xf32>
    %535 = tpu.reciprocal %534 : vector<1x32xf32> -> vector<1x32xf32>
    %536 = vector.broadcast %524 : vector<1x32xf32> to vector<8x32xf32>
    %537 = arith.subf %520, %536 : vector<8x32xf32>
    %538 = vector.broadcast %535 : vector<1x32xf32> to vector<8x32xf32>
    %539 = arith.mulf %538, %537 : vector<8x32xf32>
    %cst_232 = arith.constant 0.000000e+00 : f32
    %540 = vector.broadcast %cst_232 : f32 to vector<8x32xf32>
    %541 = arith.maximumf %539, %540 : vector<8x32xf32>
    %c1_233 = arith.constant 1 : index
    %c2_234 = arith.constant 2 : index
    %c0_235 = arith.constant 0 : index
    %c0_236 = arith.constant 0 : index
    %542 = vector.load %arg4[%c1_233, %c2_234, %c0_235, %c0_236] : memref<3x3x32x32xf32, #tpu.memory_space<vmem>>, vector<1x1x32x32xf32>
    %543 = vector.shape_cast %542 : vector<1x1x32x32xf32> to vector<32x32xf32>
    %cst_237 = arith.constant dense<0.000000e+00> : vector<8x32xf32>
    %544 = tpu.matmul %541, %543, %cst_237 {dimension_numbers = #tpu.dot_dimension_numbers<[1], [0], [0], [1], [0, 0, 1, 1], [], []>} : vector<8x32xf32>, vector<32x32xf32>, vector<8x32xf32> -> vector<8x32xf32>
    %c1_238 = arith.constant 1 : index
    %c2_239 = arith.constant 2 : index
    %c0_240 = arith.constant 0 : index
    %c0_241 = arith.constant 0 : index
    %545 = vector.load %arg5[%c1_238, %c2_239, %c0_240, %c0_241] : memref<3x3x1x32xf32, #tpu.memory_space<vmem>>, vector<1x1x1x32xf32>
    %546 = vector.shape_cast %545 : vector<1x1x1x32xf32> to vector<1x32xf32>
    %547 = vector.broadcast %546 : vector<1x32xf32> to vector<8x32xf32>
    %548 = arith.addf %544, %547 : vector<8x32xf32>
    %549 = arith.addf %493, %548 : vector<8x32xf32>
    %c16_i32_242 = arith.constant 16 : i32
    %550 = vector.broadcast %c16_i32_242 : i32 to vector<1x32xi32>
    %551 = arith.cmpi sge, %13, %550 : vector<1x32xi32>
    %c24_i32 = arith.constant 24 : i32
    %552 = vector.broadcast %c24_i32 : i32 to vector<1x32xi32>
    %553 = arith.cmpi slt, %13, %552 : vector<1x32xi32>
    %554 = arith.andi %551, %553 : vector<1x32xi1>
    %cst_243 = arith.constant dense<0.000000e+00> : vector<32xf32>
    %555 = vector.multi_reduction <add>, %549, %cst_243 [0] : vector<8x32xf32> to vector<32xf32>
    %556 = vector.shape_cast %555 : vector<32xf32> to vector<1x32xf32>
    %cst_244 = arith.constant 8.000000e+00 : f32
    %557 = vector.broadcast %cst_244 : f32 to vector<1x32xf32>
    %558 = arith.divf %556, %557 : vector<1x32xf32>
    %559 = vector.broadcast %558 : vector<1x32xf32> to vector<8x32xf32>
    %560 = arith.subf %549, %559 : vector<8x32xf32>
    %561 = arith.mulf %560, %560 : vector<8x32xf32>
    %cst_245 = arith.constant dense<0.000000e+00> : vector<32xf32>
    %562 = vector.multi_reduction <add>, %561, %cst_245 [0] : vector<8x32xf32> to vector<32xf32>
    %563 = vector.shape_cast %562 : vector<32xf32> to vector<1x32xf32>
    %cst_246 = arith.constant 8.000000e+00 : f32
    %564 = vector.broadcast %cst_246 : f32 to vector<1x32xf32>
    %565 = arith.divf %563, %564 : vector<1x32xf32>
    %566 = math.sqrt %565 : vector<1x32xf32>
    %cst_247 = arith.constant 9.99999997E-7 : f32
    %567 = vector.broadcast %cst_247 : f32 to vector<1x32xf32>
    %568 = arith.addf %566, %567 : vector<1x32xf32>
    %569 = tpu.reciprocal %568 : vector<1x32xf32> -> vector<1x32xf32>
    %cst_248 = arith.constant 9.99999997E-7 : f32
    %570 = vector.broadcast %cst_248 : f32 to vector<1x32xf32>
    %571 = arith.addf %566, %570 : vector<1x32xf32>
    %572 = math.log %571 : vector<1x32xf32>
    %cst_249 = arith.constant 0.000000e+00 : f32
    %573 = vector.broadcast %cst_249 : f32 to vector<1x32xf32>
    %574 = arith.subf %573, %572 : vector<1x32xf32>
    %cst_250 = arith.constant 0.000000e+00 : f32
    %575 = vector.broadcast %cst_250 : f32 to vector<1x32xf32>
    %576 = arith.select %554, %574, %575 : vector<1x32xi1>, vector<1x32xf32>
    %577 = vector.shape_cast %576 : vector<1x32xf32> to vector<1x1x32xf32>
    %cst_251 = arith.constant dense<0.000000e+00> : vector<1xf32>
    %578 = vector.multi_reduction <add>, %577, %cst_251 [1, 2] : vector<1x1x32xf32> to vector<1xf32>
    %579 = vector.shape_cast %578 : vector<1xf32> to vector<1x1x1xf32>
    %580 = vector.extract %579[0, 0, 0] : f32 from vector<1x1x1xf32>
    %581 = vector.broadcast %580 : f32 to vector<8x1xf32>
    %582 = arith.addf %486, %581 : vector<8x1xf32>
    %583 = vector.broadcast %558 : vector<1x32xf32> to vector<8x32xf32>
    %584 = arith.subf %549, %583 : vector<8x32xf32>
    %585 = vector.broadcast %569 : vector<1x32xf32> to vector<8x32xf32>
    %586 = arith.mulf %585, %584 : vector<8x32xf32>
    %587 = vector.shape_cast %554 : vector<1x32xi1> to vector<1x32xi1>
    %588 = vector.broadcast %587 : vector<1x32xi1> to vector<8x32xi1>
    %589 = arith.select %588, %586, %549 : vector<8x32xi1>, vector<8x32xf32>
    %c2_252 = arith.constant 2 : index
    %c0_253 = arith.constant 0 : index
    %c0_254 = arith.constant 0 : index
    %c0_255 = arith.constant 0 : index
    %590 = vector.load %arg2[%c2_252, %c0_253, %c0_254, %c0_255] : memref<3x3x32x32xf32, #tpu.memory_space<vmem>>, vector<1x1x32x32xf32>
    %591 = vector.shape_cast %590 : vector<1x1x32x32xf32> to vector<32x32xf32>
    %cst_256 = arith.constant dense<0.000000e+00> : vector<8x32xf32>
    %592 = tpu.matmul %589, %591, %cst_256 {dimension_numbers = #tpu.dot_dimension_numbers<[1], [0], [0], [1], [0, 0, 1, 1], [], []>} : vector<8x32xf32>, vector<32x32xf32>, vector<8x32xf32> -> vector<8x32xf32>
    %cst_257 = arith.constant dense<0.000000e+00> : vector<32xf32>
    %593 = vector.multi_reduction <add>, %592, %cst_257 [0] : vector<8x32xf32> to vector<32xf32>
    %594 = vector.shape_cast %593 : vector<32xf32> to vector<1x32xf32>
    %cst_258 = arith.constant 8.000000e+00 : f32
    %595 = vector.broadcast %cst_258 : f32 to vector<1x32xf32>
    %596 = arith.divf %594, %595 : vector<1x32xf32>
    %597 = vector.broadcast %596 : vector<1x32xf32> to vector<8x32xf32>
    %598 = arith.subf %592, %597 : vector<8x32xf32>
    %599 = arith.mulf %598, %598 : vector<8x32xf32>
    %cst_259 = arith.constant dense<0.000000e+00> : vector<32xf32>
    %600 = vector.multi_reduction <add>, %599, %cst_259 [0] : vector<8x32xf32> to vector<32xf32>
    %601 = vector.shape_cast %600 : vector<32xf32> to vector<1x32xf32>
    %cst_260 = arith.constant 8.000000e+00 : f32
    %602 = vector.broadcast %cst_260 : f32 to vector<1x32xf32>
    %603 = arith.divf %601, %602 : vector<1x32xf32>
    %604 = math.sqrt %603 : vector<1x32xf32>
    %cst_261 = arith.constant 9.99999997E-7 : f32
    %605 = vector.broadcast %cst_261 : f32 to vector<1x32xf32>
    %606 = arith.addf %604, %605 : vector<1x32xf32>
    %607 = tpu.reciprocal %606 : vector<1x32xf32> -> vector<1x32xf32>
    %608 = vector.broadcast %596 : vector<1x32xf32> to vector<8x32xf32>
    %609 = arith.subf %592, %608 : vector<8x32xf32>
    %610 = vector.broadcast %607 : vector<1x32xf32> to vector<8x32xf32>
    %611 = arith.mulf %610, %609 : vector<8x32xf32>
    %cst_262 = arith.constant 0.000000e+00 : f32
    %612 = vector.broadcast %cst_262 : f32 to vector<8x32xf32>
    %613 = arith.maximumf %611, %612 : vector<8x32xf32>
    %c2_263 = arith.constant 2 : index
    %c0_264 = arith.constant 0 : index
    %c0_265 = arith.constant 0 : index
    %c0_266 = arith.constant 0 : index
    %614 = vector.load %arg3[%c2_263, %c0_264, %c0_265, %c0_266] : memref<3x3x32x32xf32, #tpu.memory_space<vmem>>, vector<1x1x32x32xf32>
    %615 = vector.shape_cast %614 : vector<1x1x32x32xf32> to vector<32x32xf32>
    %cst_267 = arith.constant dense<0.000000e+00> : vector<8x32xf32>
    %616 = tpu.matmul %613, %615, %cst_267 {dimension_numbers = #tpu.dot_dimension_numbers<[1], [0], [0], [1], [0, 0, 1, 1], [], []>} : vector<8x32xf32>, vector<32x32xf32>, vector<8x32xf32> -> vector<8x32xf32>
    %cst_268 = arith.constant dense<0.000000e+00> : vector<32xf32>
    %617 = vector.multi_reduction <add>, %616, %cst_268 [0] : vector<8x32xf32> to vector<32xf32>
    %618 = vector.shape_cast %617 : vector<32xf32> to vector<1x32xf32>
    %cst_269 = arith.constant 8.000000e+00 : f32
    %619 = vector.broadcast %cst_269 : f32 to vector<1x32xf32>
    %620 = arith.divf %618, %619 : vector<1x32xf32>
    %621 = vector.broadcast %620 : vector<1x32xf32> to vector<8x32xf32>
    %622 = arith.subf %616, %621 : vector<8x32xf32>
    %623 = arith.mulf %622, %622 : vector<8x32xf32>
    %cst_270 = arith.constant dense<0.000000e+00> : vector<32xf32>
    %624 = vector.multi_reduction <add>, %623, %cst_270 [0] : vector<8x32xf32> to vector<32xf32>
    %625 = vector.shape_cast %624 : vector<32xf32> to vector<1x32xf32>
    %cst_271 = arith.constant 8.000000e+00 : f32
    %626 = vector.broadcast %cst_271 : f32 to vector<1x32xf32>
    %627 = arith.divf %625, %626 : vector<1x32xf32>
    %628 = math.sqrt %627 : vector<1x32xf32>
    %cst_272 = arith.constant 9.99999997E-7 : f32
    %629 = vector.broadcast %cst_272 : f32 to vector<1x32xf32>
    %630 = arith.addf %628, %629 : vector<1x32xf32>
    %631 = tpu.reciprocal %630 : vector<1x32xf32> -> vector<1x32xf32>
    %632 = vector.broadcast %620 : vector<1x32xf32> to vector<8x32xf32>
    %633 = arith.subf %616, %632 : vector<8x32xf32>
    %634 = vector.broadcast %631 : vector<1x32xf32> to vector<8x32xf32>
    %635 = arith.mulf %634, %633 : vector<8x32xf32>
    %cst_273 = arith.constant 0.000000e+00 : f32
    %636 = vector.broadcast %cst_273 : f32 to vector<8x32xf32>
    %637 = arith.maximumf %635, %636 : vector<8x32xf32>
    %c2_274 = arith.constant 2 : index
    %c0_275 = arith.constant 0 : index
    %c0_276 = arith.constant 0 : index
    %c0_277 = arith.constant 0 : index
    %638 = vector.load %arg4[%c2_274, %c0_275, %c0_276, %c0_277] : memref<3x3x32x32xf32, #tpu.memory_space<vmem>>, vector<1x1x32x32xf32>
    %639 = vector.shape_cast %638 : vector<1x1x32x32xf32> to vector<32x32xf32>
    %cst_278 = arith.constant dense<0.000000e+00> : vector<8x32xf32>
    %640 = tpu.matmul %637, %639, %cst_278 {dimension_numbers = #tpu.dot_dimension_numbers<[1], [0], [0], [1], [0, 0, 1, 1], [], []>} : vector<8x32xf32>, vector<32x32xf32>, vector<8x32xf32> -> vector<8x32xf32>
    %c2_279 = arith.constant 2 : index
    %c0_280 = arith.constant 0 : index
    %c0_281 = arith.constant 0 : index
    %c0_282 = arith.constant 0 : index
    %641 = vector.load %arg5[%c2_279, %c0_280, %c0_281, %c0_282] : memref<3x3x1x32xf32, #tpu.memory_space<vmem>>, vector<1x1x1x32xf32>
    %642 = vector.shape_cast %641 : vector<1x1x1x32xf32> to vector<1x32xf32>
    %643 = vector.broadcast %642 : vector<1x32xf32> to vector<8x32xf32>
    %644 = arith.addf %640, %643 : vector<8x32xf32>
    %645 = arith.addf %589, %644 : vector<8x32xf32>
    %cst_283 = arith.constant dense<0.000000e+00> : vector<32xf32>
    %646 = vector.multi_reduction <add>, %645, %cst_283 [0] : vector<8x32xf32> to vector<32xf32>
    %647 = vector.shape_cast %646 : vector<32xf32> to vector<1x32xf32>
    %cst_284 = arith.constant 8.000000e+00 : f32
    %648 = vector.broadcast %cst_284 : f32 to vector<1x32xf32>
    %649 = arith.divf %647, %648 : vector<1x32xf32>
    %650 = vector.broadcast %649 : vector<1x32xf32> to vector<8x32xf32>
    %651 = arith.subf %645, %650 : vector<8x32xf32>
    %652 = arith.mulf %651, %651 : vector<8x32xf32>
    %cst_285 = arith.constant dense<0.000000e+00> : vector<32xf32>
    %653 = vector.multi_reduction <add>, %652, %cst_285 [0] : vector<8x32xf32> to vector<32xf32>
    %654 = vector.shape_cast %653 : vector<32xf32> to vector<1x32xf32>
    %cst_286 = arith.constant 8.000000e+00 : f32
    %655 = vector.broadcast %cst_286 : f32 to vector<1x32xf32>
    %656 = arith.divf %654, %655 : vector<1x32xf32>
    %657 = math.sqrt %656 : vector<1x32xf32>
    %cst_287 = arith.constant 9.99999997E-7 : f32
    %658 = vector.broadcast %cst_287 : f32 to vector<1x32xf32>
    %659 = arith.addf %657, %658 : vector<1x32xf32>
    %660 = tpu.reciprocal %659 : vector<1x32xf32> -> vector<1x32xf32>
    %cst_288 = arith.constant 9.99999997E-7 : f32
    %661 = vector.broadcast %cst_288 : f32 to vector<1x32xf32>
    %662 = arith.addf %657, %661 : vector<1x32xf32>
    %663 = math.log %662 : vector<1x32xf32>
    %cst_289 = arith.constant 0.000000e+00 : f32
    %664 = vector.broadcast %cst_289 : f32 to vector<1x32xf32>
    %665 = arith.subf %664, %663 : vector<1x32xf32>
    %cst_290 = arith.constant 0.000000e+00 : f32
    %666 = vector.broadcast %cst_290 : f32 to vector<1x32xf32>
    %667 = arith.select %554, %665, %666 : vector<1x32xi1>, vector<1x32xf32>
    %668 = vector.shape_cast %667 : vector<1x32xf32> to vector<1x1x32xf32>
    %cst_291 = arith.constant dense<0.000000e+00> : vector<1xf32>
    %669 = vector.multi_reduction <add>, %668, %cst_291 [1, 2] : vector<1x1x32xf32> to vector<1xf32>
    %670 = vector.shape_cast %669 : vector<1xf32> to vector<1x1x1xf32>
    %671 = vector.extract %670[0, 0, 0] : f32 from vector<1x1x1xf32>
    %672 = vector.broadcast %671 : f32 to vector<8x1xf32>
    %673 = arith.addf %582, %672 : vector<8x1xf32>
    %674 = vector.broadcast %649 : vector<1x32xf32> to vector<8x32xf32>
    %675 = arith.subf %645, %674 : vector<8x32xf32>
    %676 = vector.broadcast %660 : vector<1x32xf32> to vector<8x32xf32>
    %677 = arith.mulf %676, %675 : vector<8x32xf32>
    %678 = vector.shape_cast %554 : vector<1x32xi1> to vector<1x32xi1>
    %679 = vector.broadcast %678 : vector<1x32xi1> to vector<8x32xi1>
    %680 = arith.select %679, %677, %645 : vector<8x32xi1>, vector<8x32xf32>
    %c2_292 = arith.constant 2 : index
    %c1_293 = arith.constant 1 : index
    %c0_294 = arith.constant 0 : index
    %c0_295 = arith.constant 0 : index
    %681 = vector.load %arg2[%c2_292, %c1_293, %c0_294, %c0_295] : memref<3x3x32x32xf32, #tpu.memory_space<vmem>>, vector<1x1x32x32xf32>
    %682 = vector.shape_cast %681 : vector<1x1x32x32xf32> to vector<32x32xf32>
    %cst_296 = arith.constant dense<0.000000e+00> : vector<8x32xf32>
    %683 = tpu.matmul %680, %682, %cst_296 {dimension_numbers = #tpu.dot_dimension_numbers<[1], [0], [0], [1], [0, 0, 1, 1], [], []>} : vector<8x32xf32>, vector<32x32xf32>, vector<8x32xf32> -> vector<8x32xf32>
    %cst_297 = arith.constant dense<0.000000e+00> : vector<32xf32>
    %684 = vector.multi_reduction <add>, %683, %cst_297 [0] : vector<8x32xf32> to vector<32xf32>
    %685 = vector.shape_cast %684 : vector<32xf32> to vector<1x32xf32>
    %cst_298 = arith.constant 8.000000e+00 : f32
    %686 = vector.broadcast %cst_298 : f32 to vector<1x32xf32>
    %687 = arith.divf %685, %686 : vector<1x32xf32>
    %688 = vector.broadcast %687 : vector<1x32xf32> to vector<8x32xf32>
    %689 = arith.subf %683, %688 : vector<8x32xf32>
    %690 = arith.mulf %689, %689 : vector<8x32xf32>
    %cst_299 = arith.constant dense<0.000000e+00> : vector<32xf32>
    %691 = vector.multi_reduction <add>, %690, %cst_299 [0] : vector<8x32xf32> to vector<32xf32>
    %692 = vector.shape_cast %691 : vector<32xf32> to vector<1x32xf32>
    %cst_300 = arith.constant 8.000000e+00 : f32
    %693 = vector.broadcast %cst_300 : f32 to vector<1x32xf32>
    %694 = arith.divf %692, %693 : vector<1x32xf32>
    %695 = math.sqrt %694 : vector<1x32xf32>
    %cst_301 = arith.constant 9.99999997E-7 : f32
    %696 = vector.broadcast %cst_301 : f32 to vector<1x32xf32>
    %697 = arith.addf %695, %696 : vector<1x32xf32>
    %698 = tpu.reciprocal %697 : vector<1x32xf32> -> vector<1x32xf32>
    %699 = vector.broadcast %687 : vector<1x32xf32> to vector<8x32xf32>
    %700 = arith.subf %683, %699 : vector<8x32xf32>
    %701 = vector.broadcast %698 : vector<1x32xf32> to vector<8x32xf32>
    %702 = arith.mulf %701, %700 : vector<8x32xf32>
    %cst_302 = arith.constant 0.000000e+00 : f32
    %703 = vector.broadcast %cst_302 : f32 to vector<8x32xf32>
    %704 = arith.maximumf %702, %703 : vector<8x32xf32>
    %c2_303 = arith.constant 2 : index
    %c1_304 = arith.constant 1 : index
    %c0_305 = arith.constant 0 : index
    %c0_306 = arith.constant 0 : index
    %705 = vector.load %arg3[%c2_303, %c1_304, %c0_305, %c0_306] : memref<3x3x32x32xf32, #tpu.memory_space<vmem>>, vector<1x1x32x32xf32>
    %706 = vector.shape_cast %705 : vector<1x1x32x32xf32> to vector<32x32xf32>
    %cst_307 = arith.constant dense<0.000000e+00> : vector<8x32xf32>
    %707 = tpu.matmul %704, %706, %cst_307 {dimension_numbers = #tpu.dot_dimension_numbers<[1], [0], [0], [1], [0, 0, 1, 1], [], []>} : vector<8x32xf32>, vector<32x32xf32>, vector<8x32xf32> -> vector<8x32xf32>
    %cst_308 = arith.constant dense<0.000000e+00> : vector<32xf32>
    %708 = vector.multi_reduction <add>, %707, %cst_308 [0] : vector<8x32xf32> to vector<32xf32>
    %709 = vector.shape_cast %708 : vector<32xf32> to vector<1x32xf32>
    %cst_309 = arith.constant 8.000000e+00 : f32
    %710 = vector.broadcast %cst_309 : f32 to vector<1x32xf32>
    %711 = arith.divf %709, %710 : vector<1x32xf32>
    %712 = vector.broadcast %711 : vector<1x32xf32> to vector<8x32xf32>
    %713 = arith.subf %707, %712 : vector<8x32xf32>
    %714 = arith.mulf %713, %713 : vector<8x32xf32>
    %cst_310 = arith.constant dense<0.000000e+00> : vector<32xf32>
    %715 = vector.multi_reduction <add>, %714, %cst_310 [0] : vector<8x32xf32> to vector<32xf32>
    %716 = vector.shape_cast %715 : vector<32xf32> to vector<1x32xf32>
    %cst_311 = arith.constant 8.000000e+00 : f32
    %717 = vector.broadcast %cst_311 : f32 to vector<1x32xf32>
    %718 = arith.divf %716, %717 : vector<1x32xf32>
    %719 = math.sqrt %718 : vector<1x32xf32>
    %cst_312 = arith.constant 9.99999997E-7 : f32
    %720 = vector.broadcast %cst_312 : f32 to vector<1x32xf32>
    %721 = arith.addf %719, %720 : vector<1x32xf32>
    %722 = tpu.reciprocal %721 : vector<1x32xf32> -> vector<1x32xf32>
    %723 = vector.broadcast %711 : vector<1x32xf32> to vector<8x32xf32>
    %724 = arith.subf %707, %723 : vector<8x32xf32>
    %725 = vector.broadcast %722 : vector<1x32xf32> to vector<8x32xf32>
    %726 = arith.mulf %725, %724 : vector<8x32xf32>
    %cst_313 = arith.constant 0.000000e+00 : f32
    %727 = vector.broadcast %cst_313 : f32 to vector<8x32xf32>
    %728 = arith.maximumf %726, %727 : vector<8x32xf32>
    %c2_314 = arith.constant 2 : index
    %c1_315 = arith.constant 1 : index
    %c0_316 = arith.constant 0 : index
    %c0_317 = arith.constant 0 : index
    %729 = vector.load %arg4[%c2_314, %c1_315, %c0_316, %c0_317] : memref<3x3x32x32xf32, #tpu.memory_space<vmem>>, vector<1x1x32x32xf32>
    %730 = vector.shape_cast %729 : vector<1x1x32x32xf32> to vector<32x32xf32>
    %cst_318 = arith.constant dense<0.000000e+00> : vector<8x32xf32>
    %731 = tpu.matmul %728, %730, %cst_318 {dimension_numbers = #tpu.dot_dimension_numbers<[1], [0], [0], [1], [0, 0, 1, 1], [], []>} : vector<8x32xf32>, vector<32x32xf32>, vector<8x32xf32> -> vector<8x32xf32>
    %c2_319 = arith.constant 2 : index
    %c1_320 = arith.constant 1 : index
    %c0_321 = arith.constant 0 : index
    %c0_322 = arith.constant 0 : index
    %732 = vector.load %arg5[%c2_319, %c1_320, %c0_321, %c0_322] : memref<3x3x1x32xf32, #tpu.memory_space<vmem>>, vector<1x1x1x32xf32>
    %733 = vector.shape_cast %732 : vector<1x1x1x32xf32> to vector<1x32xf32>
    %734 = vector.broadcast %733 : vector<1x32xf32> to vector<8x32xf32>
    %735 = arith.addf %731, %734 : vector<8x32xf32>
    %736 = arith.addf %680, %735 : vector<8x32xf32>
    %cst_323 = arith.constant dense<0.000000e+00> : vector<32xf32>
    %737 = vector.multi_reduction <add>, %736, %cst_323 [0] : vector<8x32xf32> to vector<32xf32>
    %738 = vector.shape_cast %737 : vector<32xf32> to vector<1x32xf32>
    %cst_324 = arith.constant 8.000000e+00 : f32
    %739 = vector.broadcast %cst_324 : f32 to vector<1x32xf32>
    %740 = arith.divf %738, %739 : vector<1x32xf32>
    %741 = vector.broadcast %740 : vector<1x32xf32> to vector<8x32xf32>
    %742 = arith.subf %736, %741 : vector<8x32xf32>
    %743 = arith.mulf %742, %742 : vector<8x32xf32>
    %cst_325 = arith.constant dense<0.000000e+00> : vector<32xf32>
    %744 = vector.multi_reduction <add>, %743, %cst_325 [0] : vector<8x32xf32> to vector<32xf32>
    %745 = vector.shape_cast %744 : vector<32xf32> to vector<1x32xf32>
    %cst_326 = arith.constant 8.000000e+00 : f32
    %746 = vector.broadcast %cst_326 : f32 to vector<1x32xf32>
    %747 = arith.divf %745, %746 : vector<1x32xf32>
    %748 = math.sqrt %747 : vector<1x32xf32>
    %cst_327 = arith.constant 9.99999997E-7 : f32
    %749 = vector.broadcast %cst_327 : f32 to vector<1x32xf32>
    %750 = arith.addf %748, %749 : vector<1x32xf32>
    %751 = tpu.reciprocal %750 : vector<1x32xf32> -> vector<1x32xf32>
    %cst_328 = arith.constant 9.99999997E-7 : f32
    %752 = vector.broadcast %cst_328 : f32 to vector<1x32xf32>
    %753 = arith.addf %748, %752 : vector<1x32xf32>
    %754 = math.log %753 : vector<1x32xf32>
    %cst_329 = arith.constant 0.000000e+00 : f32
    %755 = vector.broadcast %cst_329 : f32 to vector<1x32xf32>
    %756 = arith.subf %755, %754 : vector<1x32xf32>
    %cst_330 = arith.constant 0.000000e+00 : f32
    %757 = vector.broadcast %cst_330 : f32 to vector<1x32xf32>
    %758 = arith.select %554, %756, %757 : vector<1x32xi1>, vector<1x32xf32>
    %759 = vector.shape_cast %758 : vector<1x32xf32> to vector<1x1x32xf32>
    %cst_331 = arith.constant dense<0.000000e+00> : vector<1xf32>
    %760 = vector.multi_reduction <add>, %759, %cst_331 [1, 2] : vector<1x1x32xf32> to vector<1xf32>
    %761 = vector.shape_cast %760 : vector<1xf32> to vector<1x1x1xf32>
    %762 = vector.extract %761[0, 0, 0] : f32 from vector<1x1x1xf32>
    %763 = vector.broadcast %762 : f32 to vector<8x1xf32>
    %764 = arith.addf %673, %763 : vector<8x1xf32>
    %765 = vector.broadcast %740 : vector<1x32xf32> to vector<8x32xf32>
    %766 = arith.subf %736, %765 : vector<8x32xf32>
    %767 = vector.broadcast %751 : vector<1x32xf32> to vector<8x32xf32>
    %768 = arith.mulf %767, %766 : vector<8x32xf32>
    %769 = vector.shape_cast %554 : vector<1x32xi1> to vector<1x32xi1>
    %770 = vector.broadcast %769 : vector<1x32xi1> to vector<8x32xi1>
    %771 = arith.select %770, %768, %736 : vector<8x32xi1>, vector<8x32xf32>
    %c2_332 = arith.constant 2 : index
    %c2_333 = arith.constant 2 : index
    %c0_334 = arith.constant 0 : index
    %c0_335 = arith.constant 0 : index
    %772 = vector.load %arg2[%c2_332, %c2_333, %c0_334, %c0_335] : memref<3x3x32x32xf32, #tpu.memory_space<vmem>>, vector<1x1x32x32xf32>
    %773 = vector.shape_cast %772 : vector<1x1x32x32xf32> to vector<32x32xf32>
    %cst_336 = arith.constant dense<0.000000e+00> : vector<8x32xf32>
    %774 = tpu.matmul %771, %773, %cst_336 {dimension_numbers = #tpu.dot_dimension_numbers<[1], [0], [0], [1], [0, 0, 1, 1], [], []>} : vector<8x32xf32>, vector<32x32xf32>, vector<8x32xf32> -> vector<8x32xf32>
    %cst_337 = arith.constant dense<0.000000e+00> : vector<32xf32>
    %775 = vector.multi_reduction <add>, %774, %cst_337 [0] : vector<8x32xf32> to vector<32xf32>
    %776 = vector.shape_cast %775 : vector<32xf32> to vector<1x32xf32>
    %cst_338 = arith.constant 8.000000e+00 : f32
    %777 = vector.broadcast %cst_338 : f32 to vector<1x32xf32>
    %778 = arith.divf %776, %777 : vector<1x32xf32>
    %779 = vector.broadcast %778 : vector<1x32xf32> to vector<8x32xf32>
    %780 = arith.subf %774, %779 : vector<8x32xf32>
    %781 = arith.mulf %780, %780 : vector<8x32xf32>
    %cst_339 = arith.constant dense<0.000000e+00> : vector<32xf32>
    %782 = vector.multi_reduction <add>, %781, %cst_339 [0] : vector<8x32xf32> to vector<32xf32>
    %783 = vector.shape_cast %782 : vector<32xf32> to vector<1x32xf32>
    %cst_340 = arith.constant 8.000000e+00 : f32
    %784 = vector.broadcast %cst_340 : f32 to vector<1x32xf32>
    %785 = arith.divf %783, %784 : vector<1x32xf32>
    %786 = math.sqrt %785 : vector<1x32xf32>
    %cst_341 = arith.constant 9.99999997E-7 : f32
    %787 = vector.broadcast %cst_341 : f32 to vector<1x32xf32>
    %788 = arith.addf %786, %787 : vector<1x32xf32>
    %789 = tpu.reciprocal %788 : vector<1x32xf32> -> vector<1x32xf32>
    %790 = vector.broadcast %778 : vector<1x32xf32> to vector<8x32xf32>
    %791 = arith.subf %774, %790 : vector<8x32xf32>
    %792 = vector.broadcast %789 : vector<1x32xf32> to vector<8x32xf32>
    %793 = arith.mulf %792, %791 : vector<8x32xf32>
    %cst_342 = arith.constant 0.000000e+00 : f32
    %794 = vector.broadcast %cst_342 : f32 to vector<8x32xf32>
    %795 = arith.maximumf %793, %794 : vector<8x32xf32>
    %c2_343 = arith.constant 2 : index
    %c2_344 = arith.constant 2 : index
    %c0_345 = arith.constant 0 : index
    %c0_346 = arith.constant 0 : index
    %796 = vector.load %arg3[%c2_343, %c2_344, %c0_345, %c0_346] : memref<3x3x32x32xf32, #tpu.memory_space<vmem>>, vector<1x1x32x32xf32>
    %797 = vector.shape_cast %796 : vector<1x1x32x32xf32> to vector<32x32xf32>
    %cst_347 = arith.constant dense<0.000000e+00> : vector<8x32xf32>
    %798 = tpu.matmul %795, %797, %cst_347 {dimension_numbers = #tpu.dot_dimension_numbers<[1], [0], [0], [1], [0, 0, 1, 1], [], []>} : vector<8x32xf32>, vector<32x32xf32>, vector<8x32xf32> -> vector<8x32xf32>
    %cst_348 = arith.constant dense<0.000000e+00> : vector<32xf32>
    %799 = vector.multi_reduction <add>, %798, %cst_348 [0] : vector<8x32xf32> to vector<32xf32>
    %800 = vector.shape_cast %799 : vector<32xf32> to vector<1x32xf32>
    %cst_349 = arith.constant 8.000000e+00 : f32
    %801 = vector.broadcast %cst_349 : f32 to vector<1x32xf32>
    %802 = arith.divf %800, %801 : vector<1x32xf32>
    %803 = vector.broadcast %802 : vector<1x32xf32> to vector<8x32xf32>
    %804 = arith.subf %798, %803 : vector<8x32xf32>
    %805 = arith.mulf %804, %804 : vector<8x32xf32>
    %cst_350 = arith.constant dense<0.000000e+00> : vector<32xf32>
    %806 = vector.multi_reduction <add>, %805, %cst_350 [0] : vector<8x32xf32> to vector<32xf32>
    %807 = vector.shape_cast %806 : vector<32xf32> to vector<1x32xf32>
    %cst_351 = arith.constant 8.000000e+00 : f32
    %808 = vector.broadcast %cst_351 : f32 to vector<1x32xf32>
    %809 = arith.divf %807, %808 : vector<1x32xf32>
    %810 = math.sqrt %809 : vector<1x32xf32>
    %cst_352 = arith.constant 9.99999997E-7 : f32
    %811 = vector.broadcast %cst_352 : f32 to vector<1x32xf32>
    %812 = arith.addf %810, %811 : vector<1x32xf32>
    %813 = tpu.reciprocal %812 : vector<1x32xf32> -> vector<1x32xf32>
    %814 = vector.broadcast %802 : vector<1x32xf32> to vector<8x32xf32>
    %815 = arith.subf %798, %814 : vector<8x32xf32>
    %816 = vector.broadcast %813 : vector<1x32xf32> to vector<8x32xf32>
    %817 = arith.mulf %816, %815 : vector<8x32xf32>
    %cst_353 = arith.constant 0.000000e+00 : f32
    %818 = vector.broadcast %cst_353 : f32 to vector<8x32xf32>
    %819 = arith.maximumf %817, %818 : vector<8x32xf32>
    %c2_354 = arith.constant 2 : index
    %c2_355 = arith.constant 2 : index
    %c0_356 = arith.constant 0 : index
    %c0_357 = arith.constant 0 : index
    %820 = vector.load %arg4[%c2_354, %c2_355, %c0_356, %c0_357] : memref<3x3x32x32xf32, #tpu.memory_space<vmem>>, vector<1x1x32x32xf32>
    %821 = vector.shape_cast %820 : vector<1x1x32x32xf32> to vector<32x32xf32>
    %cst_358 = arith.constant dense<0.000000e+00> : vector<8x32xf32>
    %822 = tpu.matmul %819, %821, %cst_358 {dimension_numbers = #tpu.dot_dimension_numbers<[1], [0], [0], [1], [0, 0, 1, 1], [], []>} : vector<8x32xf32>, vector<32x32xf32>, vector<8x32xf32> -> vector<8x32xf32>
    %c2_359 = arith.constant 2 : index
    %c2_360 = arith.constant 2 : index
    %c0_361 = arith.constant 0 : index
    %c0_362 = arith.constant 0 : index
    %823 = vector.load %arg5[%c2_359, %c2_360, %c0_361, %c0_362] : memref<3x3x1x32xf32, #tpu.memory_space<vmem>>, vector<1x1x1x32xf32>
    %824 = vector.shape_cast %823 : vector<1x1x1x32xf32> to vector<1x32xf32>
    %825 = vector.broadcast %824 : vector<1x32xf32> to vector<8x32xf32>
    %826 = arith.addf %822, %825 : vector<8x32xf32>
    %827 = arith.addf %771, %826 : vector<8x32xf32>
    %cst_363 = arith.constant -5.000000e-01 : f32
    %828 = vector.broadcast %cst_363 : f32 to vector<8x32xf32>
    %829 = arith.mulf %828, %827 : vector<8x32xf32>
    %830 = arith.mulf %829, %827 : vector<8x32xf32>
    %cst_364 = arith.constant 0.918938517 : f32
    %831 = vector.broadcast %cst_364 : f32 to vector<8x32xf32>
    %832 = arith.subf %830, %831 : vector<8x32xf32>
    %cst_365 = arith.constant dense<0.000000e+00> : vector<8xf32>
    %833 = vector.multi_reduction <add>, %832, %cst_365 [1] : vector<8x32xf32> to vector<8xf32>
    %834 = vector.shape_cast %833 : vector<8xf32> to vector<8x1xf32>
    %835 = arith.addf %764, %834 : vector<8x1xf32>
    %cst_366 = arith.constant 0.000000e+00 : f32
    %836 = vector.broadcast %cst_366 : f32 to vector<8x1xf32>
    %837 = arith.subf %836, %835 : vector<8x1xf32>
    %838 = vector.shape_cast %837 : vector<8x1xf32> to vector<1x8x1xf32>
    %cst_367 = arith.constant dense<0.000000e+00> : vector<1xf32>
    %839 = vector.multi_reduction <add>, %838, %cst_367 [1, 2] : vector<1x8x1xf32> to vector<1xf32>
    %840 = vector.shape_cast %839 : vector<1xf32> to vector<1x1x1xf32>
    %841 = vector.extract %840[0, 0, 0] : f32 from vector<1x1x1xf32>
    %cst_368 = arith.constant 8.000000e+00 : f32
    %842 = arith.divf %841, %cst_368 : f32
    %cst_369 = arith.constant 0.0450842194 : f32
    %843 = arith.mulf %842, %cst_369 : f32
    %c0_370 = arith.constant 0 : index
    %c0_371 = arith.constant 0 : index
    %844 = vector.load %arg6[%c0_370, %c0_371] : memref<32x32xf32, #tpu.memory_space<vmem>>, vector<32x32xf32>
    %cst_372 = arith.constant dense<0.000000e+00> : vector<8x32xf32>
    %845 = tpu.matmul %827, %844, %cst_372 {dimension_numbers = #tpu.dot_dimension_numbers<[1], [0], [0], [1], [0, 0, 1, 1], [], []>} : vector<8x32xf32>, vector<32x32xf32>, vector<8x32xf32> -> vector<8x32xf32>
    %c0_373 = arith.constant 0 : index
    %c0_374 = arith.constant 0 : index
    %846 = vector.load %arg7[%c0_373, %c0_374] : memref<8x32xf32, #tpu.memory_space<vmem>>, vector<8x32xf32>
    tpu.vector_store %arg7[%c0_373, %c0_374], %845 {strides = array<i32>} : memref<8x32xf32, #tpu.memory_space<vmem>>, vector<8x32xf32>,
    %c0_375 = arith.constant 0 : index
    %c0_376 = arith.constant 0 : index
    %847 = memref.load %arg8[%c0_375, %c0_376] : memref<1x1xf32, #tpu.memory_space<smem>>
    memref.store %843, %arg8[%c0_375, %c0_376] : memref<1x1xf32, #tpu.memory_space<smem>>
    return
  }
}

</mosaic_0001>

<llo_original>
// kernel: tpu_custom_call.1
$region0: #{tpu_custom_call.1}
  #allocation0 [shape = 'u32[]', space=smem, size = 0x4, offset = 0x4, fixed_abs, tag = 'smem constant byte address 0x4 - core index']
  #allocation1 [shape = 'u32[144,128]{1,0:T(1,128)}', space=vmem, size = 0x12000, scoped, tag = 'internal scratch']
  %s0 = inlined_call_operand.hbm [shape: f32[8,8,32], index: 0, kind: input, shape index: {}]
  %s1 = inlined_call_operand.hbm [shape: f32[8,8], index: 1, kind: input, shape index: {}]
  %s2 = inlined_call_operand.hbm [shape: f32[3,3,32,32], index: 2, kind: input, shape index: {}]
  %s3 = inlined_call_operand.hbm [shape: f32[3,3,32,32], index: 3, kind: input, shape index: {}]
  %s4 = inlined_call_operand.hbm [shape: f32[3,3,32,32], index: 4, kind: input, shape index: {}]
  %s5 = inlined_call_operand.vmem [shape: f32[3,3,1,32], index: 5, kind: input, shape index: {}]
  %s6 = inlined_call_operand.hbm [shape: f32[32,32], index: 6, kind: input, shape index: {}]
  %s7 = inlined_call_operand.hbm [shape: f32[8,32], index: 7, kind: output, shape index: {0}]
  %s8 = inlined_call_operand.hbm [shape: f32[1,1], index: 8, kind: output, shape index: {1}]
  %9 = xla_tuple %s7, %s8
  %s10 = sld [smem:[#allocation0]]
  $region70: #{tpu_custom_call.1} parent=0
    _
  %s12 = ssub.s32 1, %s10
  %s13 = scalar_select 0, %s12, %s10
  $region1: #{tpu_custom_call.1} parent=0
    #allocation2 [shape = 'u8[32768]{0}', space=vmem, size = 0x8000, scoped, tag = 'input window, operand 0, single buffered']
    #allocation3 [shape = 's32[1]{0}', space=sflag, size = 0x4, scoped, tag = 'scoped memory for tpu_custom_call.1']
    #allocation4 [shape = 's32[1]{0}', space=sflag, size = 0x4, scoped, tag = 'scoped memory for tpu_custom_call.1']
    #allocation5 [shape = 's32[1]{0}', space=sflag, size = 0x4, scoped, tag = 'scoped memory for tpu_custom_call.1']
    #allocation6 [shape = 'u8[4096]{0}', space=vmem, size = 0x1000, scoped, tag = 'input window, operand 1, single buffered']
    #allocation7 [shape = 's32[1]{0}', space=sflag, size = 0x4, scoped, tag = 'scoped memory for tpu_custom_call.1']
    #allocation8 [shape = 'u8[147456]{0}', space=vmem, size = 0x24000, scoped, tag = 'input window, operand 2, single buffered']
    #allocation9 [shape = 'u8[147456]{0}', space=vmem, size = 0x24000, scoped, tag = 'input window, operand 3, single buffered']
    #allocation10 [shape = 's32[1]{0}', space=sflag, size = 0x4, scoped, tag = 'scoped memory for tpu_custom_call.1']
    #allocation11 [shape = 'u8[147456]{0}', space=vmem, size = 0x24000, scoped, tag = 'input window, operand 4, single buffered']
    #allocation12 [shape = 'u8[16384]{0}', space=vmem, size = 0x4000, scoped, tag = 'input window, operand 6, single buffered']
    #allocation13 [shape = 's32[1]{0}', space=sflag, size = 0x4, scoped, tag = 'scoped memory for tpu_custom_call.1']
    #allocation14 [shape = 'u8[4096]{0}', space=vmem, size = 0x1000, scoped, tag = 'output window, operand 0, single buffered']
    #allocation15 [shape = 'u8[512]{0}', space=smem, size = 0x200, scoped, tag = 'output window, operand 1, single buffered']
    %14 = vsyncpa [#allocation3], 0
    %15 = vsyncpa [#allocation7], 0
    %16 = vsyncpa [#allocation10], 0
    %17 = vsyncpa [#allocation13], 0
    %18 = vsyncpa [#allocation4], 0
    %19 = vsyncpa [#allocation5], 0
    // Predicated region
    $region2: #{tpu_custom_call.1} parent=1 // pred_check
      _
    $region3: #{tpu_custom_call.1} parent=1 // pred_check_branch
      %21 = sbr.rel (0) target = $region5
    $region4: #{tpu_custom_call.1} parent=1 // pred_region
      %s23 = ssub.s32 1024, 1024
      %24 = vsyncadd [#allocation3], %s23
      %s25 = sshll.u32 [#allocation2], 4
      %s26 = int_to_ptr.vmem [resolvable:$true] %s25
      %31 = dma.hbm_to_vmem [thread:$0]  %s0, 1024, %s26, [#allocation3], 128, 128, 8
    $region5: #{tpu_custom_call.1} parent=1 // pred_fallthru
      _
    // Predicated region
    $region6: #{tpu_custom_call.1} parent=1 // pred_check
      _
    $region7: #{tpu_custom_call.1} parent=1 // pred_check_branch
      %33 = sbr.rel (0) target = $region9
    $region8: #{tpu_custom_call.1} parent=1 // pred_region
      %s35 = ssub.s32 128, 128
      %36 = vsyncadd [#allocation7], %s35
      %s38 = sshll.u32 [#allocation6], 4
      %s39 = int_to_ptr.vmem [resolvable:$true] %s38
      %41 = dma.hbm_to_vmem [thread:$0]  %s1, 128, %s39, [#allocation7]
    $region9: #{tpu_custom_call.1} parent=1 // pred_fallthru
      _
    // Predicated region
    $region10: #{tpu_custom_call.1} parent=1 // pred_check
      _
    $region11: #{tpu_custom_call.1} parent=1 // pred_check_branch
      %43 = sbr.rel (0) target = $region13
    $region12: #{tpu_custom_call.1} parent=1 // pred_region
      %s45 = ssub.s32 4608, 4608
      %46 = vsyncadd [#allocation7], %s45
      %s47 = sshll.u32 [#allocation8], 4
      %s48 = int_to_ptr.vmem [resolvable:$true] %s47
      %53 = dma.hbm_to_vmem [thread:$0]  %s2, 4608, %s48, [#allocation7], 128, 128, 8
    $region13: #{tpu_custom_call.1} parent=1 // pred_fallthru
      _
    // Predicated region
    $region14: #{tpu_custom_call.1} parent=1 // pred_check
      _
    $region15: #{tpu_custom_call.1} parent=1 // pred_check_branch
      %55 = sbr.rel (0) target = $region17
    $region16: #{tpu_custom_call.1} parent=1 // pred_region
      %s57 = ssub.s32 4608, 4608
      %58 = vsyncadd [#allocation10], %s57
      %s59 = sshll.u32 [#allocation9], 4
      %s60 = int_to_ptr.vmem [resolvable:$true] %s59
      %65 = dma.hbm_to_vmem [thread:$0]  %s3, 4608, %s60, [#allocation10], 128, 128, 8
    $region17: #{tpu_custom_call.1} parent=1 // pred_fallthru
      _
    // Predicated region
    $region18: #{tpu_custom_call.1} parent=1 // pred_check
      _
    $region19: #{tpu_custom_call.1} parent=1 // pred_check_branch
      %67 = sbr.rel (0) target = $region21
    $region20: #{tpu_custom_call.1} parent=1 // pred_region
      %s69 = ssub.s32 4608, 4608
      %70 = vsyncadd [#allocation10], %s69
      %s71 = sshll.u32 [#allocation11], 4
      %s72 = int_to_ptr.vmem [resolvable:$true] %s71
      %77 = dma.hbm_to_vmem [thread:$0]  %s4, 4608, %s72, [#allocation10], 128, 128, 8
    $region21: #{tpu_custom_call.1} parent=1 // pred_fallthru
      _
    // Predicated region
    $region22: #{tpu_custom_call.1} parent=1 // pred_check
      _
    $region23: #{tpu_custom_call.1} parent=1 // pred_check_branch
      %79 = sbr.rel (0) target = $region25
    $region24: #{tpu_custom_call.1} parent=1 // pred_region
      _
    $region25: #{tpu_custom_call.1} parent=1 // pred_fallthru
      _
    // Predicated region
    $region26: #{tpu_custom_call.1} parent=1 // pred_check
      _
    $region27: #{tpu_custom_call.1} parent=1 // pred_check_branch
      %81 = sbr.rel (0) target = $region29
    $region28: #{tpu_custom_call.1} parent=1 // pred_region
      %s83 = ssub.s32 512, 512
      %84 = vsyncadd [#allocation13], %s83
      %s85 = sshll.u32 [#allocation12], 4
      %s86 = int_to_ptr.vmem [resolvable:$true] %s85
      %91 = dma.hbm_to_vmem [thread:$0]  %s6, 512, %s86, [#allocation13], 128, 128, 8
    $region29: #{tpu_custom_call.1} parent=1 // pred_fallthru
      _
    // Predicated region
    $region30: #{tpu_custom_call.1} parent=1 // pred_check
      _
    $region31: #{tpu_custom_call.1} parent=1 // pred_check_branch
      %93 = sbr.rel (0) target = $region33
    $region32: #{tpu_custom_call.1} parent=1 // pred_region
      %94 = dma.done [#allocation3], 1024
    $region33: #{tpu_custom_call.1} parent=1 // pred_fallthru
      _
    // Predicated region
    $region34: #{tpu_custom_call.1} parent=1 // pred_check
      _
    $region35: #{tpu_custom_call.1} parent=1 // pred_check_branch
      %96 = sbr.rel (0) target = $region37
    $region36: #{tpu_custom_call.1} parent=1 // pred_region
      %97 = dma.done [#allocation7], 128
    $region37: #{tpu_custom_call.1} parent=1 // pred_fallthru
      _
    // Predicated region
    $region38: #{tpu_custom_call.1} parent=1 // pred_check
      _
    $region39: #{tpu_custom_call.1} parent=1 // pred_check_branch
      %99 = sbr.rel (0) target = $region41
    $region40: #{tpu_custom_call.1} parent=1 // pred_region
      %100 = dma.done [#allocation7], 4608
    $region41: #{tpu_custom_call.1} parent=1 // pred_fallthru
      _
    // Predicated region
    $region42: #{tpu_custom_call.1} parent=1 // pred_check
      _
    $region43: #{tpu_custom_call.1} parent=1 // pred_check_branch
      %102 = sbr.rel (0) target = $region45
    $region44: #{tpu_custom_call.1} parent=1 // pred_region
      %103 = dma.done [#allocation10], 4608
    $region45: #{tpu_custom_call.1} parent=1 // pred_fallthru
      _
    // Predicated region
    $region46: #{tpu_custom_call.1} parent=1 // pred_check
      _
    $region47: #{tpu_custom_call.1} parent=1 // pred_check_branch
      %105 = sbr.rel (0) target = $region49
    $region48: #{tpu_custom_call.1} parent=1 // pred_region
      %106 = dma.done [#allocation10], 4608
    $region49: #{tpu_custom_call.1} parent=1 // pred_fallthru
      _
    // Predicated region
    $region50: #{tpu_custom_call.1} parent=1 // pred_check
      _
    $region51: #{tpu_custom_call.1} parent=1 // pred_check_branch
      %108 = sbr.rel (0) target = $region53
    $region52: #{tpu_custom_call.1} parent=1 // pred_region
      %109 = dma.done [#allocation13], 512
    $region53: #{tpu_custom_call.1} parent=1 // pred_fallthru
      _
    %v110 = vld [vmem:[#allocation2] sm:$0xff]
    %v111 = vld [vmem:[#allocation2 + $0x8] sm:$0xff]
    %v112 = vld [vmem:[#allocation2 + $0x10] sm:$0xff]
    %v113 = vld [vmem:[#allocation2 + $0x18] sm:$0xff]
    %v114 = vld [vmem:[#allocation2 + $0x20] sm:$0xff]
    %v115 = vld [vmem:[#allocation2 + $0x28] sm:$0xff]
    %v116 = vld [vmem:[#allocation2 + $0x30] sm:$0xff]
    %v117 = vld [vmem:[#allocation2 + $0x38] sm:$0xff]
    %v118 = vld [vmem:[#allocation6] sm:$0xff]
    %vm119 = vcmask 64512
    %v120 = vsel %vm119, %v118, 0.0
    %121 = vadd.xlane.f32.xlu0 %v120
    %v122 = vpop.xlane.xlu0 %121
    %v123 = vmax.f32 %v122, 1.0
    %v124 = vlaneseq
    %v125 = vshrl.u32 %v124, 7
    %v126 = vsub.s32 0, %v125
    %v127 = vrot.slane %v118, %v126
    %129 = vbcast.lane.b32.xlu0 %v127, 256
    %v130 = vpop.permute.xlu0 %129
    %v131 = vlaneseq
    %v132 = vshrl.u32 %v131, 7
    %v133 = vsub.s32 1, %v132
    %v134 = vrot.slane %v118, %v133
    %136 = vbcast.lane.b32.xlu0 %v134, 256
    %v137 = vpop.permute.xlu0 %136
    %v138 = vlaneseq
    %v139 = vshrl.u32 %v138, 7
    %v140 = vsub.s32 2, %v139
    %v141 = vrot.slane %v118, %v140
    %143 = vbcast.lane.b32.xlu0 %v141, 256
    %v144 = vpop.permute.xlu0 %143
    %v145 = vlaneseq
    %v146 = vshrl.u32 %v145, 7
    %v147 = vsub.s32 3, %v146
    %v148 = vrot.slane %v118, %v147
    %150 = vbcast.lane.b32.xlu0 %v148, 256
    %v151 = vpop.permute.xlu0 %150
    %v152 = vlaneseq
    %v153 = vshrl.u32 %v152, 7
    %v154 = vsub.s32 4, %v153
    %v155 = vrot.slane %v118, %v154
    %157 = vbcast.lane.b32.xlu0 %v155, 256
    %v158 = vpop.permute.xlu0 %157
    %v159 = vlaneseq
    %v160 = vshrl.u32 %v159, 7
    %v161 = vsub.s32 5, %v160
    %v162 = vrot.slane %v118, %v161
    %164 = vbcast.lane.b32.xlu0 %v162, 256
    %v165 = vpop.permute.xlu0 %164
    %v166 = vlaneseq
    %v167 = vshrl.u32 %v166, 7
    %v168 = vsub.s32 6, %v167
    %v169 = vrot.slane %v118, %v168
    %171 = vbcast.lane.b32.xlu0 %v169, 256
    %v172 = vpop.permute.xlu0 %171
    %v173 = vlaneseq
    %v174 = vshrl.u32 %v173, 7
    %v175 = vsub.s32 7, %v174
    %v176 = vrot.slane %v118, %v175
    %178 = vbcast.lane.b32.xlu0 %v176, 256
    %v179 = vpop.permute.xlu0 %178
    %v180 = vmul.f32 %v110, %v130
    %v181 = vmul.f32 %v111, %v137
    %v182 = vmul.f32 %v112, %v144
    %v183 = vmul.f32 %v113, %v151
    %v184 = vmul.f32 %v114, %v158
    %v185 = vmul.f32 %v115, %v165
    %v186 = vmul.f32 %v116, %v172
    %v187 = vmul.f32 %v117, %v179
    %vm188 = vcmask 261120
    %v189 = vsel %vm188, %v180, 0.0
    %v190 = vrot.slane %v189, 4
    %v191 = vadd.f32 %v189, %v190
    %v192 = vrot.slane %v191, 2
    %v193 = vadd.f32 %v191, %v192
    %v194 = vrot.slane %v193, 1
    %v195 = vadd.f32 %v193, %v194
    %v196 = vsel %vm188, %v181, 0.0
    %v197 = vrot.slane %v196, 4
    %v198 = vadd.f32 %v196, %v197
    %v199 = vrot.slane %v198, 2
    %v200 = vadd.f32 %v198, %v199
    %v201 = vrot.slane %v200, 1
    %v202 = vadd.f32 %v200, %v201
    %v203 = vsel %vm188, %v182, 0.0
    %v204 = vrot.slane %v203, 4
    %v205 = vadd.f32 %v203, %v204
    %v206 = vrot.slane %v205, 2
    %v207 = vadd.f32 %v205, %v206
    %v208 = vrot.slane %v207, 1
    %v209 = vadd.f32 %v207, %v208
    %v210 = vsel %vm188, %v183, 0.0
    %v211 = vrot.slane %v210, 4
    %v212 = vadd.f32 %v210, %v211
    %v213 = vrot.slane %v212, 2
    %v214 = vadd.f32 %v212, %v213
    %v215 = vrot.slane %v214, 1
    %v216 = vadd.f32 %v214, %v215
    %v217 = vsel %vm188, %v184, 0.0
    %v218 = vrot.slane %v217, 4
    %v219 = vadd.f32 %v217, %v218
    %v220 = vrot.slane %v219, 2
    %v221 = vadd.f32 %v219, %v220
    %v222 = vrot.slane %v221, 1
    %v223 = vadd.f32 %v221, %v222
    %v224 = vsel %vm188, %v185, 0.0
    %v225 = vrot.slane %v224, 4
    %v226 = vadd.f32 %v224, %v225
    %v227 = vrot.slane %v226, 2
    %v228 = vadd.f32 %v226, %v227
    %v229 = vrot.slane %v228, 1
    %v230 = vadd.f32 %v228, %v229
    %v231 = vsel %vm188, %v186, 0.0
    %v232 = vrot.slane %v231, 4
    %v233 = vadd.f32 %v231, %v232
    %v234 = vrot.slane %v233, 2
    %v235 = vadd.f32 %v233, %v234
    %v236 = vrot.slane %v235, 1
    %v237 = vadd.f32 %v235, %v236
    %v238 = vsel %vm188, %v187, 0.0
    %v239 = vrot.slane %v238, 4
    %v240 = vadd.f32 %v238, %v239
    %v241 = vrot.slane %v240, 2
    %v242 = vadd.f32 %v240, %v241
    %v243 = vrot.slane %v242, 1
    %v244 = vadd.f32 %v242, %v243
    %v246 = vrot.slane %v123, 1
    %v247 = vrot.slane %v123, 2
    %v248 = vrot.slane %v123, 3
    %v249 = vrot.slane %v123, 4
    %v250 = vrot.slane %v123, 5
    %v251 = vrot.slane %v123, 6
    %v252 = vrot.slane %v123, 7
    %v261 = vrcp.pop %v123
    %v262 = vmul.f32 %v195, %v261
    %v263 = vrcp.pop %v246
    %v264 = vmul.f32 %v202, %v263
    %v265 = vrcp.pop %v247
    %v266 = vmul.f32 %v209, %v265
    %v267 = vrcp.pop %v248
    %v268 = vmul.f32 %v216, %v267
    %v269 = vrcp.pop %v249
    %v270 = vmul.f32 %v223, %v269
    %v271 = vrcp.pop %v250
    %v272 = vmul.f32 %v230, %v271
    %v273 = vrcp.pop %v251
    %v274 = vmul.f32 %v237, %v273
    %v275 = vrcp.pop %v252
    %v276 = vmul.f32 %v244, %v275
    %v277 = vlaneseq
    %v278 = vand.u32 %v277, 127
    %v287 = vrot.slane %v264, 7
    %vm288 = vcmask 1041409
    %v289 = vsel %vm288, %v287, %v262
    %v290 = vrot.slane %v266, 6
    %vm291 = vcmask 1042434
    %v292 = vsel %vm291, %v290, %v289
    %v293 = vrot.slane %v268, 5
    %vm294 = vcmask 1043459
    %v295 = vsel %vm294, %v293, %v292
    %v296 = vrot.slane %v270, 4
    %vm297 = vcmask 1044484
    %v298 = vsel %vm297, %v296, %v295
    %v299 = vrot.slane %v272, 3
    %vm300 = vcmask 1045509
    %v301 = vsel %vm300, %v299, %v298
    %v302 = vrot.slane %v274, 2
    %vm303 = vcmask 1046534
    %v304 = vsel %vm303, %v302, %v301
    %v305 = vrot.slane %v276, 1
    %vm306 = vcmask 1047559
    %v307 = vsel %vm306, %v305, %v304
    %v309 = vsel %vm188, %v307, 0.0
    %v310 = vrot.slane %v309, 4
    %v311 = vadd.f32 %v309, %v310
    %v312 = vrot.slane %v311, 2
    %v313 = vadd.f32 %v311, %v312
    %v314 = vrot.slane %v313, 1
    %v315 = vadd.f32 %v313, %v314
    %v316 = vrcp.pop 8.0
    %v317 = vmul.f32 %v315, %v316
    %v318 = vlaneseq
    %v319 = vshrl.u32 %v318, 7
    %v320 = vsub.s32 0, %v319
    %v321 = vrot.slane %v317, %v320
    %v322 = vsub.f32 %v262, %v321
    %v323 = vsub.f32 %v264, %v321
    %v324 = vsub.f32 %v266, %v321
    %v325 = vsub.f32 %v268, %v321
    %v326 = vsub.f32 %v270, %v321
    %v327 = vsub.f32 %v272, %v321
    %v328 = vsub.f32 %v274, %v321
    %v329 = vsub.f32 %v276, %v321
    %v330 = vmul.f32 %v322, %v322
    %v331 = vmul.f32 %v323, %v323
    %v332 = vmul.f32 %v324, %v324
    %v333 = vmul.f32 %v325, %v325
    %v334 = vmul.f32 %v326, %v326
    %v335 = vmul.f32 %v327, %v327
    %v336 = vmul.f32 %v328, %v328
    %v337 = vmul.f32 %v329, %v329
    %v346 = vrot.slane %v331, 7
    %v347 = vsel %vm288, %v346, %v330
    %v348 = vrot.slane %v332, 6
    %v349 = vsel %vm291, %v348, %v347
    %v350 = vrot.slane %v333, 5
    %v351 = vsel %vm294, %v350, %v349
    %v352 = vrot.slane %v334, 4
    %v353 = vsel %vm297, %v352, %v351
    %v354 = vrot.slane %v335, 3
    %v355 = vsel %vm300, %v354, %v353
    %v356 = vrot.slane %v336, 2
    %v357 = vsel %vm303, %v356, %v355
    %v358 = vrot.slane %v337, 1
    %v359 = vsel %vm306, %v358, %v357
    %v361 = vsel %vm188, %v359, 0.0
    %v362 = vrot.slane %v361, 4
    %v363 = vadd.f32 %v361, %v362
    %v364 = vrot.slane %v363, 2
    %v365 = vadd.f32 %v363, %v364
    %v366 = vrot.slane %v365, 1
    %v367 = vadd.f32 %v365, %v366
    %v368 = vmul.f32 %v367, %v316
    %v369 = vrsqrt.pop %v368
    %v370 = vmul.f32 %v368, %v369
    %vm371 = vcmp.eq.f32.partialorder %v368, inf
    %v372 = vsel %vm371, %v368, %v370
    %vm373 = vcmp.eq.f32.partialorder %v368, 0.0
    %v374 = vand.u32 %v368, 2147483648
    %v375 = vsel %vm373, %v374, %v372
    %v376 = vadd.f32 %v375, 1e-06
    %v377 = vrcp.pop %v376
    %v378 = vlog2.pop %v376
    %v379 = vmul.f32 %v378, 0.6931472
    %v380 = vsub.f32 0.0, %v379
    %vm381 = vcmask 253952
    %v382 = vsel %vm381, %v380, 0.0
    %383 = vadd.xlane.f32.xlu0 %v382
    %v384 = vpop.xlane.xlu0 %383
    %v385 = vrot.slane %v384, 4
    %v386 = vadd.f32 %v384, %v385
    %v387 = vrot.slane %v386, 2
    %v388 = vadd.f32 %v386, %v387
    %v389 = vrot.slane %v388, 1
    %v390 = vadd.f32 %v388, %v389
    %s391 = vtos %v390
    %v392 = vstv %s391
    %v393 = vadd.f32 %v392, 0.0
    %v394 = vlaneseq
    %v395 = vshrl.u32 %v394, 7
    %v396 = vsub.s32 0, %v395
    %v397 = vrot.slane %v377, %v396
    %v406 = vrot.slane %v323, 7
    %v407 = vsel %vm288, %v406, %v322
    %v408 = vrot.slane %v324, 6
    %v409 = vsel %vm291, %v408, %v407
    %v410 = vrot.slane %v325, 5
    %v411 = vsel %vm294, %v410, %v409
    %v412 = vrot.slane %v326, 4
    %v413 = vsel %vm297, %v412, %v411
    %v414 = vrot.slane %v327, 3
    %v415 = vsel %vm300, %v414, %v413
    %v416 = vrot.slane %v328, 2
    %v417 = vsel %vm303, %v416, %v415
    %v418 = vrot.slane %v329, 1
    %v419 = vsel %vm306, %v418, %v417
    %v421 = vmul.f32 %v397, %v419
    %v422 = vld [vmem:[#allocation8] sm:$0xff]
    %v423 = vld [vmem:[#allocation8 + $0x8] sm:$0xff]
    %v424 = vld [vmem:[#allocation8 + $0x10] sm:$0xff]
    %v425 = vld [vmem:[#allocation8 + $0x18] sm:$0xff]
    %v427 = vsel %vm188, %v421, 0
    %429 = vmatprep.subr.mxu0 0.0
    %430 = vmatpush1.msra.mxu0 0.0
    %431 = vmatprep.subr.mxu0 0.0
    %432 = vmatpush1.msra.mxu0 0.0
    %433 = vmatprep.subr.mxu0 0.0
    %434 = vmatpush1.msra.mxu0 0.0
    %435 = vmatprep.subr.mxu0 0.0
    %436 = vmatpush1.msra.mxu0 0.0
    %437 = vmatprep.subr.mxu0 0.0
    %438 = vmatpush1.msra.mxu0 0.0
    %439 = vmatprep.subr.mxu0 0.0
    %440 = vmatpush1.msra.mxu0 0.0
    %441 = vmatprep.subr.mxu0 0.0
    %442 = vmatpush1.msra.mxu0 0.0
    %443 = vmatprep.subr.mxu0 0.0
    %444 = vmatpush1.msra.mxu0 0.0
    %445 = vmatprep.subr.mxu0 0.0
    %446 = vmatpush1.msra.mxu0 0.0
    %447 = vmatprep.subr.mxu0 0.0
    %448 = vmatpush1.msra.mxu0 0.0
    %449 = vmatprep.subr.mxu0 0.0
    %450 = vmatpush1.msra.mxu0 0.0
    %451 = vmatprep.subr.mxu0 0.0
    %452 = vmatpush1.msra.mxu0 0.0
    %453 = vmatprep.subr.mxu0 0.0
    %454 = vmatpush1.msra.mxu0 %v425
    %455 = vmatprep.subr.mxu0 0.0
    %456 = vmatpush1.msra.mxu0 %v424
    %457 = vmatprep.subr.mxu0 0.0
    %458 = vmatpush1.msra.mxu0 %v423
    %459 = vmatprep.subr.mxu0 0.0
    %460 = vmatpush1.msra.mxu0 %v422
    %461 = vmatprep.subr.mxu0 0.0
    %462 = vmatpush2.msra.mxu0 0.0
    %463 = vmatprep.subr.mxu0 0.0
    %464 = vmatpush2.msra.mxu0 0.0
    %465 = vmatprep.subr.mxu0 0.0
    %466 = vmatpush2.msra.mxu0 0.0
    %467 = vmatprep.subr.mxu0 0.0
    %468 = vmatpush2.msra.mxu0 0.0
    %469 = vmatprep.subr.mxu0 0.0
    %470 = vmatpush2.msra.mxu0 0.0
    %471 = vmatprep.subr.mxu0 0.0
    %472 = vmatpush2.msra.mxu0 0.0
    %473 = vmatprep.subr.mxu0 0.0
    %474 = vmatpush2.msra.mxu0 0.0
    %475 = vmatprep.subr.mxu0 0.0
    %476 = vmatpush2.msra.mxu0 0.0
    %477 = vmatprep.subr.mxu0 0.0
    %478 = vmatpush2.msra.mxu0 0.0
    %479 = vmatprep.subr.mxu0 0.0
    %480 = vmatpush2.msra.mxu0 0.0
    %481 = vmatprep.subr.mxu0 0.0
    %482 = vmatpush2.msra.mxu0 0.0
    %483 = vmatprep.subr.mxu0 0.0
    %484 = vmatpush2.msra.mxu0 0.0
    %485 = vmatprep.subr.mxu0 0.0
    %486 = vmatpush2.msra.mxu0 0.0
    %487 = vmatprep.subr.mxu0 0.0
    %488 = vmatpush2.msra.mxu0 0.0
    %489 = vmatprep.subr.mxu0 0.0
    %490 = vmatpush2.msra.mxu0 0.0
    %491 = vmatprep.subr.mxu0 0.0
    %492 = vmatpush2.msra.mxu0 0.0
    %493 = vmatprep.mubr.f32.mxu0 0.0
    %494 = vmatmul.mubr.f32.gmra.mxu0 %v427
    %v495 = vpop.f32.mrf.mxu0
    %v496 = vadd.f32 0.0, %v495
    %v497 = vpop.f32.mrf.mxu0
    %498 = vdwg.mxu0
    %v499 = vsel %vm188, %v496, 0.0
    %v500 = vrot.slane %v499, 4
    %v501 = vadd.f32 %v499, %v500
    %v502 = vrot.slane %v501, 2
    %v503 = vadd.f32 %v501, %v502
    %v504 = vrot.slane %v503, 1
    %v505 = vadd.f32 %v503, %v504
    %v506 = vmul.f32 %v505, %v316
    %v507 = vsub.f32 %v496, %v506
    %v508 = vmul.f32 %v507, %v507
    %v509 = vsel %vm188, %v508, 0.0
    %v510 = vrot.slane %v509, 4
    %v511 = vadd.f32 %v509, %v510
    %v512 = vrot.slane %v511, 2
    %v513 = vadd.f32 %v511, %v512
    %v514 = vrot.slane %v513, 1
    %v515 = vadd.f32 %v513, %v514
    %v516 = vmul.f32 %v515, %v316
    %v517 = vrsqrt.pop %v516
    %v518 = vmul.f32 %v516, %v517
    %vm519 = vcmp.eq.f32.partialorder %v516, inf
    %v520 = vsel %vm519, %v516, %v518
    %vm521 = vcmp.eq.f32.partialorder %v516, 0.0
    %v522 = vand.u32 %v516, 2147483648
    %v523 = vsel %vm521, %v522, %v520
    %v524 = vadd.f32 %v523, 1e-06
    %v525 = vrcp.pop %v524
    %v526 = vmul.f32 %v525, %v507
    %v527 = vmax.f32 %v526, 0.0
    %v528 = vld [vmem:[#allocation9] sm:$0xff]
    %v529 = vld [vmem:[#allocation9 + $0x8] sm:$0xff]
    %v530 = vld [vmem:[#allocation9 + $0x10] sm:$0xff]
    %v531 = vld [vmem:[#allocation9 + $0x18] sm:$0xff]
    %v533 = vsel %vm188, %v527, 0
    %535 = vmatprep.subr.mxu0 0.0
    %536 = vmatpush1.msra.mxu0 0.0
    %537 = vmatprep.subr.mxu0 0.0
    %538 = vmatpush1.msra.mxu0 0.0
    %539 = vmatprep.subr.mxu0 0.0
    %540 = vmatpush1.msra.mxu0 0.0
    %541 = vmatprep.subr.mxu0 0.0
    %542 = vmatpush1.msra.mxu0 0.0
    %543 = vmatprep.subr.mxu0 0.0
    %544 = vmatpush1.msra.mxu0 0.0
    %545 = vmatprep.subr.mxu0 0.0
    %546 = vmatpush1.msra.mxu0 0.0
    %547 = vmatprep.subr.mxu0 0.0
    %548 = vmatpush1.msra.mxu0 0.0
    %549 = vmatprep.subr.mxu0 0.0
    %550 = vmatpush1.msra.mxu0 0.0
    %551 = vmatprep.subr.mxu0 0.0
    %552 = vmatpush1.msra.mxu0 0.0
    %553 = vmatprep.subr.mxu0 0.0
    %554 = vmatpush1.msra.mxu0 0.0
    %555 = vmatprep.subr.mxu0 0.0
    %556 = vmatpush1.msra.mxu0 0.0
    %557 = vmatprep.subr.mxu0 0.0
    %558 = vmatpush1.msra.mxu0 0.0
    %559 = vmatprep.subr.mxu0 0.0
    %560 = vmatpush1.msra.mxu0 %v531
    %561 = vmatprep.subr.mxu0 0.0
    %562 = vmatpush1.msra.mxu0 %v530
    %563 = vmatprep.subr.mxu0 0.0
    %564 = vmatpush1.msra.mxu0 %v529
    %565 = vmatprep.subr.mxu0 0.0
    %566 = vmatpush1.msra.mxu0 %v528
    %567 = vmatprep.subr.mxu0 0.0
    %568 = vmatpush2.msra.mxu0 0.0
    %569 = vmatprep.subr.mxu0 0.0
    %570 = vmatpush2.msra.mxu0 0.0
    %571 = vmatprep.subr.mxu0 0.0
    %572 = vmatpush2.msra.mxu0 0.0
    %573 = vmatprep.subr.mxu0 0.0
    %574 = vmatpush2.msra.mxu0 0.0
    %575 = vmatprep.subr.mxu0 0.0
    %576 = vmatpush2.msra.mxu0 0.0
    %577 = vmatprep.subr.mxu0 0.0
    %578 = vmatpush2.msra.mxu0 0.0
    %579 = vmatprep.subr.mxu0 0.0
    %580 = vmatpush2.msra.mxu0 0.0
    %581 = vmatprep.subr.mxu0 0.0
    %582 = vmatpush2.msra.mxu0 0.0
    %583 = vmatprep.subr.mxu0 0.0
    %584 = vmatpush2.msra.mxu0 0.0
    %585 = vmatprep.subr.mxu0 0.0
    %586 = vmatpush2.msra.mxu0 0.0
    %587 = vmatprep.subr.mxu0 0.0
    %588 = vmatpush2.msra.mxu0 0.0
    %589 = vmatprep.subr.mxu0 0.0
    %590 = vmatpush2.msra.mxu0 0.0
    %591 = vmatprep.subr.mxu0 0.0
    %592 = vmatpush2.msra.mxu0 0.0
    %593 = vmatprep.subr.mxu0 0.0
    %594 = vmatpush2.msra.mxu0 0.0
    %595 = vmatprep.subr.mxu0 0.0
    %596 = vmatpush2.msra.mxu0 0.0
    %597 = vmatprep.subr.mxu0 0.0
    %598 = vmatpush2.msra.mxu0 0.0
    %599 = vmatprep.mubr.f32.mxu0 0.0
    %600 = vmatmul.mubr.f32.gmra.mxu0 %v533
    %v601 = vpop.f32.mrf.mxu0
    %v602 = vadd.f32 0.0, %v601
    %v603 = vpop.f32.mrf.mxu0
    %604 = vdwg.mxu0
    %v605 = vsel %vm188, %v602, 0.0
    %v606 = vrot.slane %v605, 4
    %v607 = vadd.f32 %v605, %v606
    %v608 = vrot.slane %v607, 2
    %v609 = vadd.f32 %v607, %v608
    %v610 = vrot.slane %v609, 1
    %v611 = vadd.f32 %v609, %v610
    %v612 = vmul.f32 %v611, %v316
    %v613 = vsub.f32 %v602, %v612
    %v614 = vmul.f32 %v613, %v613
    %v615 = vsel %vm188, %v614, 0.0
    %v616 = vrot.slane %v615, 4
    %v617 = vadd.f32 %v615, %v616
    %v618 = vrot.slane %v617, 2
    %v619 = vadd.f32 %v617, %v618
    %v620 = vrot.slane %v619, 1
    %v621 = vadd.f32 %v619, %v620
    %v622 = vmul.f32 %v621, %v316
    %v623 = vrsqrt.pop %v622
    %v624 = vmul.f32 %v622, %v623
    %vm625 = vcmp.eq.f32.partialorder %v622, inf
    %v626 = vsel %vm625, %v622, %v624
    %vm627 = vcmp.eq.f32.partialorder %v622, 0.0
    %v628 = vand.u32 %v622, 2147483648
    %v629 = vsel %vm627, %v628, %v626
    %v630 = vadd.f32 %v629, 1e-06
    %v631 = vrcp.pop %v630
    %v632 = vmul.f32 %v631, %v613
    %v633 = vmax.f32 %v632, 0.0
    %v634 = vld [vmem:[#allocation11] sm:$0xff]
    %v635 = vld [vmem:[#allocation11 + $0x8] sm:$0xff]
    %v636 = vld [vmem:[#allocation11 + $0x10] sm:$0xff]
    %v637 = vld [vmem:[#allocation11 + $0x18] sm:$0xff]
    %v638 = vld [vmem:[%s5] sm:$0x1]
    %v640 = vlaneseq
    %v641 = vshrl.u32 %v640, 7
    %v642 = vsub.s32 0, %v641
    %v643 = vrot.slane %v638, %v642
    %v646 = vsel %vm188, %v633, 0
    %648 = vmatprep.subr.mxu0 0.0
    %649 = vmatpush1.msra.mxu0 0.0
    %650 = vmatprep.subr.mxu0 0.0
    %651 = vmatpush1.msra.mxu0 0.0
    %652 = vmatprep.subr.mxu0 0.0
    %653 = vmatpush1.msra.mxu0 0.0
    %654 = vmatprep.subr.mxu0 0.0
    %655 = vmatpush1.msra.mxu0 0.0
    %656 = vmatprep.subr.mxu0 0.0
    %657 = vmatpush1.msra.mxu0 0.0
    %658 = vmatprep.subr.mxu0 0.0
    %659 = vmatpush1.msra.mxu0 0.0
    %660 = vmatprep.subr.mxu0 0.0
    %661 = vmatpush1.msra.mxu0 0.0
    %662 = vmatprep.subr.mxu0 0.0
    %663 = vmatpush1.msra.mxu0 0.0
    %664 = vmatprep.subr.mxu0 0.0
    %665 = vmatpush1.msra.mxu0 0.0
    %666 = vmatprep.subr.mxu0 0.0
    %667 = vmatpush1.msra.mxu0 0.0
    %668 = vmatprep.subr.mxu0 0.0
    %669 = vmatpush1.msra.mxu0 0.0
    %670 = vmatprep.subr.mxu0 0.0
    %671 = vmatpush1.msra.mxu0 0.0
    %672 = vmatprep.subr.mxu0 0.0
    %673 = vmatpush1.msra.mxu0 %v637
    %674 = vmatprep.subr.mxu0 0.0
    %675 = vmatpush1.msra.mxu0 %v636
    %676 = vmatprep.subr.mxu0 0.0
    %677 = vmatpush1.msra.mxu0 %v635
    %678 = vmatprep.subr.mxu0 0.0
    %679 = vmatpush1.msra.mxu0 %v634
    %680 = vmatprep.subr.mxu0 0.0
    %681 = vmatpush2.msra.mxu0 0.0
    %682 = vmatprep.subr.mxu0 0.0
    %683 = vmatpush2.msra.mxu0 0.0
    %684 = vmatprep.subr.mxu0 0.0
    %685 = vmatpush2.msra.mxu0 0.0
    %686 = vmatprep.subr.mxu0 0.0
    %687 = vmatpush2.msra.mxu0 0.0
    %688 = vmatprep.subr.mxu0 0.0
    %689 = vmatpush2.msra.mxu0 0.0
    %690 = vmatprep.subr.mxu0 0.0
    %691 = vmatpush2.msra.mxu0 0.0
    %692 = vmatprep.subr.mxu0 0.0
    %693 = vmatpush2.msra.mxu0 0.0
    %694 = vmatprep.subr.mxu0 0.0
    %695 = vmatpush2.msra.mxu0 0.0
    %696 = vmatprep.subr.mxu0 0.0
    %697 = vmatpush2.msra.mxu0 0.0
    %698 = vmatprep.subr.mxu0 0.0
    %699 = vmatpush2.msra.mxu0 0.0
    %700 = vmatprep.subr.mxu0 0.0
    %701 = vmatpush2.msra.mxu0 0.0
    %702 = vmatprep.subr.mxu0 0.0
    %703 = vmatpush2.msra.mxu0 0.0
    %704 = vmatprep.subr.mxu0 0.0
    %705 = vmatpush2.msra.mxu0 0.0
    %706 = vmatprep.subr.mxu0 0.0
    %707 = vmatpush2.msra.mxu0 0.0
    %708 = vmatprep.subr.mxu0 0.0
    %709 = vmatpush2.msra.mxu0 0.0
    %710 = vmatprep.subr.mxu0 0.0
    %711 = vmatpush2.msra.mxu0 0.0
    %712 = vmatprep.mubr.f32.mxu0 0.0
    %713 = vmatmul.mubr.f32.gmra.mxu0 %v646
    %v714 = vpop.f32.mrf.mxu0
    %v715 = vadd.f32 %v643, %v714
    %v716 = vpop.f32.mrf.mxu0
    %717 = vdwg.mxu0
    %v718 = vadd.f32 %v421, %v715
    %v719 = vsel %vm188, %v718, 0.0
    %v720 = vrot.slane %v719, 4
    %v721 = vadd.f32 %v719, %v720
    %v722 = vrot.slane %v721, 2
    %v723 = vadd.f32 %v721, %v722
    %v724 = vrot.slane %v723, 1
    %v725 = vadd.f32 %v723, %v724
    %v726 = vmul.f32 %v725, %v316
    %v727 = vsub.f32 %v718, %v726
    %v728 = vmul.f32 %v727, %v727
    %v729 = vsel %vm188, %v728, 0.0
    %v730 = vrot.slane %v729, 4
    %v731 = vadd.f32 %v729, %v730
    %v732 = vrot.slane %v731, 2
    %v733 = vadd.f32 %v731, %v732
    %v734 = vrot.slane %v733, 1
    %v735 = vadd.f32 %v733, %v734
    %v736 = vmul.f32 %v735, %v316
    %v737 = vrsqrt.pop %v736
    %v738 = vmul.f32 %v736, %v737
    %vm739 = vcmp.eq.f32.partialorder %v736, inf
    %v740 = vsel %vm739, %v736, %v738
    %vm741 = vcmp.eq.f32.partialorder %v736, 0.0
    %v742 = vand.u32 %v736, 2147483648
    %v743 = vsel %vm741, %v742, %v740
    %v744 = vadd.f32 %v743, 1e-06
    %v745 = vrcp.pop %v744
    %v746 = vlog2.pop %v744
    %v747 = vmul.f32 %v746, 0.6931472
    %v748 = vsub.f32 0.0, %v747
    %v749 = vsel %vm381, %v748, 0.0
    %750 = vadd.xlane.f32.xlu0 %v749
    %v751 = vpop.xlane.xlu0 %750
    %v752 = vrot.slane %v751, 4
    %v753 = vadd.f32 %v751, %v752
    %v754 = vrot.slane %v753, 2
    %v755 = vadd.f32 %v753, %v754
    %v756 = vrot.slane %v755, 1
    %v757 = vadd.f32 %v755, %v756
    %s758 = vtos %v757
    %v759 = vstv %s758
    %v760 = vadd.f32 %v393, %v759
    %v761 = vmul.f32 %v745, %v727
    %s762 = scalar_lea.vmem [#allocation8], 32
    %v763 = vld [vmem:[%s762] sm:$0xff]
    %v764 = vld [vmem:[%s762 + $0x8] sm:$0xff]
    %v765 = vld [vmem:[%s762 + $0x10] sm:$0xff]
    %v766 = vld [vmem:[%s762 + $0x18] sm:$0xff]
    %v768 = vsel %vm188, %v761, 0
    %770 = vmatprep.subr.mxu0 0.0
    %771 = vmatpush1.msra.mxu0 0.0
    %772 = vmatprep.subr.mxu0 0.0
    %773 = vmatpush1.msra.mxu0 0.0
    %774 = vmatprep.subr.mxu0 0.0
    %775 = vmatpush1.msra.mxu0 0.0
    %776 = vmatprep.subr.mxu0 0.0
    %777 = vmatpush1.msra.mxu0 0.0
    %778 = vmatprep.subr.mxu0 0.0
    %779 = vmatpush1.msra.mxu0 0.0
    %780 = vmatprep.subr.mxu0 0.0
    %781 = vmatpush1.msra.mxu0 0.0
    %782 = vmatprep.subr.mxu0 0.0
    %783 = vmatpush1.msra.mxu0 0.0
    %784 = vmatprep.subr.mxu0 0.0
    %785 = vmatpush1.msra.mxu0 0.0
    %786 = vmatprep.subr.mxu0 0.0
    %787 = vmatpush1.msra.mxu0 0.0
    %788 = vmatprep.subr.mxu0 0.0
    %789 = vmatpush1.msra.mxu0 0.0
    %790 = vmatprep.subr.mxu0 0.0
    %791 = vmatpush1.msra.mxu0 0.0
    %792 = vmatprep.subr.mxu0 0.0
    %793 = vmatpush1.msra.mxu0 0.0
    %794 = vmatprep.subr.mxu0 0.0
    %795 = vmatpush1.msra.mxu0 %v766
    %796 = vmatprep.subr.mxu0 0.0
    %797 = vmatpush1.msra.mxu0 %v765
    %798 = vmatprep.subr.mxu0 0.0
    %799 = vmatpush1.msra.mxu0 %v764
    %800 = vmatprep.subr.mxu0 0.0
    %801 = vmatpush1.msra.mxu0 %v763
    %802 = vmatprep.subr.mxu0 0.0
    %803 = vmatpush2.msra.mxu0 0.0
    %804 = vmatprep.subr.mxu0 0.0
    %805 = vmatpush2.msra.mxu0 0.0
    %806 = vmatprep.subr.mxu0 0.0
    %807 = vmatpush2.msra.mxu0 0.0
    %808 = vmatprep.subr.mxu0 0.0
    %809 = vmatpush2.msra.mxu0 0.0
    %810 = vmatprep.subr.mxu0 0.0
    %811 = vmatpush2.msra.mxu0 0.0
    %812 = vmatprep.subr.mxu0 0.0
    %813 = vmatpush2.msra.mxu0 0.0
    %814 = vmatprep.subr.mxu0 0.0
    %815 = vmatpush2.msra.mxu0 0.0
    %816 = vmatprep.subr.mxu0 0.0
    %817 = vmatpush2.msra.mxu0 0.0
    %818 = vmatprep.subr.mxu0 0.0
    %819 = vmatpush2.msra.mxu0 0.0
    %820 = vmatprep.subr.mxu0 0.0
    %821 = vmatpush2.msra.mxu0 0.0
    %822 = vmatprep.subr.mxu0 0.0
    %823 = vmatpush2.msra.mxu0 0.0
    %824 = vmatprep.subr.mxu0 0.0
    %825 = vmatpush2.msra.mxu0 0.0
    %826 = vmatprep.subr.mxu0 0.0
    %827 = vmatpush2.msra.mxu0 0.0
    %828 = vmatprep.subr.mxu0 0.0
    %829 = vmatpush2.msra.mxu0 0.0
    %830 = vmatprep.subr.mxu0 0.0
    %831 = vmatpush2.msra.mxu0 0.0
    %832 = vmatprep.subr.mxu0 0.0
    %833 = vmatpush2.msra.mxu0 0.0
    %834 = vmatprep.mubr.f32.mxu0 0.0
    %835 = vmatmul.mubr.f32.gmra.mxu0 %v768
    %v836 = vpop.f32.mrf.mxu0
    %v837 = vadd.f32 0.0, %v836
    %v838 = vpop.f32.mrf.mxu0
    %839 = vdwg.mxu0
    %v840 = vsel %vm188, %v837, 0.0
    %v841 = vrot.slane %v840, 4
    %v842 = vadd.f32 %v840, %v841
    %v843 = vrot.slane %v842, 2
    %v844 = vadd.f32 %v842, %v843
    %v845 = vrot.slane %v844, 1
    %v846 = vadd.f32 %v844, %v845
    %v847 = vmul.f32 %v846, %v316
    %v848 = vsub.f32 %v837, %v847
    %v849 = vmul.f32 %v848, %v848
    %v850 = vsel %vm188, %v849, 0.0
    %v851 = vrot.slane %v850, 4
    %v852 = vadd.f32 %v850, %v851
    %v853 = vrot.slane %v852, 2
    %v854 = vadd.f32 %v852, %v853
    %v855 = vrot.slane %v854, 1
    %v856 = vadd.f32 %v854, %v855
    %v857 = vmul.f32 %v856, %v316
    %v858 = vrsqrt.pop %v857
    %v859 = vmul.f32 %v857, %v858
    %vm860 = vcmp.eq.f32.partialorder %v857, inf
    %v861 = vsel %vm860, %v857, %v859
    %vm862 = vcmp.eq.f32.partialorder %v857, 0.0
    %v863 = vand.u32 %v857, 2147483648
    %v864 = vsel %vm862, %v863, %v861
    %v865 = vadd.f32 %v864, 1e-06
    %v866 = vrcp.pop %v865
    %v867 = vmul.f32 %v866, %v848
    %v868 = vmax.f32 %v867, 0.0
    %s869 = scalar_lea.vmem [#allocation9], 32
    %v870 = vld [vmem:[%s869] sm:$0xff]
    %v871 = vld [vmem:[%s869 + $0x8] sm:$0xff]
    %v872 = vld [vmem:[%s869 + $0x10] sm:$0xff]
    %v873 = vld [vmem:[%s869 + $0x18] sm:$0xff]
    %v875 = vsel %vm188, %v868, 0
    %877 = vmatprep.subr.mxu0 0.0
    %878 = vmatpush1.msra.mxu0 0.0
    %879 = vmatprep.subr.mxu0 0.0
    %880 = vmatpush1.msra.mxu0 0.0
    %881 = vmatprep.subr.mxu0 0.0
    %882 = vmatpush1.msra.mxu0 0.0
    %883 = vmatprep.subr.mxu0 0.0
    %884 = vmatpush1.msra.mxu0 0.0
    %885 = vmatprep.subr.mxu0 0.0
    %886 = vmatpush1.msra.mxu0 0.0
    %887 = vmatprep.subr.mxu0 0.0
    %888 = vmatpush1.msra.mxu0 0.0
    %889 = vmatprep.subr.mxu0 0.0
    %890 = vmatpush1.msra.mxu0 0.0
    %891 = vmatprep.subr.mxu0 0.0
    %892 = vmatpush1.msra.mxu0 0.0
    %893 = vmatprep.subr.mxu0 0.0
    %894 = vmatpush1.msra.mxu0 0.0
    %895 = vmatprep.subr.mxu0 0.0
    %896 = vmatpush1.msra.mxu0 0.0
    %897 = vmatprep.subr.mxu0 0.0
    %898 = vmatpush1.msra.mxu0 0.0
    %899 = vmatprep.subr.mxu0 0.0
    %900 = vmatpush1.msra.mxu0 0.0
    %901 = vmatprep.subr.mxu0 0.0
    %902 = vmatpush1.msra.mxu0 %v873
    %903 = vmatprep.subr.mxu0 0.0
    %904 = vmatpush1.msra.mxu0 %v872
    %905 = vmatprep.subr.mxu0 0.0
    %906 = vmatpush1.msra.mxu0 %v871
    %907 = vmatprep.subr.mxu0 0.0
    %908 = vmatpush1.msra.mxu0 %v870
    %909 = vmatprep.subr.mxu0 0.0
    %910 = vmatpush2.msra.mxu0 0.0
    %911 = vmatprep.subr.mxu0 0.0
    %912 = vmatpush2.msra.mxu0 0.0
    %913 = vmatprep.subr.mxu0 0.0
    %914 = vmatpush2.msra.mxu0 0.0
    %915 = vmatprep.subr.mxu0 0.0
    %916 = vmatpush2.msra.mxu0 0.0
    %917 = vmatprep.subr.mxu0 0.0
    %918 = vmatpush2.msra.mxu0 0.0
    %919 = vmatprep.subr.mxu0 0.0
    %920 = vmatpush2.msra.mxu0 0.0
    %921 = vmatprep.subr.mxu0 0.0
    %922 = vmatpush2.msra.mxu0 0.0
    %923 = vmatprep.subr.mxu0 0.0
    %924 = vmatpush2.msra.mxu0 0.0
    %925 = vmatprep.subr.mxu0 0.0
    %926 = vmatpush2.msra.mxu0 0.0
    %927 = vmatprep.subr.mxu0 0.0
    %928 = vmatpush2.msra.mxu0 0.0
    %929 = vmatprep.subr.mxu0 0.0
    %930 = vmatpush2.msra.mxu0 0.0
    %931 = vmatprep.subr.mxu0 0.0
    %932 = vmatpush2.msra.mxu0 0.0
    %933 = vmatprep.subr.mxu0 0.0
    %934 = vmatpush2.msra.mxu0 0.0
    %935 = vmatprep.subr.mxu0 0.0
    %936 = vmatpush2.msra.mxu0 0.0
    %937 = vmatprep.subr.mxu0 0.0
    %938 = vmatpush2.msra.mxu0 0.0
    %939 = vmatprep.subr.mxu0 0.0
    %940 = vmatpush2.msra.mxu0 0.0
    %941 = vmatprep.mubr.f32.mxu0 0.0
    %942 = vmatmul.mubr.f32.gmra.mxu0 %v875
    %v943 = vpop.f32.mrf.mxu0
    %v944 = vadd.f32 0.0, %v943
    %v945 = vpop.f32.mrf.mxu0
    %946 = vdwg.mxu0
    %v947 = vsel %vm188, %v944, 0.0
    %v948 = vrot.slane %v947, 4
    %v949 = vadd.f32 %v947, %v948
    %v950 = vrot.slane %v949, 2
    %v951 = vadd.f32 %v949, %v950
    %v952 = vrot.slane %v951, 1
    %v953 = vadd.f32 %v951, %v952
    %v954 = vmul.f32 %v953, %v316
    %v955 = vsub.f32 %v944, %v954
    %v956 = vmul.f32 %v955, %v955
    %v957 = vsel %vm188, %v956, 0.0
    %v958 = vrot.slane %v957, 4
    %v959 = vadd.f32 %v957, %v958
    %v960 = vrot.slane %v959, 2
    %v961 = vadd.f32 %v959, %v960
    %v962 = vrot.slane %v961, 1
    %v963 = vadd.f32 %v961, %v962
    %v964 = vmul.f32 %v963, %v316
    %v965 = vrsqrt.pop %v964
    %v966 = vmul.f32 %v964, %v965
    %vm967 = vcmp.eq.f32.partialorder %v964, inf
    %v968 = vsel %vm967, %v964, %v966
    %vm969 = vcmp.eq.f32.partialorder %v964, 0.0
    %v970 = vand.u32 %v964, 2147483648
    %v971 = vsel %vm969, %v970, %v968
    %v972 = vadd.f32 %v971, 1e-06
    %v973 = vrcp.pop %v972
    %v974 = vmul.f32 %v973, %v955
    %v975 = vmax.f32 %v974, 0.0
    %s976 = scalar_lea.vmem [#allocation11], 32
    %v977 = vld [vmem:[%s976] sm:$0xff]
    %v978 = vld [vmem:[%s976 + $0x8] sm:$0xff]
    %v979 = vld [vmem:[%s976 + $0x10] sm:$0xff]
    %v980 = vld [vmem:[%s976 + $0x18] sm:$0xff]
    %s981 = scalar_lea.vmem %s5, 1
    %v982 = vld [vmem:[%s981] sm:$0x1]
    %v984 = vlaneseq
    %v985 = vshrl.u32 %v984, 7
    %v986 = vsub.s32 0, %v985
    %v987 = vrot.slane %v982, %v986
    %v990 = vsel %vm188, %v975, 0
    %992 = vmatprep.subr.mxu0 0.0
    %993 = vmatpush1.msra.mxu0 0.0
    %994 = vmatprep.subr.mxu0 0.0
    %995 = vmatpush1.msra.mxu0 0.0
    %996 = vmatprep.subr.mxu0 0.0
    %997 = vmatpush1.msra.mxu0 0.0
    %998 = vmatprep.subr.mxu0 0.0
    %999 = vmatpush1.msra.mxu0 0.0
    %1000 = vmatprep.subr.mxu0 0.0
    %1001 = vmatpush1.msra.mxu0 0.0
    %1002 = vmatprep.subr.mxu0 0.0
    %1003 = vmatpush1.msra.mxu0 0.0
    %1004 = vmatprep.subr.mxu0 0.0
    %1005 = vmatpush1.msra.mxu0 0.0
    %1006 = vmatprep.subr.mxu0 0.0
    %1007 = vmatpush1.msra.mxu0 0.0
    %1008 = vmatprep.subr.mxu0 0.0
    %1009 = vmatpush1.msra.mxu0 0.0
    %1010 = vmatprep.subr.mxu0 0.0
    %1011 = vmatpush1.msra.mxu0 0.0
    %1012 = vmatprep.subr.mxu0 0.0
    %1013 = vmatpush1.msra.mxu0 0.0
    %1014 = vmatprep.subr.mxu0 0.0
    %1015 = vmatpush1.msra.mxu0 0.0
    %1016 = vmatprep.subr.mxu0 0.0
    %1017 = vmatpush1.msra.mxu0 %v980
    %1018 = vmatprep.subr.mxu0 0.0
    %1019 = vmatpush1.msra.mxu0 %v979
    %1020 = vmatprep.subr.mxu0 0.0
    %1021 = vmatpush1.msra.mxu0 %v978
    %1022 = vmatprep.subr.mxu0 0.0
    %1023 = vmatpush1.msra.mxu0 %v977
    %1024 = vmatprep.subr.mxu0 0.0
    %1025 = vmatpush2.msra.mxu0 0.0
    %1026 = vmatprep.subr.mxu0 0.0
    %1027 = vmatpush2.msra.mxu0 0.0
    %1028 = vmatprep.subr.mxu0 0.0
    %1029 = vmatpush2.msra.mxu0 0.0
    %1030 = vmatprep.subr.mxu0 0.0
    %1031 = vmatpush2.msra.mxu0 0.0
    %1032 = vmatprep.subr.mxu0 0.0
    %1033 = vmatpush2.msra.mxu0 0.0
    %1034 = vmatprep.subr.mxu0 0.0
    %1035 = vmatpush2.msra.mxu0 0.0
    %1036 = vmatprep.subr.mxu0 0.0
    %1037 = vmatpush2.msra.mxu0 0.0
    %1038 = vmatprep.subr.mxu0 0.0
    %1039 = vmatpush2.msra.mxu0 0.0
    %1040 = vmatprep.subr.mxu0 0.0
    %1041 = vmatpush2.msra.mxu0 0.0
    %1042 = vmatprep.subr.mxu0 0.0
    %1043 = vmatpush2.msra.mxu0 0.0
    %1044 = vmatprep.subr.mxu0 0.0
    %1045 = vmatpush2.msra.mxu0 0.0
    %1046 = vmatprep.subr.mxu0 0.0
    %1047 = vmatpush2.msra.mxu0 0.0
    %1048 = vmatprep.subr.mxu0 0.0
    %1049 = vmatpush2.msra.mxu0 0.0
    %1050 = vmatprep.subr.mxu0 0.0
    %1051 = vmatpush2.msra.mxu0 0.0
    %1052 = vmatprep.subr.mxu0 0.0
    %1053 = vmatpush2.msra.mxu0 0.0
    %1054 = vmatprep.subr.mxu0 0.0
    %1055 = vmatpush2.msra.mxu0 0.0
    %1056 = vmatprep.mubr.f32.mxu0 0.0
    %1057 = vmatmul.mubr.f32.gmra.mxu0 %v990
    %v1058 = vpop.f32.mrf.mxu0
    %v1059 = vadd.f32 %v987, %v1058
    %v1060 = vpop.f32.mrf.mxu0
    %1061 = vdwg.mxu0
    %v1062 = vadd.f32 %v761, %v1059
    %v1063 = vsel %vm188, %v1062, 0.0
    %v1064 = vrot.slane %v1063, 4
    %v1065 = vadd.f32 %v1063, %v1064
    %v1066 = vrot.slane %v1065, 2
    %v1067 = vadd.f32 %v1065, %v1066
    %v1068 = vrot.slane %v1067, 1
    %v1069 = vadd.f32 %v1067, %v1068
    %v1070 = vmul.f32 %v1069, %v316
    %v1071 = vsub.f32 %v1062, %v1070
    %v1072 = vmul.f32 %v1071, %v1071
    %v1073 = vsel %vm188, %v1072, 0.0
    %v1074 = vrot.slane %v1073, 4
    %v1075 = vadd.f32 %v1073, %v1074
    %v1076 = vrot.slane %v1075, 2
    %v1077 = vadd.f32 %v1075, %v1076
    %v1078 = vrot.slane %v1077, 1
    %v1079 = vadd.f32 %v1077, %v1078
    %v1080 = vmul.f32 %v1079, %v316
    %v1081 = vrsqrt.pop %v1080
    %v1082 = vmul.f32 %v1080, %v1081
    %vm1083 = vcmp.eq.f32.partialorder %v1080, inf
    %v1084 = vsel %vm1083, %v1080, %v1082
    %vm1085 = vcmp.eq.f32.partialorder %v1080, 0.0
    %v1086 = vand.u32 %v1080, 2147483648
    %v1087 = vsel %vm1085, %v1086, %v1084
    %v1088 = vadd.f32 %v1087, 1e-06
    %v1089 = vrcp.pop %v1088
    %v1090 = vlog2.pop %v1088
    %v1091 = vmul.f32 %v1090, 0.6931472
    %v1092 = vsub.f32 0.0, %v1091
    %v1093 = vsel %vm381, %v1092, 0.0
    %1094 = vadd.xlane.f32.xlu0 %v1093
    %v1095 = vpop.xlane.xlu0 %1094
    %v1096 = vrot.slane %v1095, 4
    %v1097 = vadd.f32 %v1095, %v1096
    %v1098 = vrot.slane %v1097, 2
    %v1099 = vadd.f32 %v1097, %v1098
    %v1100 = vrot.slane %v1099, 1
    %v1101 = vadd.f32 %v1099, %v1100
    %s1102 = vtos %v1101
    %v1103 = vstv %s1102
    %v1104 = vadd.f32 %v760, %v1103
    %v1105 = vmul.f32 %v1089, %v1071
    %s1106 = scalar_lea.vmem [#allocation8], 64
    %v1107 = vld [vmem:[%s1106] sm:$0xff]
    %v1108 = vld [vmem:[%s1106 + $0x8] sm:$0xff]
    %v1109 = vld [vmem:[%s1106 + $0x10] sm:$0xff]
    %v1110 = vld [vmem:[%s1106 + $0x18] sm:$0xff]
    %v1112 = vsel %vm188, %v1105, 0
    %1114 = vmatprep.subr.mxu0 0.0
    %1115 = vmatpush1.msra.mxu0 0.0
    %1116 = vmatprep.subr.mxu0 0.0
    %1117 = vmatpush1.msra.mxu0 0.0
    %1118 = vmatprep.subr.mxu0 0.0
    %1119 = vmatpush1.msra.mxu0 0.0
    %1120 = vmatprep.subr.mxu0 0.0
    %1121 = vmatpush1.msra.mxu0 0.0
    %1122 = vmatprep.subr.mxu0 0.0
    %1123 = vmatpush1.msra.mxu0 0.0
    %1124 = vmatprep.subr.mxu0 0.0
    %1125 = vmatpush1.msra.mxu0 0.0
    %1126 = vmatprep.subr.mxu0 0.0
    %1127 = vmatpush1.msra.mxu0 0.0
    %1128 = vmatprep.subr.mxu0 0.0
    %1129 = vmatpush1.msra.mxu0 0.0
    %1130 = vmatprep.subr.mxu0 0.0
    %1131 = vmatpush1.msra.mxu0 0.0
    %1132 = vmatprep.subr.mxu0 0.0
    %1133 = vmatpush1.msra.mxu0 0.0
    %1134 = vmatprep.subr.mxu0 0.0
    %1135 = vmatpush1.msra.mxu0 0.0
    %1136 = vmatprep.subr.mxu0 0.0
    %1137 = vmatpush1.msra.mxu0 0.0
    %1138 = vmatprep.subr.mxu0 0.0
    %1139 = vmatpush1.msra.mxu0 %v1110
    %1140 = vmatprep.subr.mxu0 0.0
    %1141 = vmatpush1.msra.mxu0 %v1109
    %1142 = vmatprep.subr.mxu0 0.0
    %1143 = vmatpush1.msra.mxu0 %v1108
    %1144 = vmatprep.subr.mxu0 0.0
    %1145 = vmatpush1.msra.mxu0 %v1107
    %1146 = vmatprep.subr.mxu0 0.0
    %1147 = vmatpush2.msra.mxu0 0.0
    %1148 = vmatprep.subr.mxu0 0.0
    %1149 = vmatpush2.msra.mxu0 0.0
    %1150 = vmatprep.subr.mxu0 0.0
    %1151 = vmatpush2.msra.mxu0 0.0
    %1152 = vmatprep.subr.mxu0 0.0
    %1153 = vmatpush2.msra.mxu0 0.0
    %1154 = vmatprep.subr.mxu0 0.0
    %1155 = vmatpush2.msra.mxu0 0.0
    %1156 = vmatprep.subr.mxu0 0.0
    %1157 = vmatpush2.msra.mxu0 0.0
    %1158 = vmatprep.subr.mxu0 0.0
    %1159 = vmatpush2.msra.mxu0 0.0
    %1160 = vmatprep.subr.mxu0 0.0
    %1161 = vmatpush2.msra.mxu0 0.0
    %1162 = vmatprep.subr.mxu0 0.0
    %1163 = vmatpush2.msra.mxu0 0.0
    %1164 = vmatprep.subr.mxu0 0.0
    %1165 = vmatpush2.msra.mxu0 0.0
    %1166 = vmatprep.subr.mxu0 0.0
    %1167 = vmatpush2.msra.mxu0 0.0
    %1168 = vmatprep.subr.mxu0 0.0
    %1169 = vmatpush2.msra.mxu0 0.0
    %1170 = vmatprep.subr.mxu0 0.0
    %1171 = vmatpush2.msra.mxu0 0.0
    %1172 = vmatprep.subr.mxu0 0.0
    %1173 = vmatpush2.msra.mxu0 0.0
    %1174 = vmatprep.subr.mxu0 0.0
    %1175 = vmatpush2.msra.mxu0 0.0
    %1176 = vmatprep.subr.mxu0 0.0
    %1177 = vmatpush2.msra.mxu0 0.0
    %1178 = vmatprep.mubr.f32.mxu0 0.0
    %1179 = vmatmul.mubr.f32.gmra.mxu0 %v1112
    %v1180 = vpop.f32.mrf.mxu0
    %v1181 = vadd.f32 0.0, %v1180
    %v1182 = vpop.f32.mrf.mxu0
    %1183 = vdwg.mxu0
    %v1184 = vsel %vm188, %v1181, 0.0
    %v1185 = vrot.slane %v1184, 4
    %v1186 = vadd.f32 %v1184, %v1185
    %v1187 = vrot.slane %v1186, 2
    %v1188 = vadd.f32 %v1186, %v1187
    %v1189 = vrot.slane %v1188, 1
    %v1190 = vadd.f32 %v1188, %v1189
    %v1191 = vmul.f32 %v1190, %v316
    %v1192 = vsub.f32 %v1181, %v1191
    %v1193 = vmul.f32 %v1192, %v1192
    %v1194 = vsel %vm188, %v1193, 0.0
    %v1195 = vrot.slane %v1194, 4
    %v1196 = vadd.f32 %v1194, %v1195
    %v1197 = vrot.slane %v1196, 2
    %v1198 = vadd.f32 %v1196, %v1197
    %v1199 = vrot.slane %v1198, 1
    %v1200 = vadd.f32 %v1198, %v1199
    %v1201 = vmul.f32 %v1200, %v316
    %v1202 = vrsqrt.pop %v1201
    %v1203 = vmul.f32 %v1201, %v1202
    %vm1204 = vcmp.eq.f32.partialorder %v1201, inf
    %v1205 = vsel %vm1204, %v1201, %v1203
    %vm1206 = vcmp.eq.f32.partialorder %v1201, 0.0
    %v1207 = vand.u32 %v1201, 2147483648
    %v1208 = vsel %vm1206, %v1207, %v1205
    %v1209 = vadd.f32 %v1208, 1e-06
    %v1210 = vrcp.pop %v1209
    %v1211 = vmul.f32 %v1210, %v1192
    %v1212 = vmax.f32 %v1211, 0.0
    %s1213 = scalar_lea.vmem [#allocation9], 64
    %v1214 = vld [vmem:[%s1213] sm:$0xff]
    %v1215 = vld [vmem:[%s1213 + $0x8] sm:$0xff]
    %v1216 = vld [vmem:[%s1213 + $0x10] sm:$0xff]
    %v1217 = vld [vmem:[%s1213 + $0x18] sm:$0xff]
    %v1219 = vsel %vm188, %v1212, 0
    %1221 = vmatprep.subr.mxu0 0.0
    %1222 = vmatpush1.msra.mxu0 0.0
    %1223 = vmatprep.subr.mxu0 0.0
    %1224 = vmatpush1.msra.mxu0 0.0
    %1225 = vmatprep.subr.mxu0 0.0
    %1226 = vmatpush1.msra.mxu0 0.0
    %1227 = vmatprep.subr.mxu0 0.0
    %1228 = vmatpush1.msra.mxu0 0.0
    %1229 = vmatprep.subr.mxu0 0.0
    %1230 = vmatpush1.msra.mxu0 0.0
    %1231 = vmatprep.subr.mxu0 0.0
    %1232 = vmatpush1.msra.mxu0 0.0
    %1233 = vmatprep.subr.mxu0 0.0
    %1234 = vmatpush1.msra.mxu0 0.0
    %1235 = vmatprep.subr.mxu0 0.0
    %1236 = vmatpush1.msra.mxu0 0.0
    %1237 = vmatprep.subr.mxu0 0.0
    %1238 = vmatpush1.msra.mxu0 0.0
    %1239 = vmatprep.subr.mxu0 0.0
    %1240 = vmatpush1.msra.mxu0 0.0
    %1241 = vmatprep.subr.mxu0 0.0
    %1242 = vmatpush1.msra.mxu0 0.0
    %1243 = vmatprep.subr.mxu0 0.0
    %1244 = vmatpush1.msra.mxu0 0.0
    %1245 = vmatprep.subr.mxu0 0.0
    %1246 = vmatpush1.msra.mxu0 %v1217
    %1247 = vmatprep.subr.mxu0 0.0
    %1248 = vmatpush1.msra.mxu0 %v1216
    %1249 = vmatprep.subr.mxu0 0.0
    %1250 = vmatpush1.msra.mxu0 %v1215
    %1251 = vmatprep.subr.mxu0 0.0
    %1252 = vmatpush1.msra.mxu0 %v1214
    %1253 = vmatprep.subr.mxu0 0.0
    %1254 = vmatpush2.msra.mxu0 0.0
    %1255 = vmatprep.subr.mxu0 0.0
    %1256 = vmatpush2.msra.mxu0 0.0
    %1257 = vmatprep.subr.mxu0 0.0
    %1258 = vmatpush2.msra.mxu0 0.0
    %1259 = vmatprep.subr.mxu0 0.0
    %1260 = vmatpush2.msra.mxu0 0.0
    %1261 = vmatprep.subr.mxu0 0.0
    %1262 = vmatpush2.msra.mxu0 0.0
    %1263 = vmatprep.subr.mxu0 0.0
    %1264 = vmatpush2.msra.mxu0 0.0
    %1265 = vmatprep.subr.mxu0 0.0
    %1266 = vmatpush2.msra.mxu0 0.0
    %1267 = vmatprep.subr.mxu0 0.0
    %1268 = vmatpush2.msra.mxu0 0.0
    %1269 = vmatprep.subr.mxu0 0.0
    %1270 = vmatpush2.msra.mxu0 0.0
    %1271 = vmatprep.subr.mxu0 0.0
    %1272 = vmatpush2.msra.mxu0 0.0
    %1273 = vmatprep.subr.mxu0 0.0
    %1274 = vmatpush2.msra.mxu0 0.0
    %1275 = vmatprep.subr.mxu0 0.0
    %1276 = vmatpush2.msra.mxu0 0.0
    %1277 = vmatprep.subr.mxu0 0.0
    %1278 = vmatpush2.msra.mxu0 0.0
    %1279 = vmatprep.subr.mxu0 0.0
    %1280 = vmatpush2.msra.mxu0 0.0
    %1281 = vmatprep.subr.mxu0 0.0
    %1282 = vmatpush2.msra.mxu0 0.0
    %1283 = vmatprep.subr.mxu0 0.0
    %1284 = vmatpush2.msra.mxu0 0.0
    %1285 = vmatprep.mubr.f32.mxu0 0.0
    %1286 = vmatmul.mubr.f32.gmra.mxu0 %v1219
    %v1287 = vpop.f32.mrf.mxu0
    %v1288 = vadd.f32 0.0, %v1287
    %v1289 = vpop.f32.mrf.mxu0
    %1290 = vdwg.mxu0
    %v1291 = vsel %vm188, %v1288, 0.0
    %v1292 = vrot.slane %v1291, 4
    %v1293 = vadd.f32 %v1291, %v1292
    %v1294 = vrot.slane %v1293, 2
    %v1295 = vadd.f32 %v1293, %v1294
    %v1296 = vrot.slane %v1295, 1
    %v1297 = vadd.f32 %v1295, %v1296
    %v1298 = vmul.f32 %v1297, %v316
    %v1299 = vsub.f32 %v1288, %v1298
    %v1300 = vmul.f32 %v1299, %v1299
    %v1301 = vsel %vm188, %v1300, 0.0
    %v1302 = vrot.slane %v1301, 4
    %v1303 = vadd.f32 %v1301, %v1302
    %v1304 = vrot.slane %v1303, 2
    %v1305 = vadd.f32 %v1303, %v1304
    %v1306 = vrot.slane %v1305, 1
    %v1307 = vadd.f32 %v1305, %v1306
    %v1308 = vmul.f32 %v1307, %v316
    %v1309 = vrsqrt.pop %v1308
    %v1310 = vmul.f32 %v1308, %v1309
    %vm1311 = vcmp.eq.f32.partialorder %v1308, inf
    %v1312 = vsel %vm1311, %v1308, %v1310
    %vm1313 = vcmp.eq.f32.partialorder %v1308, 0.0
    %v1314 = vand.u32 %v1308, 2147483648
    %v1315 = vsel %vm1313, %v1314, %v1312
    %v1316 = vadd.f32 %v1315, 1e-06
    %v1317 = vrcp.pop %v1316
    %v1318 = vmul.f32 %v1317, %v1299
    %v1319 = vmax.f32 %v1318, 0.0
    %s1320 = scalar_lea.vmem [#allocation11], 64
    %v1321 = vld [vmem:[%s1320] sm:$0xff]
    %v1322 = vld [vmem:[%s1320 + $0x8] sm:$0xff]
    %v1323 = vld [vmem:[%s1320 + $0x10] sm:$0xff]
    %v1324 = vld [vmem:[%s1320 + $0x18] sm:$0xff]
    %s1325 = scalar_lea.vmem %s5, 2
    %v1326 = vld [vmem:[%s1325] sm:$0x1]
    %v1328 = vlaneseq
    %v1329 = vshrl.u32 %v1328, 7
    %v1330 = vsub.s32 0, %v1329
    %v1331 = vrot.slane %v1326, %v1330
    %v1334 = vsel %vm188, %v1319, 0
    %1336 = vmatprep.subr.mxu0 0.0
    %1337 = vmatpush1.msra.mxu0 0.0
    %1338 = vmatprep.subr.mxu0 0.0
    %1339 = vmatpush1.msra.mxu0 0.0
    %1340 = vmatprep.subr.mxu0 0.0
    %1341 = vmatpush1.msra.mxu0 0.0
    %1342 = vmatprep.subr.mxu0 0.0
    %1343 = vmatpush1.msra.mxu0 0.0
    %1344 = vmatprep.subr.mxu0 0.0
    %1345 = vmatpush1.msra.mxu0 0.0
    %1346 = vmatprep.subr.mxu0 0.0
    %1347 = vmatpush1.msra.mxu0 0.0
    %1348 = vmatprep.subr.mxu0 0.0
    %1349 = vmatpush1.msra.mxu0 0.0
    %1350 = vmatprep.subr.mxu0 0.0
    %1351 = vmatpush1.msra.mxu0 0.0
    %1352 = vmatprep.subr.mxu0 0.0
    %1353 = vmatpush1.msra.mxu0 0.0
    %1354 = vmatprep.subr.mxu0 0.0
    %1355 = vmatpush1.msra.mxu0 0.0
    %1356 = vmatprep.subr.mxu0 0.0
    %1357 = vmatpush1.msra.mxu0 0.0
    %1358 = vmatprep.subr.mxu0 0.0
    %1359 = vmatpush1.msra.mxu0 0.0
    %1360 = vmatprep.subr.mxu0 0.0
    %1361 = vmatpush1.msra.mxu0 %v1324
    %1362 = vmatprep.subr.mxu0 0.0
    %1363 = vmatpush1.msra.mxu0 %v1323
    %1364 = vmatprep.subr.mxu0 0.0
    %1365 = vmatpush1.msra.mxu0 %v1322
    %1366 = vmatprep.subr.mxu0 0.0
    %1367 = vmatpush1.msra.mxu0 %v1321
    %1368 = vmatprep.subr.mxu0 0.0
    %1369 = vmatpush2.msra.mxu0 0.0
    %1370 = vmatprep.subr.mxu0 0.0
    %1371 = vmatpush2.msra.mxu0 0.0
    %1372 = vmatprep.subr.mxu0 0.0
    %1373 = vmatpush2.msra.mxu0 0.0
    %1374 = vmatprep.subr.mxu0 0.0
    %1375 = vmatpush2.msra.mxu0 0.0
    %1376 = vmatprep.subr.mxu0 0.0
    %1377 = vmatpush2.msra.mxu0 0.0
    %1378 = vmatprep.subr.mxu0 0.0
    %1379 = vmatpush2.msra.mxu0 0.0
    %1380 = vmatprep.subr.mxu0 0.0
    %1381 = vmatpush2.msra.mxu0 0.0
    %1382 = vmatprep.subr.mxu0 0.0
    %1383 = vmatpush2.msra.mxu0 0.0
    %1384 = vmatprep.subr.mxu0 0.0
    %1385 = vmatpush2.msra.mxu0 0.0
    %1386 = vmatprep.subr.mxu0 0.0
    %1387 = vmatpush2.msra.mxu0 0.0
    %1388 = vmatprep.subr.mxu0 0.0
    %1389 = vmatpush2.msra.mxu0 0.0
    %1390 = vmatprep.subr.mxu0 0.0
    %1391 = vmatpush2.msra.mxu0 0.0
    %1392 = vmatprep.subr.mxu0 0.0
    %1393 = vmatpush2.msra.mxu0 0.0
    %1394 = vmatprep.subr.mxu0 0.0
    %1395 = vmatpush2.msra.mxu0 0.0
    %1396 = vmatprep.subr.mxu0 0.0
    %1397 = vmatpush2.msra.mxu0 0.0
    %1398 = vmatprep.subr.mxu0 0.0
    %1399 = vmatpush2.msra.mxu0 0.0
    %1400 = vmatprep.mubr.f32.mxu0 0.0
    %1401 = vmatmul.mubr.f32.gmra.mxu0 %v1334
    %v1402 = vpop.f32.mrf.mxu0
    %v1403 = vadd.f32 %v1331, %v1402
    %v1404 = vpop.f32.mrf.mxu0
    %1405 = vdwg.mxu0
    %v1406 = vadd.f32 %v1105, %v1403
    %vm1407 = vcmp.ge.s32.totalorder %v278, 16
    %vm1408 = vcmp.lt.s32.totalorder %v278, 32
    %vm1409 = vmand %vm1407, %vm1408
    %v1410 = vsel %vm188, %v1406, 0.0
    %v1411 = vrot.slane %v1410, 4
    %v1412 = vadd.f32 %v1410, %v1411
    %v1413 = vrot.slane %v1412, 2
    %v1414 = vadd.f32 %v1412, %v1413
    %v1415 = vrot.slane %v1414, 1
    %v1416 = vadd.f32 %v1414, %v1415
    %v1417 = vmul.f32 %v1416, %v316
    %v1418 = vsub.f32 %v1406, %v1417
    %v1419 = vmul.f32 %v1418, %v1418
    %v1420 = vsel %vm188, %v1419, 0.0
    %v1421 = vrot.slane %v1420, 4
    %v1422 = vadd.f32 %v1420, %v1421
    %v1423 = vrot.slane %v1422, 2
    %v1424 = vadd.f32 %v1422, %v1423
    %v1425 = vrot.slane %v1424, 1
    %v1426 = vadd.f32 %v1424, %v1425
    %v1427 = vmul.f32 %v1426, %v316
    %v1428 = vrsqrt.pop %v1427
    %v1429 = vmul.f32 %v1427, %v1428
    %vm1430 = vcmp.eq.f32.partialorder %v1427, inf
    %v1431 = vsel %vm1430, %v1427, %v1429
    %vm1432 = vcmp.eq.f32.partialorder %v1427, 0.0
    %v1433 = vand.u32 %v1427, 2147483648
    %v1434 = vsel %vm1432, %v1433, %v1431
    %v1435 = vadd.f32 %v1434, 1e-06
    %v1436 = vrcp.pop %v1435
    %v1437 = vlog2.pop %v1435
    %v1438 = vmul.f32 %v1437, 0.6931472
    %v1439 = vsub.f32 0.0, %v1438
    %v1440 = vsel %vm1409, %v1439, 0.0
    %v1441 = vsel %vm381, %v1440, 0.0
    %1442 = vadd.xlane.f32.xlu0 %v1441
    %v1443 = vpop.xlane.xlu0 %1442
    %v1444 = vrot.slane %v1443, 4
    %v1445 = vadd.f32 %v1443, %v1444
    %v1446 = vrot.slane %v1445, 2
    %v1447 = vadd.f32 %v1445, %v1446
    %v1448 = vrot.slane %v1447, 1
    %v1449 = vadd.f32 %v1447, %v1448
    %s1450 = vtos %v1449
    %v1451 = vstv %s1450
    %v1452 = vadd.f32 %v1104, %v1451
    %v1453 = vmul.f32 %v1436, %v1418
    %v1454 = vsel %vm1409, 1, 0
    %vm1455 = vcmp.eq.s32.totalorder %v1454, 1
    %v1456 = vsel %vm1455, %v1453, %v1406
    %s1457 = scalar_lea.vmem [#allocation8], 96
    %v1458 = vld [vmem:[%s1457] sm:$0xff]
    %v1459 = vld [vmem:[%s1457 + $0x8] sm:$0xff]
    %v1460 = vld [vmem:[%s1457 + $0x10] sm:$0xff]
    %v1461 = vld [vmem:[%s1457 + $0x18] sm:$0xff]
    %v1463 = vsel %vm188, %v1456, 0
    %1465 = vmatprep.subr.mxu0 0.0
    %1466 = vmatpush1.msra.mxu0 0.0
    %1467 = vmatprep.subr.mxu0 0.0
    %1468 = vmatpush1.msra.mxu0 0.0
    %1469 = vmatprep.subr.mxu0 0.0
    %1470 = vmatpush1.msra.mxu0 0.0
    %1471 = vmatprep.subr.mxu0 0.0
    %1472 = vmatpush1.msra.mxu0 0.0
    %1473 = vmatprep.subr.mxu0 0.0
    %1474 = vmatpush1.msra.mxu0 0.0
    %1475 = vmatprep.subr.mxu0 0.0
    %1476 = vmatpush1.msra.mxu0 0.0
    %1477 = vmatprep.subr.mxu0 0.0
    %1478 = vmatpush1.msra.mxu0 0.0
    %1479 = vmatprep.subr.mxu0 0.0
    %1480 = vmatpush1.msra.mxu0 0.0
    %1481 = vmatprep.subr.mxu0 0.0
    %1482 = vmatpush1.msra.mxu0 0.0
    %1483 = vmatprep.subr.mxu0 0.0
    %1484 = vmatpush1.msra.mxu0 0.0
    %1485 = vmatprep.subr.mxu0 0.0
    %1486 = vmatpush1.msra.mxu0 0.0
    %1487 = vmatprep.subr.mxu0 0.0
    %1488 = vmatpush1.msra.mxu0 0.0
    %1489 = vmatprep.subr.mxu0 0.0
    %1490 = vmatpush1.msra.mxu0 %v1461
    %1491 = vmatprep.subr.mxu0 0.0
    %1492 = vmatpush1.msra.mxu0 %v1460
    %1493 = vmatprep.subr.mxu0 0.0
    %1494 = vmatpush1.msra.mxu0 %v1459
    %1495 = vmatprep.subr.mxu0 0.0
    %1496 = vmatpush1.msra.mxu0 %v1458
    %1497 = vmatprep.subr.mxu0 0.0
    %1498 = vmatpush2.msra.mxu0 0.0
    %1499 = vmatprep.subr.mxu0 0.0
    %1500 = vmatpush2.msra.mxu0 0.0
    %1501 = vmatprep.subr.mxu0 0.0
    %1502 = vmatpush2.msra.mxu0 0.0
    %1503 = vmatprep.subr.mxu0 0.0
    %1504 = vmatpush2.msra.mxu0 0.0
    %1505 = vmatprep.subr.mxu0 0.0
    %1506 = vmatpush2.msra.mxu0 0.0
    %1507 = vmatprep.subr.mxu0 0.0
    %1508 = vmatpush2.msra.mxu0 0.0
    %1509 = vmatprep.subr.mxu0 0.0
    %1510 = vmatpush2.msra.mxu0 0.0
    %1511 = vmatprep.subr.mxu0 0.0
    %1512 = vmatpush2.msra.mxu0 0.0
    %1513 = vmatprep.subr.mxu0 0.0
    %1514 = vmatpush2.msra.mxu0 0.0
    %1515 = vmatprep.subr.mxu0 0.0
    %1516 = vmatpush2.msra.mxu0 0.0
    %1517 = vmatprep.subr.mxu0 0.0
    %1518 = vmatpush2.msra.mxu0 0.0
    %1519 = vmatprep.subr.mxu0 0.0
    %1520 = vmatpush2.msra.mxu0 0.0
    %1521 = vmatprep.subr.mxu0 0.0
    %1522 = vmatpush2.msra.mxu0 0.0
    %1523 = vmatprep.subr.mxu0 0.0
    %1524 = vmatpush2.msra.mxu0 0.0
    %1525 = vmatprep.subr.mxu0 0.0
    %1526 = vmatpush2.msra.mxu0 0.0
    %1527 = vmatprep.subr.mxu0 0.0
    %1528 = vmatpush2.msra.mxu0 0.0
    %1529 = vmatprep.mubr.f32.mxu0 0.0
    %1530 = vmatmul.mubr.f32.gmra.mxu0 %v1463
    %v1531 = vpop.f32.mrf.mxu0
    %v1532 = vadd.f32 0.0, %v1531
    %v1533 = vpop.f32.mrf.mxu0
    %1534 = vdwg.mxu0
    %v1535 = vsel %vm188, %v1532, 0.0
    %v1536 = vrot.slane %v1535, 4
    %v1537 = vadd.f32 %v1535, %v1536
    %v1538 = vrot.slane %v1537, 2
    %v1539 = vadd.f32 %v1537, %v1538
    %v1540 = vrot.slane %v1539, 1
    %v1541 = vadd.f32 %v1539, %v1540
    %v1542 = vmul.f32 %v1541, %v316
    %v1543 = vsub.f32 %v1532, %v1542
    %v1544 = vmul.f32 %v1543, %v1543
    %v1545 = vsel %vm188, %v1544, 0.0
    %v1546 = vrot.slane %v1545, 4
    %v1547 = vadd.f32 %v1545, %v1546
    %v1548 = vrot.slane %v1547, 2
    %v1549 = vadd.f32 %v1547, %v1548
    %v1550 = vrot.slane %v1549, 1
    %v1551 = vadd.f32 %v1549, %v1550
    %v1552 = vmul.f32 %v1551, %v316
    %v1553 = vrsqrt.pop %v1552
    %v1554 = vmul.f32 %v1552, %v1553
    %vm1555 = vcmp.eq.f32.partialorder %v1552, inf
    %v1556 = vsel %vm1555, %v1552, %v1554
    %vm1557 = vcmp.eq.f32.partialorder %v1552, 0.0
    %v1558 = vand.u32 %v1552, 2147483648
    %v1559 = vsel %vm1557, %v1558, %v1556
    %v1560 = vadd.f32 %v1559, 1e-06
    %v1561 = vrcp.pop %v1560
    %v1562 = vmul.f32 %v1561, %v1543
    %v1563 = vmax.f32 %v1562, 0.0
    %s1564 = scalar_lea.vmem [#allocation9], 96
    %v1565 = vld [vmem:[%s1564] sm:$0xff]
    %v1566 = vld [vmem:[%s1564 + $0x8] sm:$0xff]
    %v1567 = vld [vmem:[%s1564 + $0x10] sm:$0xff]
    %v1568 = vld [vmem:[%s1564 + $0x18] sm:$0xff]
    %v1570 = vsel %vm188, %v1563, 0
    %1572 = vmatprep.subr.mxu0 0.0
    %1573 = vmatpush1.msra.mxu0 0.0
    %1574 = vmatprep.subr.mxu0 0.0
    %1575 = vmatpush1.msra.mxu0 0.0
    %1576 = vmatprep.subr.mxu0 0.0
    %1577 = vmatpush1.msra.mxu0 0.0
    %1578 = vmatprep.subr.mxu0 0.0
    %1579 = vmatpush1.msra.mxu0 0.0
    %1580 = vmatprep.subr.mxu0 0.0
    %1581 = vmatpush1.msra.mxu0 0.0
    %1582 = vmatprep.subr.mxu0 0.0
    %1583 = vmatpush1.msra.mxu0 0.0
    %1584 = vmatprep.subr.mxu0 0.0
    %1585 = vmatpush1.msra.mxu0 0.0
    %1586 = vmatprep.subr.mxu0 0.0
    %1587 = vmatpush1.msra.mxu0 0.0
    %1588 = vmatprep.subr.mxu0 0.0
    %1589 = vmatpush1.msra.mxu0 0.0
    %1590 = vmatprep.subr.mxu0 0.0
    %1591 = vmatpush1.msra.mxu0 0.0
    %1592 = vmatprep.subr.mxu0 0.0
    %1593 = vmatpush1.msra.mxu0 0.0
    %1594 = vmatprep.subr.mxu0 0.0
    %1595 = vmatpush1.msra.mxu0 0.0
    %1596 = vmatprep.subr.mxu0 0.0
    %1597 = vmatpush1.msra.mxu0 %v1568
    %1598 = vmatprep.subr.mxu0 0.0
    %1599 = vmatpush1.msra.mxu0 %v1567
    %1600 = vmatprep.subr.mxu0 0.0
    %1601 = vmatpush1.msra.mxu0 %v1566
    %1602 = vmatprep.subr.mxu0 0.0
    %1603 = vmatpush1.msra.mxu0 %v1565
    %1604 = vmatprep.subr.mxu0 0.0
    %1605 = vmatpush2.msra.mxu0 0.0
    %1606 = vmatprep.subr.mxu0 0.0
    %1607 = vmatpush2.msra.mxu0 0.0
    %1608 = vmatprep.subr.mxu0 0.0
    %1609 = vmatpush2.msra.mxu0 0.0
    %1610 = vmatprep.subr.mxu0 0.0
    %1611 = vmatpush2.msra.mxu0 0.0
    %1612 = vmatprep.subr.mxu0 0.0
    %1613 = vmatpush2.msra.mxu0 0.0
    %1614 = vmatprep.subr.mxu0 0.0
    %1615 = vmatpush2.msra.mxu0 0.0
    %1616 = vmatprep.subr.mxu0 0.0
    %1617 = vmatpush2.msra.mxu0 0.0
    %1618 = vmatprep.subr.mxu0 0.0
    %1619 = vmatpush2.msra.mxu0 0.0
    %1620 = vmatprep.subr.mxu0 0.0
    %1621 = vmatpush2.msra.mxu0 0.0
    %1622 = vmatprep.subr.mxu0 0.0
    %1623 = vmatpush2.msra.mxu0 0.0
    %1624 = vmatprep.subr.mxu0 0.0
    %1625 = vmatpush2.msra.mxu0 0.0
    %1626 = vmatprep.subr.mxu0 0.0
    %1627 = vmatpush2.msra.mxu0 0.0
    %1628 = vmatprep.subr.mxu0 0.0
    %1629 = vmatpush2.msra.mxu0 0.0
    %1630 = vmatprep.subr.mxu0 0.0
    %1631 = vmatpush2.msra.mxu0 0.0
    %1632 = vmatprep.subr.mxu0 0.0
    %1633 = vmatpush2.msra.mxu0 0.0
    %1634 = vmatprep.subr.mxu0 0.0
    %1635 = vmatpush2.msra.mxu0 0.0
    %1636 = vmatprep.mubr.f32.mxu0 0.0
    %1637 = vmatmul.mubr.f32.gmra.mxu0 %v1570
    %v1638 = vpop.f32.mrf.mxu0
    %v1639 = vadd.f32 0.0, %v1638
    %v1640 = vpop.f32.mrf.mxu0
    %1641 = vdwg.mxu0
    %v1642 = vsel %vm188, %v1639, 0.0
    %v1643 = vrot.slane %v1642, 4
    %v1644 = vadd.f32 %v1642, %v1643
    %v1645 = vrot.slane %v1644, 2
    %v1646 = vadd.f32 %v1644, %v1645
    %v1647 = vrot.slane %v1646, 1
    %v1648 = vadd.f32 %v1646, %v1647
    %v1649 = vmul.f32 %v1648, %v316
    %v1650 = vsub.f32 %v1639, %v1649
    %v1651 = vmul.f32 %v1650, %v1650
    %v1652 = vsel %vm188, %v1651, 0.0
    %v1653 = vrot.slane %v1652, 4
    %v1654 = vadd.f32 %v1652, %v1653
    %v1655 = vrot.slane %v1654, 2
    %v1656 = vadd.f32 %v1654, %v1655
    %v1657 = vrot.slane %v1656, 1
    %v1658 = vadd.f32 %v1656, %v1657
    %v1659 = vmul.f32 %v1658, %v316
    %v1660 = vrsqrt.pop %v1659
    %v1661 = vmul.f32 %v1659, %v1660
    %vm1662 = vcmp.eq.f32.partialorder %v1659, inf
    %v1663 = vsel %vm1662, %v1659, %v1661
    %vm1664 = vcmp.eq.f32.partialorder %v1659, 0.0
    %v1665 = vand.u32 %v1659, 2147483648
    %v1666 = vsel %vm1664, %v1665, %v1663
    %v1667 = vadd.f32 %v1666, 1e-06
    %v1668 = vrcp.pop %v1667
    %v1669 = vmul.f32 %v1668, %v1650
    %v1670 = vmax.f32 %v1669, 0.0
    %s1671 = scalar_lea.vmem [#allocation11], 96
    %v1672 = vld [vmem:[%s1671] sm:$0xff]
    %v1673 = vld [vmem:[%s1671 + $0x8] sm:$0xff]
    %v1674 = vld [vmem:[%s1671 + $0x10] sm:$0xff]
    %v1675 = vld [vmem:[%s1671 + $0x18] sm:$0xff]
    %s1676 = scalar_lea.vmem %s5, 3
    %v1677 = vld [vmem:[%s1676] sm:$0x1]
    %v1679 = vlaneseq
    %v1680 = vshrl.u32 %v1679, 7
    %v1681 = vsub.s32 0, %v1680
    %v1682 = vrot.slane %v1677, %v1681
    %v1685 = vsel %vm188, %v1670, 0
    %1687 = vmatprep.subr.mxu0 0.0
    %1688 = vmatpush1.msra.mxu0 0.0
    %1689 = vmatprep.subr.mxu0 0.0
    %1690 = vmatpush1.msra.mxu0 0.0
    %1691 = vmatprep.subr.mxu0 0.0
    %1692 = vmatpush1.msra.mxu0 0.0
    %1693 = vmatprep.subr.mxu0 0.0
    %1694 = vmatpush1.msra.mxu0 0.0
    %1695 = vmatprep.subr.mxu0 0.0
    %1696 = vmatpush1.msra.mxu0 0.0
    %1697 = vmatprep.subr.mxu0 0.0
    %1698 = vmatpush1.msra.mxu0 0.0
    %1699 = vmatprep.subr.mxu0 0.0
    %1700 = vmatpush1.msra.mxu0 0.0
    %1701 = vmatprep.subr.mxu0 0.0
    %1702 = vmatpush1.msra.mxu0 0.0
    %1703 = vmatprep.subr.mxu0 0.0
    %1704 = vmatpush1.msra.mxu0 0.0
    %1705 = vmatprep.subr.mxu0 0.0
    %1706 = vmatpush1.msra.mxu0 0.0
    %1707 = vmatprep.subr.mxu0 0.0
    %1708 = vmatpush1.msra.mxu0 0.0
    %1709 = vmatprep.subr.mxu0 0.0
    %1710 = vmatpush1.msra.mxu0 0.0
    %1711 = vmatprep.subr.mxu0 0.0
    %1712 = vmatpush1.msra.mxu0 %v1675
    %1713 = vmatprep.subr.mxu0 0.0
    %1714 = vmatpush1.msra.mxu0 %v1674
    %1715 = vmatprep.subr.mxu0 0.0
    %1716 = vmatpush1.msra.mxu0 %v1673
    %1717 = vmatprep.subr.mxu0 0.0
    %1718 = vmatpush1.msra.mxu0 %v1672
    %1719 = vmatprep.subr.mxu0 0.0
    %1720 = vmatpush2.msra.mxu0 0.0
    %1721 = vmatprep.subr.mxu0 0.0
    %1722 = vmatpush2.msra.mxu0 0.0
    %1723 = vmatprep.subr.mxu0 0.0
    %1724 = vmatpush2.msra.mxu0 0.0
    %1725 = vmatprep.subr.mxu0 0.0
    %1726 = vmatpush2.msra.mxu0 0.0
    %1727 = vmatprep.subr.mxu0 0.0
    %1728 = vmatpush2.msra.mxu0 0.0
    %1729 = vmatprep.subr.mxu0 0.0
    %1730 = vmatpush2.msra.mxu0 0.0
    %1731 = vmatprep.subr.mxu0 0.0
    %1732 = vmatpush2.msra.mxu0 0.0
    %1733 = vmatprep.subr.mxu0 0.0
    %1734 = vmatpush2.msra.mxu0 0.0
    %1735 = vmatprep.subr.mxu0 0.0
    %1736 = vmatpush2.msra.mxu0 0.0
    %1737 = vmatprep.subr.mxu0 0.0
    %1738 = vmatpush2.msra.mxu0 0.0
    %1739 = vmatprep.subr.mxu0 0.0
    %1740 = vmatpush2.msra.mxu0 0.0
    %1741 = vmatprep.subr.mxu0 0.0
    %1742 = vmatpush2.msra.mxu0 0.0
    %1743 = vmatprep.subr.mxu0 0.0
    %1744 = vmatpush2.msra.mxu0 0.0
    %1745 = vmatprep.subr.mxu0 0.0
    %1746 = vmatpush2.msra.mxu0 0.0
    %1747 = vmatprep.subr.mxu0 0.0
    %1748 = vmatpush2.msra.mxu0 0.0
    %1749 = vmatprep.subr.mxu0 0.0
    %1750 = vmatpush2.msra.mxu0 0.0
    %1751 = vmatprep.mubr.f32.mxu0 0.0
    %1752 = vmatmul.mubr.f32.gmra.mxu0 %v1685
    %v1753 = vpop.f32.mrf.mxu0
    %v1754 = vadd.f32 %v1682, %v1753
    %v1755 = vpop.f32.mrf.mxu0
    %1756 = vdwg.mxu0
    %v1757 = vadd.f32 %v1456, %v1754
    %v1758 = vsel %vm188, %v1757, 0.0
    %v1759 = vrot.slane %v1758, 4
    %v1760 = vadd.f32 %v1758, %v1759
    %v1761 = vrot.slane %v1760, 2
    %v1762 = vadd.f32 %v1760, %v1761
    %v1763 = vrot.slane %v1762, 1
    %v1764 = vadd.f32 %v1762, %v1763
    %v1765 = vmul.f32 %v1764, %v316
    %v1766 = vsub.f32 %v1757, %v1765
    %v1767 = vmul.f32 %v1766, %v1766
    %v1768 = vsel %vm188, %v1767, 0.0
    %v1769 = vrot.slane %v1768, 4
    %v1770 = vadd.f32 %v1768, %v1769
    %v1771 = vrot.slane %v1770, 2
    %v1772 = vadd.f32 %v1770, %v1771
    %v1773 = vrot.slane %v1772, 1
    %v1774 = vadd.f32 %v1772, %v1773
    %v1775 = vmul.f32 %v1774, %v316
    %v1776 = vrsqrt.pop %v1775
    %v1777 = vmul.f32 %v1775, %v1776
    %vm1778 = vcmp.eq.f32.partialorder %v1775, inf
    %v1779 = vsel %vm1778, %v1775, %v1777
    %vm1780 = vcmp.eq.f32.partialorder %v1775, 0.0
    %v1781 = vand.u32 %v1775, 2147483648
    %v1782 = vsel %vm1780, %v1781, %v1779
    %v1783 = vadd.f32 %v1782, 1e-06
    %v1784 = vrcp.pop %v1783
    %v1785 = vlog2.pop %v1783
    %v1786 = vmul.f32 %v1785, 0.6931472
    %v1787 = vsub.f32 0.0, %v1786
    %v1788 = vsel %vm1409, %v1787, 0.0
    %v1789 = vsel %vm381, %v1788, 0.0
    %1790 = vadd.xlane.f32.xlu0 %v1789
    %v1791 = vpop.xlane.xlu0 %1790
    %v1792 = vrot.slane %v1791, 4
    %v1793 = vadd.f32 %v1791, %v1792
    %v1794 = vrot.slane %v1793, 2
    %v1795 = vadd.f32 %v1793, %v1794
    %v1796 = vrot.slane %v1795, 1
    %v1797 = vadd.f32 %v1795, %v1796
    %s1798 = vtos %v1797
    %v1799 = vstv %s1798
    %v1800 = vadd.f32 %v1452, %v1799
    %v1801 = vmul.f32 %v1784, %v1766
    %v1802 = vsel %vm1455, %v1801, %v1757
    %s1803 = scalar_lea.vmem [#allocation8], 128
    %v1804 = vld [vmem:[%s1803] sm:$0xff]
    %v1805 = vld [vmem:[%s1803 + $0x8] sm:$0xff]
    %v1806 = vld [vmem:[%s1803 + $0x10] sm:$0xff]
    %v1807 = vld [vmem:[%s1803 + $0x18] sm:$0xff]
    %v1809 = vsel %vm188, %v1802, 0
    %1811 = vmatprep.subr.mxu0 0.0
    %1812 = vmatpush1.msra.mxu0 0.0
    %1813 = vmatprep.subr.mxu0 0.0
    %1814 = vmatpush1.msra.mxu0 0.0
    %1815 = vmatprep.subr.mxu0 0.0
    %1816 = vmatpush1.msra.mxu0 0.0
    %1817 = vmatprep.subr.mxu0 0.0
    %1818 = vmatpush1.msra.mxu0 0.0
    %1819 = vmatprep.subr.mxu0 0.0
    %1820 = vmatpush1.msra.mxu0 0.0
    %1821 = vmatprep.subr.mxu0 0.0
    %1822 = vmatpush1.msra.mxu0 0.0
    %1823 = vmatprep.subr.mxu0 0.0
    %1824 = vmatpush1.msra.mxu0 0.0
    %1825 = vmatprep.subr.mxu0 0.0
    %1826 = vmatpush1.msra.mxu0 0.0
    %1827 = vmatprep.subr.mxu0 0.0
    %1828 = vmatpush1.msra.mxu0 0.0
    %1829 = vmatprep.subr.mxu0 0.0
    %1830 = vmatpush1.msra.mxu0 0.0
    %1831 = vmatprep.subr.mxu0 0.0
    %1832 = vmatpush1.msra.mxu0 0.0
    %1833 = vmatprep.subr.mxu0 0.0
    %1834 = vmatpush1.msra.mxu0 0.0
    %1835 = vmatprep.subr.mxu0 0.0
    %1836 = vmatpush1.msra.mxu0 %v1807
    %1837 = vmatprep.subr.mxu0 0.0
    %1838 = vmatpush1.msra.mxu0 %v1806
    %1839 = vmatprep.subr.mxu0 0.0
    %1840 = vmatpush1.msra.mxu0 %v1805
    %1841 = vmatprep.subr.mxu0 0.0
    %1842 = vmatpush1.msra.mxu0 %v1804
    %1843 = vmatprep.subr.mxu0 0.0
    %1844 = vmatpush2.msra.mxu0 0.0
    %1845 = vmatprep.subr.mxu0 0.0
    %1846 = vmatpush2.msra.mxu0 0.0
    %1847 = vmatprep.subr.mxu0 0.0
    %1848 = vmatpush2.msra.mxu0 0.0
    %1849 = vmatprep.subr.mxu0 0.0
    %1850 = vmatpush2.msra.mxu0 0.0
    %1851 = vmatprep.subr.mxu0 0.0
    %1852 = vmatpush2.msra.mxu0 0.0
    %1853 = vmatprep.subr.mxu0 0.0
    %1854 = vmatpush2.msra.mxu0 0.0
    %1855 = vmatprep.subr.mxu0 0.0
    %1856 = vmatpush2.msra.mxu0 0.0
    %1857 = vmatprep.subr.mxu0 0.0
    %1858 = vmatpush2.msra.mxu0 0.0
    %1859 = vmatprep.subr.mxu0 0.0
    %1860 = vmatpush2.msra.mxu0 0.0
    %1861 = vmatprep.subr.mxu0 0.0
    %1862 = vmatpush2.msra.mxu0 0.0
    %1863 = vmatprep.subr.mxu0 0.0
    %1864 = vmatpush2.msra.mxu0 0.0
    %1865 = vmatprep.subr.mxu0 0.0
    %1866 = vmatpush2.msra.mxu0 0.0
    %1867 = vmatprep.subr.mxu0 0.0
    %1868 = vmatpush2.msra.mxu0 0.0
    %1869 = vmatprep.subr.mxu0 0.0
    %1870 = vmatpush2.msra.mxu0 0.0
    %1871 = vmatprep.subr.mxu0 0.0
    %1872 = vmatpush2.msra.mxu0 0.0
    %1873 = vmatprep.subr.mxu0 0.0
    %1874 = vmatpush2.msra.mxu0 0.0
    %1875 = vmatprep.mubr.f32.mxu0 0.0
    %1876 = vmatmul.mubr.f32.gmra.mxu0 %v1809
    %v1877 = vpop.f32.mrf.mxu0
    %v1878 = vadd.f32 0.0, %v1877
    %v1879 = vpop.f32.mrf.mxu0
    %1880 = vdwg.mxu0
    %v1881 = vsel %vm188, %v1878, 0.0
    %v1882 = vrot.slane %v1881, 4
    %v1883 = vadd.f32 %v1881, %v1882
    %v1884 = vrot.slane %v1883, 2
    %v1885 = vadd.f32 %v1883, %v1884
    %v1886 = vrot.slane %v1885, 1
    %v1887 = vadd.f32 %v1885, %v1886
    %v1888 = vmul.f32 %v1887, %v316
    %v1889 = vsub.f32 %v1878, %v1888
    %v1890 = vmul.f32 %v1889, %v1889
    %v1891 = vsel %vm188, %v1890, 0.0
    %v1892 = vrot.slane %v1891, 4
    %v1893 = vadd.f32 %v1891, %v1892
    %v1894 = vrot.slane %v1893, 2
    %v1895 = vadd.f32 %v1893, %v1894
    %v1896 = vrot.slane %v1895, 1
    %v1897 = vadd.f32 %v1895, %v1896
    %v1898 = vmul.f32 %v1897, %v316
    %v1899 = vrsqrt.pop %v1898
    %v1900 = vmul.f32 %v1898, %v1899
    %vm1901 = vcmp.eq.f32.partialorder %v1898, inf
    %v1902 = vsel %vm1901, %v1898, %v1900
    %vm1903 = vcmp.eq.f32.partialorder %v1898, 0.0
    %v1904 = vand.u32 %v1898, 2147483648
    %v1905 = vsel %vm1903, %v1904, %v1902
    %v1906 = vadd.f32 %v1905, 1e-06
    %v1907 = vrcp.pop %v1906
    %v1908 = vmul.f32 %v1907, %v1889
    %v1909 = vmax.f32 %v1908, 0.0
    %s1910 = scalar_lea.vmem [#allocation9], 128
    %v1911 = vld [vmem:[%s1910] sm:$0xff]
    %v1912 = vld [vmem:[%s1910 + $0x8] sm:$0xff]
    %v1913 = vld [vmem:[%s1910 + $0x10] sm:$0xff]
    %v1914 = vld [vmem:[%s1910 + $0x18] sm:$0xff]
    %v1916 = vsel %vm188, %v1909, 0
    %1918 = vmatprep.subr.mxu0 0.0
    %1919 = vmatpush1.msra.mxu0 0.0
    %1920 = vmatprep.subr.mxu0 0.0
    %1921 = vmatpush1.msra.mxu0 0.0
    %1922 = vmatprep.subr.mxu0 0.0
    %1923 = vmatpush1.msra.mxu0 0.0
    %1924 = vmatprep.subr.mxu0 0.0
    %1925 = vmatpush1.msra.mxu0 0.0
    %1926 = vmatprep.subr.mxu0 0.0
    %1927 = vmatpush1.msra.mxu0 0.0
    %1928 = vmatprep.subr.mxu0 0.0
    %1929 = vmatpush1.msra.mxu0 0.0
    %1930 = vmatprep.subr.mxu0 0.0
    %1931 = vmatpush1.msra.mxu0 0.0
    %1932 = vmatprep.subr.mxu0 0.0
    %1933 = vmatpush1.msra.mxu0 0.0
    %1934 = vmatprep.subr.mxu0 0.0
    %1935 = vmatpush1.msra.mxu0 0.0
    %1936 = vmatprep.subr.mxu0 0.0
    %1937 = vmatpush1.msra.mxu0 0.0
    %1938 = vmatprep.subr.mxu0 0.0
    %1939 = vmatpush1.msra.mxu0 0.0
    %1940 = vmatprep.subr.mxu0 0.0
    %1941 = vmatpush1.msra.mxu0 0.0
    %1942 = vmatprep.subr.mxu0 0.0
    %1943 = vmatpush1.msra.mxu0 %v1914
    %1944 = vmatprep.subr.mxu0 0.0
    %1945 = vmatpush1.msra.mxu0 %v1913
    %1946 = vmatprep.subr.mxu0 0.0
    %1947 = vmatpush1.msra.mxu0 %v1912
    %1948 = vmatprep.subr.mxu0 0.0
    %1949 = vmatpush1.msra.mxu0 %v1911
    %1950 = vmatprep.subr.mxu0 0.0
    %1951 = vmatpush2.msra.mxu0 0.0
    %1952 = vmatprep.subr.mxu0 0.0
    %1953 = vmatpush2.msra.mxu0 0.0
    %1954 = vmatprep.subr.mxu0 0.0
    %1955 = vmatpush2.msra.mxu0 0.0
    %1956 = vmatprep.subr.mxu0 0.0
    %1957 = vmatpush2.msra.mxu0 0.0
    %1958 = vmatprep.subr.mxu0 0.0
    %1959 = vmatpush2.msra.mxu0 0.0
    %1960 = vmatprep.subr.mxu0 0.0
    %1961 = vmatpush2.msra.mxu0 0.0
    %1962 = vmatprep.subr.mxu0 0.0
    %1963 = vmatpush2.msra.mxu0 0.0
    %1964 = vmatprep.subr.mxu0 0.0
    %1965 = vmatpush2.msra.mxu0 0.0
    %1966 = vmatprep.subr.mxu0 0.0
    %1967 = vmatpush2.msra.mxu0 0.0
    %1968 = vmatprep.subr.mxu0 0.0
    %1969 = vmatpush2.msra.mxu0 0.0
    %1970 = vmatprep.subr.mxu0 0.0
    %1971 = vmatpush2.msra.mxu0 0.0
    %1972 = vmatprep.subr.mxu0 0.0
    %1973 = vmatpush2.msra.mxu0 0.0
    %1974 = vmatprep.subr.mxu0 0.0
    %1975 = vmatpush2.msra.mxu0 0.0
    %1976 = vmatprep.subr.mxu0 0.0
    %1977 = vmatpush2.msra.mxu0 0.0
    %1978 = vmatprep.subr.mxu0 0.0
    %1979 = vmatpush2.msra.mxu0 0.0
    %1980 = vmatprep.subr.mxu0 0.0
    %1981 = vmatpush2.msra.mxu0 0.0
    %1982 = vmatprep.mubr.f32.mxu0 0.0
    %1983 = vmatmul.mubr.f32.gmra.mxu0 %v1916
    %v1984 = vpop.f32.mrf.mxu0
    %v1985 = vadd.f32 0.0, %v1984
    %v1986 = vpop.f32.mrf.mxu0
    %1987 = vdwg.mxu0
    %v1988 = vsel %vm188, %v1985, 0.0
    %v1989 = vrot.slane %v1988, 4
    %v1990 = vadd.f32 %v1988, %v1989
    %v1991 = vrot.slane %v1990, 2
    %v1992 = vadd.f32 %v1990, %v1991
    %v1993 = vrot.slane %v1992, 1
    %v1994 = vadd.f32 %v1992, %v1993
    %v1995 = vmul.f32 %v1994, %v316
    %v1996 = vsub.f32 %v1985, %v1995
    %v1997 = vmul.f32 %v1996, %v1996
    %v1998 = vsel %vm188, %v1997, 0.0
    %v1999 = vrot.slane %v1998, 4
    %v2000 = vadd.f32 %v1998, %v1999
    %v2001 = vrot.slane %v2000, 2
    %v2002 = vadd.f32 %v2000, %v2001
    %v2003 = vrot.slane %v2002, 1
    %v2004 = vadd.f32 %v2002, %v2003
    %v2005 = vmul.f32 %v2004, %v316
    %v2006 = vrsqrt.pop %v2005
    %v2007 = vmul.f32 %v2005, %v2006
    %vm2008 = vcmp.eq.f32.partialorder %v2005, inf
    %v2009 = vsel %vm2008, %v2005, %v2007
    %vm2010 = vcmp.eq.f32.partialorder %v2005, 0.0
    %v2011 = vand.u32 %v2005, 2147483648
    %v2012 = vsel %vm2010, %v2011, %v2009
    %v2013 = vadd.f32 %v2012, 1e-06
    %v2014 = vrcp.pop %v2013
    %v2015 = vmul.f32 %v2014, %v1996
    %v2016 = vmax.f32 %v2015, 0.0
    %s2017 = scalar_lea.vmem [#allocation11], 128
    %v2018 = vld [vmem:[%s2017] sm:$0xff]
    %v2019 = vld [vmem:[%s2017 + $0x8] sm:$0xff]
    %v2020 = vld [vmem:[%s2017 + $0x10] sm:$0xff]
    %v2021 = vld [vmem:[%s2017 + $0x18] sm:$0xff]
    %s2022 = scalar_lea.vmem %s5, 4
    %v2023 = vld [vmem:[%s2022] sm:$0x1]
    %v2025 = vlaneseq
    %v2026 = vshrl.u32 %v2025, 7
    %v2027 = vsub.s32 0, %v2026
    %v2028 = vrot.slane %v2023, %v2027
    %v2031 = vsel %vm188, %v2016, 0
    %2033 = vmatprep.subr.mxu0 0.0
    %2034 = vmatpush1.msra.mxu0 0.0
    %2035 = vmatprep.subr.mxu0 0.0
    %2036 = vmatpush1.msra.mxu0 0.0
    %2037 = vmatprep.subr.mxu0 0.0
    %2038 = vmatpush1.msra.mxu0 0.0
    %2039 = vmatprep.subr.mxu0 0.0
    %2040 = vmatpush1.msra.mxu0 0.0
    %2041 = vmatprep.subr.mxu0 0.0
    %2042 = vmatpush1.msra.mxu0 0.0
    %2043 = vmatprep.subr.mxu0 0.0
    %2044 = vmatpush1.msra.mxu0 0.0
    %2045 = vmatprep.subr.mxu0 0.0
    %2046 = vmatpush1.msra.mxu0 0.0
    %2047 = vmatprep.subr.mxu0 0.0
    %2048 = vmatpush1.msra.mxu0 0.0
    %2049 = vmatprep.subr.mxu0 0.0
    %2050 = vmatpush1.msra.mxu0 0.0
    %2051 = vmatprep.subr.mxu0 0.0
    %2052 = vmatpush1.msra.mxu0 0.0
    %2053 = vmatprep.subr.mxu0 0.0
    %2054 = vmatpush1.msra.mxu0 0.0
    %2055 = vmatprep.subr.mxu0 0.0
    %2056 = vmatpush1.msra.mxu0 0.0
    %2057 = vmatprep.subr.mxu0 0.0
    %2058 = vmatpush1.msra.mxu0 %v2021
    %2059 = vmatprep.subr.mxu0 0.0
    %2060 = vmatpush1.msra.mxu0 %v2020
    %2061 = vmatprep.subr.mxu0 0.0
    %2062 = vmatpush1.msra.mxu0 %v2019
    %2063 = vmatprep.subr.mxu0 0.0
    %2064 = vmatpush1.msra.mxu0 %v2018
    %2065 = vmatprep.subr.mxu0 0.0
    %2066 = vmatpush2.msra.mxu0 0.0
    %2067 = vmatprep.subr.mxu0 0.0
    %2068 = vmatpush2.msra.mxu0 0.0
    %2069 = vmatprep.subr.mxu0 0.0
    %2070 = vmatpush2.msra.mxu0 0.0
    %2071 = vmatprep.subr.mxu0 0.0
    %2072 = vmatpush2.msra.mxu0 0.0
    %2073 = vmatprep.subr.mxu0 0.0
    %2074 = vmatpush2.msra.mxu0 0.0
    %2075 = vmatprep.subr.mxu0 0.0
    %2076 = vmatpush2.msra.mxu0 0.0
    %2077 = vmatprep.subr.mxu0 0.0
    %2078 = vmatpush2.msra.mxu0 0.0
    %2079 = vmatprep.subr.mxu0 0.0
    %2080 = vmatpush2.msra.mxu0 0.0
    %2081 = vmatprep.subr.mxu0 0.0
    %2082 = vmatpush2.msra.mxu0 0.0
    %2083 = vmatprep.subr.mxu0 0.0
    %2084 = vmatpush2.msra.mxu0 0.0
    %2085 = vmatprep.subr.mxu0 0.0
    %2086 = vmatpush2.msra.mxu0 0.0
    %2087 = vmatprep.subr.mxu0 0.0
    %2088 = vmatpush2.msra.mxu0 0.0
    %2089 = vmatprep.subr.mxu0 0.0
    %2090 = vmatpush2.msra.mxu0 0.0
    %2091 = vmatprep.subr.mxu0 0.0
    %2092 = vmatpush2.msra.mxu0 0.0
    %2093 = vmatprep.subr.mxu0 0.0
    %2094 = vmatpush2.msra.mxu0 0.0
    %2095 = vmatprep.subr.mxu0 0.0
    %2096 = vmatpush2.msra.mxu0 0.0
    %2097 = vmatprep.mubr.f32.mxu0 0.0
    %2098 = vmatmul.mubr.f32.gmra.mxu0 %v2031
    %v2099 = vpop.f32.mrf.mxu0
    %v2100 = vadd.f32 %v2028, %v2099
    %v2101 = vpop.f32.mrf.mxu0
    %2102 = vdwg.mxu0
    %v2103 = vadd.f32 %v1802, %v2100
    %v2104 = vsel %vm188, %v2103, 0.0
    %v2105 = vrot.slane %v2104, 4
    %v2106 = vadd.f32 %v2104, %v2105
    %v2107 = vrot.slane %v2106, 2
    %v2108 = vadd.f32 %v2106, %v2107
    %v2109 = vrot.slane %v2108, 1
    %v2110 = vadd.f32 %v2108, %v2109
    %v2111 = vmul.f32 %v2110, %v316
    %v2112 = vsub.f32 %v2103, %v2111
    %v2113 = vmul.f32 %v2112, %v2112
    %v2114 = vsel %vm188, %v2113, 0.0
    %v2115 = vrot.slane %v2114, 4
    %v2116 = vadd.f32 %v2114, %v2115
    %v2117 = vrot.slane %v2116, 2
    %v2118 = vadd.f32 %v2116, %v2117
    %v2119 = vrot.slane %v2118, 1
    %v2120 = vadd.f32 %v2118, %v2119
    %v2121 = vmul.f32 %v2120, %v316
    %v2122 = vrsqrt.pop %v2121
    %v2123 = vmul.f32 %v2121, %v2122
    %vm2124 = vcmp.eq.f32.partialorder %v2121, inf
    %v2125 = vsel %vm2124, %v2121, %v2123
    %vm2126 = vcmp.eq.f32.partialorder %v2121, 0.0
    %v2127 = vand.u32 %v2121, 2147483648
    %v2128 = vsel %vm2126, %v2127, %v2125
    %v2129 = vadd.f32 %v2128, 1e-06
    %v2130 = vrcp.pop %v2129
    %v2131 = vlog2.pop %v2129
    %v2132 = vmul.f32 %v2131, 0.6931472
    %v2133 = vsub.f32 0.0, %v2132
    %v2134 = vsel %vm1409, %v2133, 0.0
    %v2135 = vsel %vm381, %v2134, 0.0
    %2136 = vadd.xlane.f32.xlu0 %v2135
    %v2137 = vpop.xlane.xlu0 %2136
    %v2138 = vrot.slane %v2137, 4
    %v2139 = vadd.f32 %v2137, %v2138
    %v2140 = vrot.slane %v2139, 2
    %v2141 = vadd.f32 %v2139, %v2140
    %v2142 = vrot.slane %v2141, 1
    %v2143 = vadd.f32 %v2141, %v2142
    %s2144 = vtos %v2143
    %v2145 = vstv %s2144
    %v2146 = vadd.f32 %v1800, %v2145
    %v2147 = vmul.f32 %v2130, %v2112
    %v2148 = vsel %vm1455, %v2147, %v2103
    %s2149 = scalar_lea.vmem [#allocation8], 160
    %v2150 = vld [vmem:[%s2149] sm:$0xff]
    %v2151 = vld [vmem:[%s2149 + $0x8] sm:$0xff]
    %v2152 = vld [vmem:[%s2149 + $0x10] sm:$0xff]
    %v2153 = vld [vmem:[%s2149 + $0x18] sm:$0xff]
    %v2155 = vsel %vm188, %v2148, 0
    %2157 = vmatprep.subr.mxu0 0.0
    %2158 = vmatpush1.msra.mxu0 0.0
    %2159 = vmatprep.subr.mxu0 0.0
    %2160 = vmatpush1.msra.mxu0 0.0
    %2161 = vmatprep.subr.mxu0 0.0
    %2162 = vmatpush1.msra.mxu0 0.0
    %2163 = vmatprep.subr.mxu0 0.0
    %2164 = vmatpush1.msra.mxu0 0.0
    %2165 = vmatprep.subr.mxu0 0.0
    %2166 = vmatpush1.msra.mxu0 0.0
    %2167 = vmatprep.subr.mxu0 0.0
    %2168 = vmatpush1.msra.mxu0 0.0
    %2169 = vmatprep.subr.mxu0 0.0
    %2170 = vmatpush1.msra.mxu0 0.0
    %2171 = vmatprep.subr.mxu0 0.0
    %2172 = vmatpush1.msra.mxu0 0.0
    %2173 = vmatprep.subr.mxu0 0.0
    %2174 = vmatpush1.msra.mxu0 0.0
    %2175 = vmatprep.subr.mxu0 0.0
    %2176 = vmatpush1.msra.mxu0 0.0
    %2177 = vmatprep.subr.mxu0 0.0
    %2178 = vmatpush1.msra.mxu0 0.0
    %2179 = vmatprep.subr.mxu0 0.0
    %2180 = vmatpush1.msra.mxu0 0.0
    %2181 = vmatprep.subr.mxu0 0.0
    %2182 = vmatpush1.msra.mxu0 %v2153
    %2183 = vmatprep.subr.mxu0 0.0
    %2184 = vmatpush1.msra.mxu0 %v2152
    %2185 = vmatprep.subr.mxu0 0.0
    %2186 = vmatpush1.msra.mxu0 %v2151
    %2187 = vmatprep.subr.mxu0 0.0
    %2188 = vmatpush1.msra.mxu0 %v2150
    %2189 = vmatprep.subr.mxu0 0.0
    %2190 = vmatpush2.msra.mxu0 0.0
    %2191 = vmatprep.subr.mxu0 0.0
    %2192 = vmatpush2.msra.mxu0 0.0
    %2193 = vmatprep.subr.mxu0 0.0
    %2194 = vmatpush2.msra.mxu0 0.0
    %2195 = vmatprep.subr.mxu0 0.0
    %2196 = vmatpush2.msra.mxu0 0.0
    %2197 = vmatprep.subr.mxu0 0.0
    %2198 = vmatpush2.msra.mxu0 0.0
    %2199 = vmatprep.subr.mxu0 0.0
    %2200 = vmatpush2.msra.mxu0 0.0
    %2201 = vmatprep.subr.mxu0 0.0
    %2202 = vmatpush2.msra.mxu0 0.0
    %2203 = vmatprep.subr.mxu0 0.0
    %2204 = vmatpush2.msra.mxu0 0.0
    %2205 = vmatprep.subr.mxu0 0.0
    %2206 = vmatpush2.msra.mxu0 0.0
    %2207 = vmatprep.subr.mxu0 0.0
    %2208 = vmatpush2.msra.mxu0 0.0
    %2209 = vmatprep.subr.mxu0 0.0
    %2210 = vmatpush2.msra.mxu0 0.0
    %2211 = vmatprep.subr.mxu0 0.0
    %2212 = vmatpush2.msra.mxu0 0.0
    %2213 = vmatprep.subr.mxu0 0.0
    %2214 = vmatpush2.msra.mxu0 0.0
    %2215 = vmatprep.subr.mxu0 0.0
    %2216 = vmatpush2.msra.mxu0 0.0
    %2217 = vmatprep.subr.mxu0 0.0
    %2218 = vmatpush2.msra.mxu0 0.0
    %2219 = vmatprep.subr.mxu0 0.0
    %2220 = vmatpush2.msra.mxu0 0.0
    %2221 = vmatprep.mubr.f32.mxu0 0.0
    %2222 = vmatmul.mubr.f32.gmra.mxu0 %v2155
    %v2223 = vpop.f32.mrf.mxu0
    %v2224 = vadd.f32 0.0, %v2223
    %v2225 = vpop.f32.mrf.mxu0
    %2226 = vdwg.mxu0
    %v2227 = vsel %vm188, %v2224, 0.0
    %v2228 = vrot.slane %v2227, 4
    %v2229 = vadd.f32 %v2227, %v2228
    %v2230 = vrot.slane %v2229, 2
    %v2231 = vadd.f32 %v2229, %v2230
    %v2232 = vrot.slane %v2231, 1
    %v2233 = vadd.f32 %v2231, %v2232
    %v2234 = vmul.f32 %v2233, %v316
    %v2235 = vsub.f32 %v2224, %v2234
    %v2236 = vmul.f32 %v2235, %v2235
    %v2237 = vsel %vm188, %v2236, 0.0
    %v2238 = vrot.slane %v2237, 4
    %v2239 = vadd.f32 %v2237, %v2238
    %v2240 = vrot.slane %v2239, 2
    %v2241 = vadd.f32 %v2239, %v2240
    %v2242 = vrot.slane %v2241, 1
    %v2243 = vadd.f32 %v2241, %v2242
    %v2244 = vmul.f32 %v2243, %v316
    %v2245 = vrsqrt.pop %v2244
    %v2246 = vmul.f32 %v2244, %v2245
    %vm2247 = vcmp.eq.f32.partialorder %v2244, inf
    %v2248 = vsel %vm2247, %v2244, %v2246
    %vm2249 = vcmp.eq.f32.partialorder %v2244, 0.0
    %v2250 = vand.u32 %v2244, 2147483648
    %v2251 = vsel %vm2249, %v2250, %v2248
    %v2252 = vadd.f32 %v2251, 1e-06
    %v2253 = vrcp.pop %v2252
    %v2254 = vmul.f32 %v2253, %v2235
    %v2255 = vmax.f32 %v2254, 0.0
    %s2256 = scalar_lea.vmem [#allocation9], 160
    %v2257 = vld [vmem:[%s2256] sm:$0xff]
    %v2258 = vld [vmem:[%s2256 + $0x8] sm:$0xff]
    %v2259 = vld [vmem:[%s2256 + $0x10] sm:$0xff]
    %v2260 = vld [vmem:[%s2256 + $0x18] sm:$0xff]
    %v2262 = vsel %vm188, %v2255, 0
    %2264 = vmatprep.subr.mxu0 0.0
    %2265 = vmatpush1.msra.mxu0 0.0
    %2266 = vmatprep.subr.mxu0 0.0
    %2267 = vmatpush1.msra.mxu0 0.0
    %2268 = vmatprep.subr.mxu0 0.0
    %2269 = vmatpush1.msra.mxu0 0.0
    %2270 = vmatprep.subr.mxu0 0.0
    %2271 = vmatpush1.msra.mxu0 0.0
    %2272 = vmatprep.subr.mxu0 0.0
    %2273 = vmatpush1.msra.mxu0 0.0
    %2274 = vmatprep.subr.mxu0 0.0
    %2275 = vmatpush1.msra.mxu0 0.0
    %2276 = vmatprep.subr.mxu0 0.0
    %2277 = vmatpush1.msra.mxu0 0.0
    %2278 = vmatprep.subr.mxu0 0.0
    %2279 = vmatpush1.msra.mxu0 0.0
    %2280 = vmatprep.subr.mxu0 0.0
    %2281 = vmatpush1.msra.mxu0 0.0
    %2282 = vmatprep.subr.mxu0 0.0
    %2283 = vmatpush1.msra.mxu0 0.0
    %2284 = vmatprep.subr.mxu0 0.0
    %2285 = vmatpush1.msra.mxu0 0.0
    %2286 = vmatprep.subr.mxu0 0.0
    %2287 = vmatpush1.msra.mxu0 0.0
    %2288 = vmatprep.subr.mxu0 0.0
    %2289 = vmatpush1.msra.mxu0 %v2260
    %2290 = vmatprep.subr.mxu0 0.0
    %2291 = vmatpush1.msra.mxu0 %v2259
    %2292 = vmatprep.subr.mxu0 0.0
    %2293 = vmatpush1.msra.mxu0 %v2258
    %2294 = vmatprep.subr.mxu0 0.0
    %2295 = vmatpush1.msra.mxu0 %v2257
    %2296 = vmatprep.subr.mxu0 0.0
    %2297 = vmatpush2.msra.mxu0 0.0
    %2298 = vmatprep.subr.mxu0 0.0
    %2299 = vmatpush2.msra.mxu0 0.0
    %2300 = vmatprep.subr.mxu0 0.0
    %2301 = vmatpush2.msra.mxu0 0.0
    %2302 = vmatprep.subr.mxu0 0.0
    %2303 = vmatpush2.msra.mxu0 0.0
    %2304 = vmatprep.subr.mxu0 0.0
    %2305 = vmatpush2.msra.mxu0 0.0
    %2306 = vmatprep.subr.mxu0 0.0
    %2307 = vmatpush2.msra.mxu0 0.0
    %2308 = vmatprep.subr.mxu0 0.0
    %2309 = vmatpush2.msra.mxu0 0.0
    %2310 = vmatprep.subr.mxu0 0.0
    %2311 = vmatpush2.msra.mxu0 0.0
    %2312 = vmatprep.subr.mxu0 0.0
    %2313 = vmatpush2.msra.mxu0 0.0
    %2314 = vmatprep.subr.mxu0 0.0
    %2315 = vmatpush2.msra.mxu0 0.0
    %2316 = vmatprep.subr.mxu0 0.0
    %2317 = vmatpush2.msra.mxu0 0.0
    %2318 = vmatprep.subr.mxu0 0.0
    %2319 = vmatpush2.msra.mxu0 0.0
    %2320 = vmatprep.subr.mxu0 0.0
    %2321 = vmatpush2.msra.mxu0 0.0
    %2322 = vmatprep.subr.mxu0 0.0
    %2323 = vmatpush2.msra.mxu0 0.0
    %2324 = vmatprep.subr.mxu0 0.0
    %2325 = vmatpush2.msra.mxu0 0.0
    %2326 = vmatprep.subr.mxu0 0.0
    %2327 = vmatpush2.msra.mxu0 0.0
    %2328 = vmatprep.mubr.f32.mxu0 0.0
    %2329 = vmatmul.mubr.f32.gmra.mxu0 %v2262
    %v2330 = vpop.f32.mrf.mxu0
    %v2331 = vadd.f32 0.0, %v2330
    %v2332 = vpop.f32.mrf.mxu0
    %2333 = vdwg.mxu0
    %v2334 = vsel %vm188, %v2331, 0.0
    %v2335 = vrot.slane %v2334, 4
    %v2336 = vadd.f32 %v2334, %v2335
    %v2337 = vrot.slane %v2336, 2
    %v2338 = vadd.f32 %v2336, %v2337
    %v2339 = vrot.slane %v2338, 1
    %v2340 = vadd.f32 %v2338, %v2339
    %v2341 = vmul.f32 %v2340, %v316
    %v2342 = vsub.f32 %v2331, %v2341
    %v2343 = vmul.f32 %v2342, %v2342
    %v2344 = vsel %vm188, %v2343, 0.0
    %v2345 = vrot.slane %v2344, 4
    %v2346 = vadd.f32 %v2344, %v2345
    %v2347 = vrot.slane %v2346, 2
    %v2348 = vadd.f32 %v2346, %v2347
    %v2349 = vrot.slane %v2348, 1
    %v2350 = vadd.f32 %v2348, %v2349
    %v2351 = vmul.f32 %v2350, %v316
    %v2352 = vrsqrt.pop %v2351
    %v2353 = vmul.f32 %v2351, %v2352
    %vm2354 = vcmp.eq.f32.partialorder %v2351, inf
    %v2355 = vsel %vm2354, %v2351, %v2353
    %vm2356 = vcmp.eq.f32.partialorder %v2351, 0.0
    %v2357 = vand.u32 %v2351, 2147483648
    %v2358 = vsel %vm2356, %v2357, %v2355
    %v2359 = vadd.f32 %v2358, 1e-06
    %v2360 = vrcp.pop %v2359
    %v2361 = vmul.f32 %v2360, %v2342
    %v2362 = vmax.f32 %v2361, 0.0
    %s2363 = scalar_lea.vmem [#allocation11], 160
    %v2364 = vld [vmem:[%s2363] sm:$0xff]
    %v2365 = vld [vmem:[%s2363 + $0x8] sm:$0xff]
    %v2366 = vld [vmem:[%s2363 + $0x10] sm:$0xff]
    %v2367 = vld [vmem:[%s2363 + $0x18] sm:$0xff]
    %s2368 = scalar_lea.vmem %s5, 5
    %v2369 = vld [vmem:[%s2368] sm:$0x1]
    %v2371 = vlaneseq
    %v2372 = vshrl.u32 %v2371, 7
    %v2373 = vsub.s32 0, %v2372
    %v2374 = vrot.slane %v2369, %v2373
    %v2377 = vsel %vm188, %v2362, 0
    %2379 = vmatprep.subr.mxu0 0.0
    %2380 = vmatpush1.msra.mxu0 0.0
    %2381 = vmatprep.subr.mxu0 0.0
    %2382 = vmatpush1.msra.mxu0 0.0
    %2383 = vmatprep.subr.mxu0 0.0
    %2384 = vmatpush1.msra.mxu0 0.0
    %2385 = vmatprep.subr.mxu0 0.0
    %2386 = vmatpush1.msra.mxu0 0.0
    %2387 = vmatprep.subr.mxu0 0.0
    %2388 = vmatpush1.msra.mxu0 0.0
    %2389 = vmatprep.subr.mxu0 0.0
    %2390 = vmatpush1.msra.mxu0 0.0
    %2391 = vmatprep.subr.mxu0 0.0
    %2392 = vmatpush1.msra.mxu0 0.0
    %2393 = vmatprep.subr.mxu0 0.0
    %2394 = vmatpush1.msra.mxu0 0.0
    %2395 = vmatprep.subr.mxu0 0.0
    %2396 = vmatpush1.msra.mxu0 0.0
    %2397 = vmatprep.subr.mxu0 0.0
    %2398 = vmatpush1.msra.mxu0 0.0
    %2399 = vmatprep.subr.mxu0 0.0
    %2400 = vmatpush1.msra.mxu0 0.0
    %2401 = vmatprep.subr.mxu0 0.0
    %2402 = vmatpush1.msra.mxu0 0.0
    %2403 = vmatprep.subr.mxu0 0.0
    %2404 = vmatpush1.msra.mxu0 %v2367
    %2405 = vmatprep.subr.mxu0 0.0
    %2406 = vmatpush1.msra.mxu0 %v2366
    %2407 = vmatprep.subr.mxu0 0.0
    %2408 = vmatpush1.msra.mxu0 %v2365
    %2409 = vmatprep.subr.mxu0 0.0
    %2410 = vmatpush1.msra.mxu0 %v2364
    %2411 = vmatprep.subr.mxu0 0.0
    %2412 = vmatpush2.msra.mxu0 0.0
    %2413 = vmatprep.subr.mxu0 0.0
    %2414 = vmatpush2.msra.mxu0 0.0
    %2415 = vmatprep.subr.mxu0 0.0
    %2416 = vmatpush2.msra.mxu0 0.0
    %2417 = vmatprep.subr.mxu0 0.0
    %2418 = vmatpush2.msra.mxu0 0.0
    %2419 = vmatprep.subr.mxu0 0.0
    %2420 = vmatpush2.msra.mxu0 0.0
    %2421 = vmatprep.subr.mxu0 0.0
    %2422 = vmatpush2.msra.mxu0 0.0
    %2423 = vmatprep.subr.mxu0 0.0
    %2424 = vmatpush2.msra.mxu0 0.0
    %2425 = vmatprep.subr.mxu0 0.0
    %2426 = vmatpush2.msra.mxu0 0.0
    %2427 = vmatprep.subr.mxu0 0.0
    %2428 = vmatpush2.msra.mxu0 0.0
    %2429 = vmatprep.subr.mxu0 0.0
    %2430 = vmatpush2.msra.mxu0 0.0
    %2431 = vmatprep.subr.mxu0 0.0
    %2432 = vmatpush2.msra.mxu0 0.0
    %2433 = vmatprep.subr.mxu0 0.0
    %2434 = vmatpush2.msra.mxu0 0.0
    %2435 = vmatprep.subr.mxu0 0.0
    %2436 = vmatpush2.msra.mxu0 0.0
    %2437 = vmatprep.subr.mxu0 0.0
    %2438 = vmatpush2.msra.mxu0 0.0
    %2439 = vmatprep.subr.mxu0 0.0
    %2440 = vmatpush2.msra.mxu0 0.0
    %2441 = vmatprep.subr.mxu0 0.0
    %2442 = vmatpush2.msra.mxu0 0.0
    %2443 = vmatprep.mubr.f32.mxu0 0.0
    %2444 = vmatmul.mubr.f32.gmra.mxu0 %v2377
    %v2445 = vpop.f32.mrf.mxu0
    %v2446 = vadd.f32 %v2374, %v2445
    %v2447 = vpop.f32.mrf.mxu0
    %2448 = vdwg.mxu0
    %v2449 = vadd.f32 %v2148, %v2446
    %vm2450 = vcmp.lt.s32.totalorder %v278, 24
    %vm2451 = vmand %vm1407, %vm2450
    %v2452 = vsel %vm188, %v2449, 0.0
    %v2453 = vrot.slane %v2452, 4
    %v2454 = vadd.f32 %v2452, %v2453
    %v2455 = vrot.slane %v2454, 2
    %v2456 = vadd.f32 %v2454, %v2455
    %v2457 = vrot.slane %v2456, 1
    %v2458 = vadd.f32 %v2456, %v2457
    %v2459 = vmul.f32 %v2458, %v316
    %v2460 = vsub.f32 %v2449, %v2459
    %v2461 = vmul.f32 %v2460, %v2460
    %v2462 = vsel %vm188, %v2461, 0.0
    %v2463 = vrot.slane %v2462, 4
    %v2464 = vadd.f32 %v2462, %v2463
    %v2465 = vrot.slane %v2464, 2
    %v2466 = vadd.f32 %v2464, %v2465
    %v2467 = vrot.slane %v2466, 1
    %v2468 = vadd.f32 %v2466, %v2467
    %v2469 = vmul.f32 %v2468, %v316
    %v2470 = vrsqrt.pop %v2469
    %v2471 = vmul.f32 %v2469, %v2470
    %vm2472 = vcmp.eq.f32.partialorder %v2469, inf
    %v2473 = vsel %vm2472, %v2469, %v2471
    %vm2474 = vcmp.eq.f32.partialorder %v2469, 0.0
    %v2475 = vand.u32 %v2469, 2147483648
    %v2476 = vsel %vm2474, %v2475, %v2473
    %v2477 = vadd.f32 %v2476, 1e-06
    %v2478 = vrcp.pop %v2477
    %v2479 = vlog2.pop %v2477
    %v2480 = vmul.f32 %v2479, 0.6931472
    %v2481 = vsub.f32 0.0, %v2480
    %v2482 = vsel %vm2451, %v2481, 0.0
    %v2483 = vsel %vm381, %v2482, 0.0
    %2484 = vadd.xlane.f32.xlu0 %v2483
    %v2485 = vpop.xlane.xlu0 %2484
    %v2486 = vrot.slane %v2485, 4
    %v2487 = vadd.f32 %v2485, %v2486
    %v2488 = vrot.slane %v2487, 2
    %v2489 = vadd.f32 %v2487, %v2488
    %v2490 = vrot.slane %v2489, 1
    %v2491 = vadd.f32 %v2489, %v2490
    %s2492 = vtos %v2491
    %v2493 = vstv %s2492
    %v2494 = vadd.f32 %v2146, %v2493
    %v2495 = vmul.f32 %v2478, %v2460
    %v2496 = vsel %vm2451, 1, 0
    %vm2497 = vcmp.eq.s32.totalorder %v2496, 1
    %v2498 = vsel %vm2497, %v2495, %v2449
    %s2499 = scalar_lea.vmem [#allocation8], 192
    %v2500 = vld [vmem:[%s2499] sm:$0xff]
    %v2501 = vld [vmem:[%s2499 + $0x8] sm:$0xff]
    %v2502 = vld [vmem:[%s2499 + $0x10] sm:$0xff]
    %v2503 = vld [vmem:[%s2499 + $0x18] sm:$0xff]
    %v2505 = vsel %vm188, %v2498, 0
    %2507 = vmatprep.subr.mxu0 0.0
    %2508 = vmatpush1.msra.mxu0 0.0
    %2509 = vmatprep.subr.mxu0 0.0
    %2510 = vmatpush1.msra.mxu0 0.0
    %2511 = vmatprep.subr.mxu0 0.0
    %2512 = vmatpush1.msra.mxu0 0.0
    %2513 = vmatprep.subr.mxu0 0.0
    %2514 = vmatpush1.msra.mxu0 0.0
    %2515 = vmatprep.subr.mxu0 0.0
    %2516 = vmatpush1.msra.mxu0 0.0
    %2517 = vmatprep.subr.mxu0 0.0
    %2518 = vmatpush1.msra.mxu0 0.0
    %2519 = vmatprep.subr.mxu0 0.0
    %2520 = vmatpush1.msra.mxu0 0.0
    %2521 = vmatprep.subr.mxu0 0.0
    %2522 = vmatpush1.msra.mxu0 0.0
    %2523 = vmatprep.subr.mxu0 0.0
    %2524 = vmatpush1.msra.mxu0 0.0
    %2525 = vmatprep.subr.mxu0 0.0
    %2526 = vmatpush1.msra.mxu0 0.0
    %2527 = vmatprep.subr.mxu0 0.0
    %2528 = vmatpush1.msra.mxu0 0.0
    %2529 = vmatprep.subr.mxu0 0.0
    %2530 = vmatpush1.msra.mxu0 0.0
    %2531 = vmatprep.subr.mxu0 0.0
    %2532 = vmatpush1.msra.mxu0 %v2503
    %2533 = vmatprep.subr.mxu0 0.0
    %2534 = vmatpush1.msra.mxu0 %v2502
    %2535 = vmatprep.subr.mxu0 0.0
    %2536 = vmatpush1.msra.mxu0 %v2501
    %2537 = vmatprep.subr.mxu0 0.0
    %2538 = vmatpush1.msra.mxu0 %v2500
    %2539 = vmatprep.subr.mxu0 0.0
    %2540 = vmatpush2.msra.mxu0 0.0
    %2541 = vmatprep.subr.mxu0 0.0
    %2542 = vmatpush2.msra.mxu0 0.0
    %2543 = vmatprep.subr.mxu0 0.0
    %2544 = vmatpush2.msra.mxu0 0.0
    %2545 = vmatprep.subr.mxu0 0.0
    %2546 = vmatpush2.msra.mxu0 0.0
    %2547 = vmatprep.subr.mxu0 0.0
    %2548 = vmatpush2.msra.mxu0 0.0
    %2549 = vmatprep.subr.mxu0 0.0
    %2550 = vmatpush2.msra.mxu0 0.0
    %2551 = vmatprep.subr.mxu0 0.0
    %2552 = vmatpush2.msra.mxu0 0.0
    %2553 = vmatprep.subr.mxu0 0.0
    %2554 = vmatpush2.msra.mxu0 0.0
    %2555 = vmatprep.subr.mxu0 0.0
    %2556 = vmatpush2.msra.mxu0 0.0
    %2557 = vmatprep.subr.mxu0 0.0
    %2558 = vmatpush2.msra.mxu0 0.0
    %2559 = vmatprep.subr.mxu0 0.0
    %2560 = vmatpush2.msra.mxu0 0.0
    %2561 = vmatprep.subr.mxu0 0.0
    %2562 = vmatpush2.msra.mxu0 0.0
    %2563 = vmatprep.subr.mxu0 0.0
    %2564 = vmatpush2.msra.mxu0 0.0
    %2565 = vmatprep.subr.mxu0 0.0
    %2566 = vmatpush2.msra.mxu0 0.0
    %2567 = vmatprep.subr.mxu0 0.0
    %2568 = vmatpush2.msra.mxu0 0.0
    %2569 = vmatprep.subr.mxu0 0.0
    %2570 = vmatpush2.msra.mxu0 0.0
    %2571 = vmatprep.mubr.f32.mxu0 0.0
    %2572 = vmatmul.mubr.f32.gmra.mxu0 %v2505
    %v2573 = vpop.f32.mrf.mxu0
    %v2574 = vadd.f32 0.0, %v2573
    %v2575 = vpop.f32.mrf.mxu0
    %2576 = vdwg.mxu0
    %v2577 = vsel %vm188, %v2574, 0.0
    %v2578 = vrot.slane %v2577, 4
    %v2579 = vadd.f32 %v2577, %v2578
    %v2580 = vrot.slane %v2579, 2
    %v2581 = vadd.f32 %v2579, %v2580
    %v2582 = vrot.slane %v2581, 1
    %v2583 = vadd.f32 %v2581, %v2582
    %v2584 = vmul.f32 %v2583, %v316
    %v2585 = vsub.f32 %v2574, %v2584
    %v2586 = vmul.f32 %v2585, %v2585
    %v2587 = vsel %vm188, %v2586, 0.0
    %v2588 = vrot.slane %v2587, 4
    %v2589 = vadd.f32 %v2587, %v2588
    %v2590 = vrot.slane %v2589, 2
    %v2591 = vadd.f32 %v2589, %v2590
    %v2592 = vrot.slane %v2591, 1
    %v2593 = vadd.f32 %v2591, %v2592
    %v2594 = vmul.f32 %v2593, %v316
    %v2595 = vrsqrt.pop %v2594
    %v2596 = vmul.f32 %v2594, %v2595
    %vm2597 = vcmp.eq.f32.partialorder %v2594, inf
    %v2598 = vsel %vm2597, %v2594, %v2596
    %vm2599 = vcmp.eq.f32.partialorder %v2594, 0.0
    %v2600 = vand.u32 %v2594, 2147483648
    %v2601 = vsel %vm2599, %v2600, %v2598
    %v2602 = vadd.f32 %v2601, 1e-06
    %v2603 = vrcp.pop %v2602
    %v2604 = vmul.f32 %v2603, %v2585
    %v2605 = vmax.f32 %v2604, 0.0
    %s2606 = scalar_lea.vmem [#allocation9], 192
    %v2607 = vld [vmem:[%s2606] sm:$0xff]
    %v2608 = vld [vmem:[%s2606 + $0x8] sm:$0xff]
    %v2609 = vld [vmem:[%s2606 + $0x10] sm:$0xff]
    %v2610 = vld [vmem:[%s2606 + $0x18] sm:$0xff]
    %v2612 = vsel %vm188, %v2605, 0
    %2614 = vmatprep.subr.mxu0 0.0
    %2615 = vmatpush1.msra.mxu0 0.0
    %2616 = vmatprep.subr.mxu0 0.0
    %2617 = vmatpush1.msra.mxu0 0.0
    %2618 = vmatprep.subr.mxu0 0.0
    %2619 = vmatpush1.msra.mxu0 0.0
    %2620 = vmatprep.subr.mxu0 0.0
    %2621 = vmatpush1.msra.mxu0 0.0
    %2622 = vmatprep.subr.mxu0 0.0
    %2623 = vmatpush1.msra.mxu0 0.0
    %2624 = vmatprep.subr.mxu0 0.0
    %2625 = vmatpush1.msra.mxu0 0.0
    %2626 = vmatprep.subr.mxu0 0.0
    %2627 = vmatpush1.msra.mxu0 0.0
    %2628 = vmatprep.subr.mxu0 0.0
    %2629 = vmatpush1.msra.mxu0 0.0
    %2630 = vmatprep.subr.mxu0 0.0
    %2631 = vmatpush1.msra.mxu0 0.0
    %2632 = vmatprep.subr.mxu0 0.0
    %2633 = vmatpush1.msra.mxu0 0.0
    %2634 = vmatprep.subr.mxu0 0.0
    %2635 = vmatpush1.msra.mxu0 0.0
    %2636 = vmatprep.subr.mxu0 0.0
    %2637 = vmatpush1.msra.mxu0 0.0
    %2638 = vmatprep.subr.mxu0 0.0
    %2639 = vmatpush1.msra.mxu0 %v2610
    %2640 = vmatprep.subr.mxu0 0.0
    %2641 = vmatpush1.msra.mxu0 %v2609
    %2642 = vmatprep.subr.mxu0 0.0
    %2643 = vmatpush1.msra.mxu0 %v2608
    %2644 = vmatprep.subr.mxu0 0.0
    %2645 = vmatpush1.msra.mxu0 %v2607
    %2646 = vmatprep.subr.mxu0 0.0
    %2647 = vmatpush2.msra.mxu0 0.0
    %2648 = vmatprep.subr.mxu0 0.0
    %2649 = vmatpush2.msra.mxu0 0.0
    %2650 = vmatprep.subr.mxu0 0.0
    %2651 = vmatpush2.msra.mxu0 0.0
    %2652 = vmatprep.subr.mxu0 0.0
    %2653 = vmatpush2.msra.mxu0 0.0
    %2654 = vmatprep.subr.mxu0 0.0
    %2655 = vmatpush2.msra.mxu0 0.0
    %2656 = vmatprep.subr.mxu0 0.0
    %2657 = vmatpush2.msra.mxu0 0.0
    %2658 = vmatprep.subr.mxu0 0.0
    %2659 = vmatpush2.msra.mxu0 0.0
    %2660 = vmatprep.subr.mxu0 0.0
    %2661 = vmatpush2.msra.mxu0 0.0
    %2662 = vmatprep.subr.mxu0 0.0
    %2663 = vmatpush2.msra.mxu0 0.0
    %2664 = vmatprep.subr.mxu0 0.0
    %2665 = vmatpush2.msra.mxu0 0.0
    %2666 = vmatprep.subr.mxu0 0.0
    %2667 = vmatpush2.msra.mxu0 0.0
    %2668 = vmatprep.subr.mxu0 0.0
    %2669 = vmatpush2.msra.mxu0 0.0
    %2670 = vmatprep.subr.mxu0 0.0
    %2671 = vmatpush2.msra.mxu0 0.0
    %2672 = vmatprep.subr.mxu0 0.0
    %2673 = vmatpush2.msra.mxu0 0.0
    %2674 = vmatprep.subr.mxu0 0.0
    %2675 = vmatpush2.msra.mxu0 0.0
    %2676 = vmatprep.subr.mxu0 0.0
    %2677 = vmatpush2.msra.mxu0 0.0
    %2678 = vmatprep.mubr.f32.mxu0 0.0
    %2679 = vmatmul.mubr.f32.gmra.mxu0 %v2612
    %v2680 = vpop.f32.mrf.mxu0
    %v2681 = vadd.f32 0.0, %v2680
    %v2682 = vpop.f32.mrf.mxu0
    %2683 = vdwg.mxu0
    %v2684 = vsel %vm188, %v2681, 0.0
    %v2685 = vrot.slane %v2684, 4
    %v2686 = vadd.f32 %v2684, %v2685
    %v2687 = vrot.slane %v2686, 2
    %v2688 = vadd.f32 %v2686, %v2687
    %v2689 = vrot.slane %v2688, 1
    %v2690 = vadd.f32 %v2688, %v2689
    %v2691 = vmul.f32 %v2690, %v316
    %v2692 = vsub.f32 %v2681, %v2691
    %v2693 = vmul.f32 %v2692, %v2692
    %v2694 = vsel %vm188, %v2693, 0.0
    %v2695 = vrot.slane %v2694, 4
    %v2696 = vadd.f32 %v2694, %v2695
    %v2697 = vrot.slane %v2696, 2
    %v2698 = vadd.f32 %v2696, %v2697
    %v2699 = vrot.slane %v2698, 1
    %v2700 = vadd.f32 %v2698, %v2699
    %v2701 = vmul.f32 %v2700, %v316
    %v2702 = vrsqrt.pop %v2701
    %v2703 = vmul.f32 %v2701, %v2702
    %vm2704 = vcmp.eq.f32.partialorder %v2701, inf
    %v2705 = vsel %vm2704, %v2701, %v2703
    %vm2706 = vcmp.eq.f32.partialorder %v2701, 0.0
    %v2707 = vand.u32 %v2701, 2147483648
    %v2708 = vsel %vm2706, %v2707, %v2705
    %v2709 = vadd.f32 %v2708, 1e-06
    %v2710 = vrcp.pop %v2709
    %v2711 = vmul.f32 %v2710, %v2692
    %v2712 = vmax.f32 %v2711, 0.0
    %s2713 = scalar_lea.vmem [#allocation11], 192
    %v2714 = vld [vmem:[%s2713] sm:$0xff]
    %v2715 = vld [vmem:[%s2713 + $0x8] sm:$0xff]
    %v2716 = vld [vmem:[%s2713 + $0x10] sm:$0xff]
    %v2717 = vld [vmem:[%s2713 + $0x18] sm:$0xff]
    %s2718 = scalar_lea.vmem %s5, 6
    %v2719 = vld [vmem:[%s2718] sm:$0x1]
    %v2721 = vlaneseq
    %v2722 = vshrl.u32 %v2721, 7
    %v2723 = vsub.s32 0, %v2722
    %v2724 = vrot.slane %v2719, %v2723
    %v2727 = vsel %vm188, %v2712, 0
    %2729 = vmatprep.subr.mxu0 0.0
    %2730 = vmatpush1.msra.mxu0 0.0
    %2731 = vmatprep.subr.mxu0 0.0
    %2732 = vmatpush1.msra.mxu0 0.0
    %2733 = vmatprep.subr.mxu0 0.0
    %2734 = vmatpush1.msra.mxu0 0.0
    %2735 = vmatprep.subr.mxu0 0.0
    %2736 = vmatpush1.msra.mxu0 0.0
    %2737 = vmatprep.subr.mxu0 0.0
    %2738 = vmatpush1.msra.mxu0 0.0
    %2739 = vmatprep.subr.mxu0 0.0
    %2740 = vmatpush1.msra.mxu0 0.0
    %2741 = vmatprep.subr.mxu0 0.0
    %2742 = vmatpush1.msra.mxu0 0.0
    %2743 = vmatprep.subr.mxu0 0.0
    %2744 = vmatpush1.msra.mxu0 0.0
    %2745 = vmatprep.subr.mxu0 0.0
    %2746 = vmatpush1.msra.mxu0 0.0
    %2747 = vmatprep.subr.mxu0 0.0
    %2748 = vmatpush1.msra.mxu0 0.0
    %2749 = vmatprep.subr.mxu0 0.0
    %2750 = vmatpush1.msra.mxu0 0.0
    %2751 = vmatprep.subr.mxu0 0.0
    %2752 = vmatpush1.msra.mxu0 0.0
    %2753 = vmatprep.subr.mxu0 0.0
    %2754 = vmatpush1.msra.mxu0 %v2717
    %2755 = vmatprep.subr.mxu0 0.0
    %2756 = vmatpush1.msra.mxu0 %v2716
    %2757 = vmatprep.subr.mxu0 0.0
    %2758 = vmatpush1.msra.mxu0 %v2715
    %2759 = vmatprep.subr.mxu0 0.0
    %2760 = vmatpush1.msra.mxu0 %v2714
    %2761 = vmatprep.subr.mxu0 0.0
    %2762 = vmatpush2.msra.mxu0 0.0
    %2763 = vmatprep.subr.mxu0 0.0
    %2764 = vmatpush2.msra.mxu0 0.0
    %2765 = vmatprep.subr.mxu0 0.0
    %2766 = vmatpush2.msra.mxu0 0.0
    %2767 = vmatprep.subr.mxu0 0.0
    %2768 = vmatpush2.msra.mxu0 0.0
    %2769 = vmatprep.subr.mxu0 0.0
    %2770 = vmatpush2.msra.mxu0 0.0
    %2771 = vmatprep.subr.mxu0 0.0
    %2772 = vmatpush2.msra.mxu0 0.0
    %2773 = vmatprep.subr.mxu0 0.0
    %2774 = vmatpush2.msra.mxu0 0.0
    %2775 = vmatprep.subr.mxu0 0.0
    %2776 = vmatpush2.msra.mxu0 0.0
    %2777 = vmatprep.subr.mxu0 0.0
    %2778 = vmatpush2.msra.mxu0 0.0
    %2779 = vmatprep.subr.mxu0 0.0
    %2780 = vmatpush2.msra.mxu0 0.0
    %2781 = vmatprep.subr.mxu0 0.0
    %2782 = vmatpush2.msra.mxu0 0.0
    %2783 = vmatprep.subr.mxu0 0.0
    %2784 = vmatpush2.msra.mxu0 0.0
    %2785 = vmatprep.subr.mxu0 0.0
    %2786 = vmatpush2.msra.mxu0 0.0
    %2787 = vmatprep.subr.mxu0 0.0
    %2788 = vmatpush2.msra.mxu0 0.0
    %2789 = vmatprep.subr.mxu0 0.0
    %2790 = vmatpush2.msra.mxu0 0.0
    %2791 = vmatprep.subr.mxu0 0.0
    %2792 = vmatpush2.msra.mxu0 0.0
    %2793 = vmatprep.mubr.f32.mxu0 0.0
    %2794 = vmatmul.mubr.f32.gmra.mxu0 %v2727
    %v2795 = vpop.f32.mrf.mxu0
    %v2796 = vadd.f32 %v2724, %v2795
    %v2797 = vpop.f32.mrf.mxu0
    %2798 = vdwg.mxu0
    %v2799 = vadd.f32 %v2498, %v2796
    %v2800 = vsel %vm188, %v2799, 0.0
    %v2801 = vrot.slane %v2800, 4
    %v2802 = vadd.f32 %v2800, %v2801
    %v2803 = vrot.slane %v2802, 2
    %v2804 = vadd.f32 %v2802, %v2803
    %v2805 = vrot.slane %v2804, 1
    %v2806 = vadd.f32 %v2804, %v2805
    %v2807 = vmul.f32 %v2806, %v316
    %v2808 = vsub.f32 %v2799, %v2807
    %v2809 = vmul.f32 %v2808, %v2808
    %v2810 = vsel %vm188, %v2809, 0.0
    %v2811 = vrot.slane %v2810, 4
    %v2812 = vadd.f32 %v2810, %v2811
    %v2813 = vrot.slane %v2812, 2
    %v2814 = vadd.f32 %v2812, %v2813
    %v2815 = vrot.slane %v2814, 1
    %v2816 = vadd.f32 %v2814, %v2815
    %v2817 = vmul.f32 %v2816, %v316
    %v2818 = vrsqrt.pop %v2817
    %v2819 = vmul.f32 %v2817, %v2818
    %vm2820 = vcmp.eq.f32.partialorder %v2817, inf
    %v2821 = vsel %vm2820, %v2817, %v2819
    %vm2822 = vcmp.eq.f32.partialorder %v2817, 0.0
    %v2823 = vand.u32 %v2817, 2147483648
    %v2824 = vsel %vm2822, %v2823, %v2821
    %v2825 = vadd.f32 %v2824, 1e-06
    %v2826 = vrcp.pop %v2825
    %v2827 = vlog2.pop %v2825
    %v2828 = vmul.f32 %v2827, 0.6931472
    %v2829 = vsub.f32 0.0, %v2828
    %v2830 = vsel %vm2451, %v2829, 0.0
    %v2831 = vsel %vm381, %v2830, 0.0
    %2832 = vadd.xlane.f32.xlu0 %v2831
    %v2833 = vpop.xlane.xlu0 %2832
    %v2834 = vrot.slane %v2833, 4
    %v2835 = vadd.f32 %v2833, %v2834
    %v2836 = vrot.slane %v2835, 2
    %v2837 = vadd.f32 %v2835, %v2836
    %v2838 = vrot.slane %v2837, 1
    %v2839 = vadd.f32 %v2837, %v2838
    %s2840 = vtos %v2839
    %v2841 = vstv %s2840
    %v2842 = vadd.f32 %v2494, %v2841
    %v2843 = vmul.f32 %v2826, %v2808
    %v2844 = vsel %vm2497, %v2843, %v2799
    %s2845 = scalar_lea.vmem [#allocation8], 224
    %v2846 = vld [vmem:[%s2845] sm:$0xff]
    %v2847 = vld [vmem:[%s2845 + $0x8] sm:$0xff]
    %v2848 = vld [vmem:[%s2845 + $0x10] sm:$0xff]
    %v2849 = vld [vmem:[%s2845 + $0x18] sm:$0xff]
    %v2851 = vsel %vm188, %v2844, 0
    %2853 = vmatprep.subr.mxu0 0.0
    %2854 = vmatpush1.msra.mxu0 0.0
    %2855 = vmatprep.subr.mxu0 0.0
    %2856 = vmatpush1.msra.mxu0 0.0
    %2857 = vmatprep.subr.mxu0 0.0
    %2858 = vmatpush1.msra.mxu0 0.0
    %2859 = vmatprep.subr.mxu0 0.0
    %2860 = vmatpush1.msra.mxu0 0.0
    %2861 = vmatprep.subr.mxu0 0.0
    %2862 = vmatpush1.msra.mxu0 0.0
    %2863 = vmatprep.subr.mxu0 0.0
    %2864 = vmatpush1.msra.mxu0 0.0
    %2865 = vmatprep.subr.mxu0 0.0
    %2866 = vmatpush1.msra.mxu0 0.0
    %2867 = vmatprep.subr.mxu0 0.0
    %2868 = vmatpush1.msra.mxu0 0.0
    %2869 = vmatprep.subr.mxu0 0.0
    %2870 = vmatpush1.msra.mxu0 0.0
    %2871 = vmatprep.subr.mxu0 0.0
    %2872 = vmatpush1.msra.mxu0 0.0
    %2873 = vmatprep.subr.mxu0 0.0
    %2874 = vmatpush1.msra.mxu0 0.0
    %2875 = vmatprep.subr.mxu0 0.0
    %2876 = vmatpush1.msra.mxu0 0.0
    %2877 = vmatprep.subr.mxu0 0.0
    %2878 = vmatpush1.msra.mxu0 %v2849
    %2879 = vmatprep.subr.mxu0 0.0
    %2880 = vmatpush1.msra.mxu0 %v2848
    %2881 = vmatprep.subr.mxu0 0.0
    %2882 = vmatpush1.msra.mxu0 %v2847
    %2883 = vmatprep.subr.mxu0 0.0
    %2884 = vmatpush1.msra.mxu0 %v2846
    %2885 = vmatprep.subr.mxu0 0.0
    %2886 = vmatpush2.msra.mxu0 0.0
    %2887 = vmatprep.subr.mxu0 0.0
    %2888 = vmatpush2.msra.mxu0 0.0
    %2889 = vmatprep.subr.mxu0 0.0
    %2890 = vmatpush2.msra.mxu0 0.0
    %2891 = vmatprep.subr.mxu0 0.0
    %2892 = vmatpush2.msra.mxu0 0.0
    %2893 = vmatprep.subr.mxu0 0.0
    %2894 = vmatpush2.msra.mxu0 0.0
    %2895 = vmatprep.subr.mxu0 0.0
    %2896 = vmatpush2.msra.mxu0 0.0
    %2897 = vmatprep.subr.mxu0 0.0
    %2898 = vmatpush2.msra.mxu0 0.0
    %2899 = vmatprep.subr.mxu0 0.0
    %2900 = vmatpush2.msra.mxu0 0.0
    %2901 = vmatprep.subr.mxu0 0.0
    %2902 = vmatpush2.msra.mxu0 0.0
    %2903 = vmatprep.subr.mxu0 0.0
    %2904 = vmatpush2.msra.mxu0 0.0
    %2905 = vmatprep.subr.mxu0 0.0
    %2906 = vmatpush2.msra.mxu0 0.0
    %2907 = vmatprep.subr.mxu0 0.0
    %2908 = vmatpush2.msra.mxu0 0.0
    %2909 = vmatprep.subr.mxu0 0.0
    %2910 = vmatpush2.msra.mxu0 0.0
    %2911 = vmatprep.subr.mxu0 0.0
    %2912 = vmatpush2.msra.mxu0 0.0
    %2913 = vmatprep.subr.mxu0 0.0
    %2914 = vmatpush2.msra.mxu0 0.0
    %2915 = vmatprep.subr.mxu0 0.0
    %2916 = vmatpush2.msra.mxu0 0.0
    %2917 = vmatprep.mubr.f32.mxu0 0.0
    %2918 = vmatmul.mubr.f32.gmra.mxu0 %v2851
    %v2919 = vpop.f32.mrf.mxu0
    %v2920 = vadd.f32 0.0, %v2919
    %v2921 = vpop.f32.mrf.mxu0
    %2922 = vdwg.mxu0
    %v2923 = vsel %vm188, %v2920, 0.0
    %v2924 = vrot.slane %v2923, 4
    %v2925 = vadd.f32 %v2923, %v2924
    %v2926 = vrot.slane %v2925, 2
    %v2927 = vadd.f32 %v2925, %v2926
    %v2928 = vrot.slane %v2927, 1
    %v2929 = vadd.f32 %v2927, %v2928
    %v2930 = vmul.f32 %v2929, %v316
    %v2931 = vsub.f32 %v2920, %v2930
    %v2932 = vmul.f32 %v2931, %v2931
    %v2933 = vsel %vm188, %v2932, 0.0
    %v2934 = vrot.slane %v2933, 4
    %v2935 = vadd.f32 %v2933, %v2934
    %v2936 = vrot.slane %v2935, 2
    %v2937 = vadd.f32 %v2935, %v2936
    %v2938 = vrot.slane %v2937, 1
    %v2939 = vadd.f32 %v2937, %v2938
    %v2940 = vmul.f32 %v2939, %v316
    %v2941 = vrsqrt.pop %v2940
    %v2942 = vmul.f32 %v2940, %v2941
    %vm2943 = vcmp.eq.f32.partialorder %v2940, inf
    %v2944 = vsel %vm2943, %v2940, %v2942
    %vm2945 = vcmp.eq.f32.partialorder %v2940, 0.0
    %v2946 = vand.u32 %v2940, 2147483648
    %v2947 = vsel %vm2945, %v2946, %v2944
    %v2948 = vadd.f32 %v2947, 1e-06
    %v2949 = vrcp.pop %v2948
    %v2950 = vmul.f32 %v2949, %v2931
    %v2951 = vmax.f32 %v2950, 0.0
    %s2952 = scalar_lea.vmem [#allocation9], 224
    %v2953 = vld [vmem:[%s2952] sm:$0xff]
    %v2954 = vld [vmem:[%s2952 + $0x8] sm:$0xff]
    %v2955 = vld [vmem:[%s2952 + $0x10] sm:$0xff]
    %v2956 = vld [vmem:[%s2952 + $0x18] sm:$0xff]
    %v2958 = vsel %vm188, %v2951, 0
    %2960 = vmatprep.subr.mxu0 0.0
    %2961 = vmatpush1.msra.mxu0 0.0
    %2962 = vmatprep.subr.mxu0 0.0
    %2963 = vmatpush1.msra.mxu0 0.0
    %2964 = vmatprep.subr.mxu0 0.0
    %2965 = vmatpush1.msra.mxu0 0.0
    %2966 = vmatprep.subr.mxu0 0.0
    %2967 = vmatpush1.msra.mxu0 0.0
    %2968 = vmatprep.subr.mxu0 0.0
    %2969 = vmatpush1.msra.mxu0 0.0
    %2970 = vmatprep.subr.mxu0 0.0
    %2971 = vmatpush1.msra.mxu0 0.0
    %2972 = vmatprep.subr.mxu0 0.0
    %2973 = vmatpush1.msra.mxu0 0.0
    %2974 = vmatprep.subr.mxu0 0.0
    %2975 = vmatpush1.msra.mxu0 0.0
    %2976 = vmatprep.subr.mxu0 0.0
    %2977 = vmatpush1.msra.mxu0 0.0
    %2978 = vmatprep.subr.mxu0 0.0
    %2979 = vmatpush1.msra.mxu0 0.0
    %2980 = vmatprep.subr.mxu0 0.0
    %2981 = vmatpush1.msra.mxu0 0.0
    %2982 = vmatprep.subr.mxu0 0.0
    %2983 = vmatpush1.msra.mxu0 0.0
    %2984 = vmatprep.subr.mxu0 0.0
    %2985 = vmatpush1.msra.mxu0 %v2956
    %2986 = vmatprep.subr.mxu0 0.0
    %2987 = vmatpush1.msra.mxu0 %v2955
    %2988 = vmatprep.subr.mxu0 0.0
    %2989 = vmatpush1.msra.mxu0 %v2954
    %2990 = vmatprep.subr.mxu0 0.0
    %2991 = vmatpush1.msra.mxu0 %v2953
    %2992 = vmatprep.subr.mxu0 0.0
    %2993 = vmatpush2.msra.mxu0 0.0
    %2994 = vmatprep.subr.mxu0 0.0
    %2995 = vmatpush2.msra.mxu0 0.0
    %2996 = vmatprep.subr.mxu0 0.0
    %2997 = vmatpush2.msra.mxu0 0.0
    %2998 = vmatprep.subr.mxu0 0.0
    %2999 = vmatpush2.msra.mxu0 0.0
    %3000 = vmatprep.subr.mxu0 0.0
    %3001 = vmatpush2.msra.mxu0 0.0
    %3002 = vmatprep.subr.mxu0 0.0
    %3003 = vmatpush2.msra.mxu0 0.0
    %3004 = vmatprep.subr.mxu0 0.0
    %3005 = vmatpush2.msra.mxu0 0.0
    %3006 = vmatprep.subr.mxu0 0.0
    %3007 = vmatpush2.msra.mxu0 0.0
    %3008 = vmatprep.subr.mxu0 0.0
    %3009 = vmatpush2.msra.mxu0 0.0
    %3010 = vmatprep.subr.mxu0 0.0
    %3011 = vmatpush2.msra.mxu0 0.0
    %3012 = vmatprep.subr.mxu0 0.0
    %3013 = vmatpush2.msra.mxu0 0.0
    %3014 = vmatprep.subr.mxu0 0.0
    %3015 = vmatpush2.msra.mxu0 0.0
    %3016 = vmatprep.subr.mxu0 0.0
    %3017 = vmatpush2.msra.mxu0 0.0
    %3018 = vmatprep.subr.mxu0 0.0
    %3019 = vmatpush2.msra.mxu0 0.0
    %3020 = vmatprep.subr.mxu0 0.0
    %3021 = vmatpush2.msra.mxu0 0.0
    %3022 = vmatprep.subr.mxu0 0.0
    %3023 = vmatpush2.msra.mxu0 0.0
    %3024 = vmatprep.mubr.f32.mxu0 0.0
    %3025 = vmatmul.mubr.f32.gmra.mxu0 %v2958
    %v3026 = vpop.f32.mrf.mxu0
    %v3027 = vadd.f32 0.0, %v3026
    %v3028 = vpop.f32.mrf.mxu0
    %3029 = vdwg.mxu0
    %v3030 = vsel %vm188, %v3027, 0.0
    %v3031 = vrot.slane %v3030, 4
    %v3032 = vadd.f32 %v3030, %v3031
    %v3033 = vrot.slane %v3032, 2
    %v3034 = vadd.f32 %v3032, %v3033
    %v3035 = vrot.slane %v3034, 1
    %v3036 = vadd.f32 %v3034, %v3035
    %v3037 = vmul.f32 %v3036, %v316
    %v3038 = vsub.f32 %v3027, %v3037
    %v3039 = vmul.f32 %v3038, %v3038
    %v3040 = vsel %vm188, %v3039, 0.0
    %v3041 = vrot.slane %v3040, 4
    %v3042 = vadd.f32 %v3040, %v3041
    %v3043 = vrot.slane %v3042, 2
    %v3044 = vadd.f32 %v3042, %v3043
    %v3045 = vrot.slane %v3044, 1
    %v3046 = vadd.f32 %v3044, %v3045
    %v3047 = vmul.f32 %v3046, %v316
    %v3048 = vrsqrt.pop %v3047
    %v3049 = vmul.f32 %v3047, %v3048
    %vm3050 = vcmp.eq.f32.partialorder %v3047, inf
    %v3051 = vsel %vm3050, %v3047, %v3049
    %vm3052 = vcmp.eq.f32.partialorder %v3047, 0.0
    %v3053 = vand.u32 %v3047, 2147483648
    %v3054 = vsel %vm3052, %v3053, %v3051
    %v3055 = vadd.f32 %v3054, 1e-06
    %v3056 = vrcp.pop %v3055
    %v3057 = vmul.f32 %v3056, %v3038
    %v3058 = vmax.f32 %v3057, 0.0
    %s3059 = scalar_lea.vmem [#allocation11], 224
    %v3060 = vld [vmem:[%s3059] sm:$0xff]
    %v3061 = vld [vmem:[%s3059 + $0x8] sm:$0xff]
    %v3062 = vld [vmem:[%s3059 + $0x10] sm:$0xff]
    %v3063 = vld [vmem:[%s3059 + $0x18] sm:$0xff]
    %s3064 = scalar_lea.vmem %s5, 7
    %v3065 = vld [vmem:[%s3064] sm:$0x1]
    %v3067 = vlaneseq
    %v3068 = vshrl.u32 %v3067, 7
    %v3069 = vsub.s32 0, %v3068
    %v3070 = vrot.slane %v3065, %v3069
    %v3073 = vsel %vm188, %v3058, 0
    %3075 = vmatprep.subr.mxu0 0.0
    %3076 = vmatpush1.msra.mxu0 0.0
    %3077 = vmatprep.subr.mxu0 0.0
    %3078 = vmatpush1.msra.mxu0 0.0
    %3079 = vmatprep.subr.mxu0 0.0
    %3080 = vmatpush1.msra.mxu0 0.0
    %3081 = vmatprep.subr.mxu0 0.0
    %3082 = vmatpush1.msra.mxu0 0.0
    %3083 = vmatprep.subr.mxu0 0.0
    %3084 = vmatpush1.msra.mxu0 0.0
    %3085 = vmatprep.subr.mxu0 0.0
    %3086 = vmatpush1.msra.mxu0 0.0
    %3087 = vmatprep.subr.mxu0 0.0
    %3088 = vmatpush1.msra.mxu0 0.0
    %3089 = vmatprep.subr.mxu0 0.0
    %3090 = vmatpush1.msra.mxu0 0.0
    %3091 = vmatprep.subr.mxu0 0.0
    %3092 = vmatpush1.msra.mxu0 0.0
    %3093 = vmatprep.subr.mxu0 0.0
    %3094 = vmatpush1.msra.mxu0 0.0
    %3095 = vmatprep.subr.mxu0 0.0
    %3096 = vmatpush1.msra.mxu0 0.0
    %3097 = vmatprep.subr.mxu0 0.0
    %3098 = vmatpush1.msra.mxu0 0.0
    %3099 = vmatprep.subr.mxu0 0.0
    %3100 = vmatpush1.msra.mxu0 %v3063
    %3101 = vmatprep.subr.mxu0 0.0
    %3102 = vmatpush1.msra.mxu0 %v3062
    %3103 = vmatprep.subr.mxu0 0.0
    %3104 = vmatpush1.msra.mxu0 %v3061
    %3105 = vmatprep.subr.mxu0 0.0
    %3106 = vmatpush1.msra.mxu0 %v3060
    %3107 = vmatprep.subr.mxu0 0.0
    %3108 = vmatpush2.msra.mxu0 0.0
    %3109 = vmatprep.subr.mxu0 0.0
    %3110 = vmatpush2.msra.mxu0 0.0
    %3111 = vmatprep.subr.mxu0 0.0
    %3112 = vmatpush2.msra.mxu0 0.0
    %3113 = vmatprep.subr.mxu0 0.0
    %3114 = vmatpush2.msra.mxu0 0.0
    %3115 = vmatprep.subr.mxu0 0.0
    %3116 = vmatpush2.msra.mxu0 0.0
    %3117 = vmatprep.subr.mxu0 0.0
    %3118 = vmatpush2.msra.mxu0 0.0
    %3119 = vmatprep.subr.mxu0 0.0
    %3120 = vmatpush2.msra.mxu0 0.0
    %3121 = vmatprep.subr.mxu0 0.0
    %3122 = vmatpush2.msra.mxu0 0.0
    %3123 = vmatprep.subr.mxu0 0.0
    %3124 = vmatpush2.msra.mxu0 0.0
    %3125 = vmatprep.subr.mxu0 0.0
    %3126 = vmatpush2.msra.mxu0 0.0
    %3127 = vmatprep.subr.mxu0 0.0
    %3128 = vmatpush2.msra.mxu0 0.0
    %3129 = vmatprep.subr.mxu0 0.0
    %3130 = vmatpush2.msra.mxu0 0.0
    %3131 = vmatprep.subr.mxu0 0.0
    %3132 = vmatpush2.msra.mxu0 0.0
    %3133 = vmatprep.subr.mxu0 0.0
    %3134 = vmatpush2.msra.mxu0 0.0
    %3135 = vmatprep.subr.mxu0 0.0
    %3136 = vmatpush2.msra.mxu0 0.0
    %3137 = vmatprep.subr.mxu0 0.0
    %3138 = vmatpush2.msra.mxu0 0.0
    %3139 = vmatprep.mubr.f32.mxu0 0.0
    %3140 = vmatmul.mubr.f32.gmra.mxu0 %v3073
    %v3141 = vpop.f32.mrf.mxu0
    %v3142 = vadd.f32 %v3070, %v3141
    %v3143 = vpop.f32.mrf.mxu0
    %3144 = vdwg.mxu0
    %v3145 = vadd.f32 %v2844, %v3142
    %v3146 = vsel %vm188, %v3145, 0.0
    %v3147 = vrot.slane %v3146, 4
    %v3148 = vadd.f32 %v3146, %v3147
    %v3149 = vrot.slane %v3148, 2
    %v3150 = vadd.f32 %v3148, %v3149
    %v3151 = vrot.slane %v3150, 1
    %v3152 = vadd.f32 %v3150, %v3151
    %v3153 = vmul.f32 %v3152, %v316
    %v3154 = vsub.f32 %v3145, %v3153
    %v3155 = vmul.f32 %v3154, %v3154
    %v3156 = vsel %vm188, %v3155, 0.0
    %v3157 = vrot.slane %v3156, 4
    %v3158 = vadd.f32 %v3156, %v3157
    %v3159 = vrot.slane %v3158, 2
    %v3160 = vadd.f32 %v3158, %v3159
    %v3161 = vrot.slane %v3160, 1
    %v3162 = vadd.f32 %v3160, %v3161
    %v3163 = vmul.f32 %v3162, %v316
    %v3164 = vrsqrt.pop %v3163
    %v3165 = vmul.f32 %v3163, %v3164
    %vm3166 = vcmp.eq.f32.partialorder %v3163, inf
    %v3167 = vsel %vm3166, %v3163, %v3165
    %vm3168 = vcmp.eq.f32.partialorder %v3163, 0.0
    %v3169 = vand.u32 %v3163, 2147483648
    %v3170 = vsel %vm3168, %v3169, %v3167
    %v3171 = vadd.f32 %v3170, 1e-06
    %v3172 = vrcp.pop %v3171
    %v3173 = vlog2.pop %v3171
    %v3174 = vmul.f32 %v3173, 0.6931472
    %v3175 = vsub.f32 0.0, %v3174
    %v3176 = vsel %vm2451, %v3175, 0.0
    %v3177 = vsel %vm381, %v3176, 0.0
    %3178 = vadd.xlane.f32.xlu0 %v3177
    %v3179 = vpop.xlane.xlu0 %3178
    %v3180 = vrot.slane %v3179, 4
    %v3181 = vadd.f32 %v3179, %v3180
    %v3182 = vrot.slane %v3181, 2
    %v3183 = vadd.f32 %v3181, %v3182
    %v3184 = vrot.slane %v3183, 1
    %v3185 = vadd.f32 %v3183, %v3184
    %s3186 = vtos %v3185
    %v3187 = vstv %s3186
    %v3188 = vadd.f32 %v2842, %v3187
    %v3189 = vmul.f32 %v3172, %v3154
    %v3190 = vsel %vm2497, %v3189, %v3145
    %s3191 = scalar_lea.vmem [#allocation8], 256
    %v3192 = vld [vmem:[%s3191] sm:$0xff]
    %v3193 = vld [vmem:[%s3191 + $0x8] sm:$0xff]
    %v3194 = vld [vmem:[%s3191 + $0x10] sm:$0xff]
    %v3195 = vld [vmem:[%s3191 + $0x18] sm:$0xff]
    %v3197 = vsel %vm188, %v3190, 0
    %3199 = vmatprep.subr.mxu0 0.0
    %3200 = vmatpush1.msra.mxu0 0.0
    %3201 = vmatprep.subr.mxu0 0.0
    %3202 = vmatpush1.msra.mxu0 0.0
    %3203 = vmatprep.subr.mxu0 0.0
    %3204 = vmatpush1.msra.mxu0 0.0
    %3205 = vmatprep.subr.mxu0 0.0
    %3206 = vmatpush1.msra.mxu0 0.0
    %3207 = vmatprep.subr.mxu0 0.0
    %3208 = vmatpush1.msra.mxu0 0.0
    %3209 = vmatprep.subr.mxu0 0.0
    %3210 = vmatpush1.msra.mxu0 0.0
    %3211 = vmatprep.subr.mxu0 0.0
    %3212 = vmatpush1.msra.mxu0 0.0
    %3213 = vmatprep.subr.mxu0 0.0
    %3214 = vmatpush1.msra.mxu0 0.0
    %3215 = vmatprep.subr.mxu0 0.0
    %3216 = vmatpush1.msra.mxu0 0.0
    %3217 = vmatprep.subr.mxu0 0.0
    %3218 = vmatpush1.msra.mxu0 0.0
    %3219 = vmatprep.subr.mxu0 0.0
    %3220 = vmatpush1.msra.mxu0 0.0
    %3221 = vmatprep.subr.mxu0 0.0
    %3222 = vmatpush1.msra.mxu0 0.0
    %3223 = vmatprep.subr.mxu0 0.0
    %3224 = vmatpush1.msra.mxu0 %v3195
    %3225 = vmatprep.subr.mxu0 0.0
    %3226 = vmatpush1.msra.mxu0 %v3194
    %3227 = vmatprep.subr.mxu0 0.0
    %3228 = vmatpush1.msra.mxu0 %v3193
    %3229 = vmatprep.subr.mxu0 0.0
    %3230 = vmatpush1.msra.mxu0 %v3192
    %3231 = vmatprep.subr.mxu0 0.0
    %3232 = vmatpush2.msra.mxu0 0.0
    %3233 = vmatprep.subr.mxu0 0.0
    %3234 = vmatpush2.msra.mxu0 0.0
    %3235 = vmatprep.subr.mxu0 0.0
    %3236 = vmatpush2.msra.mxu0 0.0
    %3237 = vmatprep.subr.mxu0 0.0
    %3238 = vmatpush2.msra.mxu0 0.0
    %3239 = vmatprep.subr.mxu0 0.0
    %3240 = vmatpush2.msra.mxu0 0.0
    %3241 = vmatprep.subr.mxu0 0.0
    %3242 = vmatpush2.msra.mxu0 0.0
    %3243 = vmatprep.subr.mxu0 0.0
    %3244 = vmatpush2.msra.mxu0 0.0
    %3245 = vmatprep.subr.mxu0 0.0
    %3246 = vmatpush2.msra.mxu0 0.0
    %3247 = vmatprep.subr.mxu0 0.0
    %3248 = vmatpush2.msra.mxu0 0.0
    %3249 = vmatprep.subr.mxu0 0.0
    %3250 = vmatpush2.msra.mxu0 0.0
    %3251 = vmatprep.subr.mxu0 0.0
    %3252 = vmatpush2.msra.mxu0 0.0
    %3253 = vmatprep.subr.mxu0 0.0
    %3254 = vmatpush2.msra.mxu0 0.0
    %3255 = vmatprep.subr.mxu0 0.0
    %3256 = vmatpush2.msra.mxu0 0.0
    %3257 = vmatprep.subr.mxu0 0.0
    %3258 = vmatpush2.msra.mxu0 0.0
    %3259 = vmatprep.subr.mxu0 0.0
    %3260 = vmatpush2.msra.mxu0 0.0
    %3261 = vmatprep.subr.mxu0 0.0
    %3262 = vmatpush2.msra.mxu0 0.0
    %3263 = vmatprep.mubr.f32.mxu0 0.0
    %3264 = vmatmul.mubr.f32.gmra.mxu0 %v3197
    %v3265 = vpop.f32.mrf.mxu0
    %v3266 = vadd.f32 0.0, %v3265
    %v3267 = vpop.f32.mrf.mxu0
    %3268 = vdwg.mxu0
    %v3269 = vsel %vm188, %v3266, 0.0
    %v3270 = vrot.slane %v3269, 4
    %v3271 = vadd.f32 %v3269, %v3270
    %v3272 = vrot.slane %v3271, 2
    %v3273 = vadd.f32 %v3271, %v3272
    %v3274 = vrot.slane %v3273, 1
    %v3275 = vadd.f32 %v3273, %v3274
    %v3276 = vmul.f32 %v3275, %v316
    %v3277 = vsub.f32 %v3266, %v3276
    %v3278 = vmul.f32 %v3277, %v3277
    %v3279 = vsel %vm188, %v3278, 0.0
    %v3280 = vrot.slane %v3279, 4
    %v3281 = vadd.f32 %v3279, %v3280
    %v3282 = vrot.slane %v3281, 2
    %v3283 = vadd.f32 %v3281, %v3282
    %v3284 = vrot.slane %v3283, 1
    %v3285 = vadd.f32 %v3283, %v3284
    %v3286 = vmul.f32 %v3285, %v316
    %v3287 = vrsqrt.pop %v3286
    %v3288 = vmul.f32 %v3286, %v3287
    %vm3289 = vcmp.eq.f32.partialorder %v3286, inf
    %v3290 = vsel %vm3289, %v3286, %v3288
    %vm3291 = vcmp.eq.f32.partialorder %v3286, 0.0
    %v3292 = vand.u32 %v3286, 2147483648
    %v3293 = vsel %vm3291, %v3292, %v3290
    %v3294 = vadd.f32 %v3293, 1e-06
    %v3295 = vrcp.pop %v3294
    %v3296 = vmul.f32 %v3295, %v3277
    %v3297 = vmax.f32 %v3296, 0.0
    %s3298 = scalar_lea.vmem [#allocation9], 256
    %v3299 = vld [vmem:[%s3298] sm:$0xff]
    %v3300 = vld [vmem:[%s3298 + $0x8] sm:$0xff]
    %v3301 = vld [vmem:[%s3298 + $0x10] sm:$0xff]
    %v3302 = vld [vmem:[%s3298 + $0x18] sm:$0xff]
    %v3304 = vsel %vm188, %v3297, 0
    %3306 = vmatprep.subr.mxu0 0.0
    %3307 = vmatpush1.msra.mxu0 0.0
    %3308 = vmatprep.subr.mxu0 0.0
    %3309 = vmatpush1.msra.mxu0 0.0
    %3310 = vmatprep.subr.mxu0 0.0
    %3311 = vmatpush1.msra.mxu0 0.0
    %3312 = vmatprep.subr.mxu0 0.0
    %3313 = vmatpush1.msra.mxu0 0.0
    %3314 = vmatprep.subr.mxu0 0.0
    %3315 = vmatpush1.msra.mxu0 0.0
    %3316 = vmatprep.subr.mxu0 0.0
    %3317 = vmatpush1.msra.mxu0 0.0
    %3318 = vmatprep.subr.mxu0 0.0
    %3319 = vmatpush1.msra.mxu0 0.0
    %3320 = vmatprep.subr.mxu0 0.0
    %3321 = vmatpush1.msra.mxu0 0.0
    %3322 = vmatprep.subr.mxu0 0.0
    %3323 = vmatpush1.msra.mxu0 0.0
    %3324 = vmatprep.subr.mxu0 0.0
    %3325 = vmatpush1.msra.mxu0 0.0
    %3326 = vmatprep.subr.mxu0 0.0
    %3327 = vmatpush1.msra.mxu0 0.0
    %3328 = vmatprep.subr.mxu0 0.0
    %3329 = vmatpush1.msra.mxu0 0.0
    %3330 = vmatprep.subr.mxu0 0.0
    %3331 = vmatpush1.msra.mxu0 %v3302
    %3332 = vmatprep.subr.mxu0 0.0
    %3333 = vmatpush1.msra.mxu0 %v3301
    %3334 = vmatprep.subr.mxu0 0.0
    %3335 = vmatpush1.msra.mxu0 %v3300
    %3336 = vmatprep.subr.mxu0 0.0
    %3337 = vmatpush1.msra.mxu0 %v3299
    %3338 = vmatprep.subr.mxu0 0.0
    %3339 = vmatpush2.msra.mxu0 0.0
    %3340 = vmatprep.subr.mxu0 0.0
    %3341 = vmatpush2.msra.mxu0 0.0
    %3342 = vmatprep.subr.mxu0 0.0
    %3343 = vmatpush2.msra.mxu0 0.0
    %3344 = vmatprep.subr.mxu0 0.0
    %3345 = vmatpush2.msra.mxu0 0.0
    %3346 = vmatprep.subr.mxu0 0.0
    %3347 = vmatpush2.msra.mxu0 0.0
    %3348 = vmatprep.subr.mxu0 0.0
    %3349 = vmatpush2.msra.mxu0 0.0
    %3350 = vmatprep.subr.mxu0 0.0
    %3351 = vmatpush2.msra.mxu0 0.0
    %3352 = vmatprep.subr.mxu0 0.0
    %3353 = vmatpush2.msra.mxu0 0.0
    %3354 = vmatprep.subr.mxu0 0.0
    %3355 = vmatpush2.msra.mxu0 0.0
    %3356 = vmatprep.subr.mxu0 0.0
    %3357 = vmatpush2.msra.mxu0 0.0
    %3358 = vmatprep.subr.mxu0 0.0
    %3359 = vmatpush2.msra.mxu0 0.0
    %3360 = vmatprep.subr.mxu0 0.0
    %3361 = vmatpush2.msra.mxu0 0.0
    %3362 = vmatprep.subr.mxu0 0.0
    %3363 = vmatpush2.msra.mxu0 0.0
    %3364 = vmatprep.subr.mxu0 0.0
    %3365 = vmatpush2.msra.mxu0 0.0
    %3366 = vmatprep.subr.mxu0 0.0
    %3367 = vmatpush2.msra.mxu0 0.0
    %3368 = vmatprep.subr.mxu0 0.0
    %3369 = vmatpush2.msra.mxu0 0.0
    %3370 = vmatprep.mubr.f32.mxu0 0.0
    %3371 = vmatmul.mubr.f32.gmra.mxu0 %v3304
    %v3372 = vpop.f32.mrf.mxu0
    %v3373 = vadd.f32 0.0, %v3372
    %v3374 = vpop.f32.mrf.mxu0
    %3375 = vdwg.mxu0
    %v3376 = vsel %vm188, %v3373, 0.0
    %v3377 = vrot.slane %v3376, 4
    %v3378 = vadd.f32 %v3376, %v3377
    %v3379 = vrot.slane %v3378, 2
    %v3380 = vadd.f32 %v3378, %v3379
    %v3381 = vrot.slane %v3380, 1
    %v3382 = vadd.f32 %v3380, %v3381
    %v3383 = vmul.f32 %v3382, %v316
    %v3384 = vsub.f32 %v3373, %v3383
    %v3385 = vmul.f32 %v3384, %v3384
    %v3386 = vsel %vm188, %v3385, 0.0
    %v3387 = vrot.slane %v3386, 4
    %v3388 = vadd.f32 %v3386, %v3387
    %v3389 = vrot.slane %v3388, 2
    %v3390 = vadd.f32 %v3388, %v3389
    %v3391 = vrot.slane %v3390, 1
    %v3392 = vadd.f32 %v3390, %v3391
    %v3393 = vmul.f32 %v3392, %v316
    %v3394 = vrsqrt.pop %v3393
    %v3395 = vmul.f32 %v3393, %v3394
    %vm3396 = vcmp.eq.f32.partialorder %v3393, inf
    %v3397 = vsel %vm3396, %v3393, %v3395
    %vm3398 = vcmp.eq.f32.partialorder %v3393, 0.0
    %v3399 = vand.u32 %v3393, 2147483648
    %v3400 = vsel %vm3398, %v3399, %v3397
    %v3401 = vadd.f32 %v3400, 1e-06
    %v3402 = vrcp.pop %v3401
    %v3403 = vmul.f32 %v3402, %v3384
    %v3404 = vmax.f32 %v3403, 0.0
    %s3405 = scalar_lea.vmem [#allocation11], 256
    %v3406 = vld [vmem:[%s3405] sm:$0xff]
    %v3407 = vld [vmem:[%s3405 + $0x8] sm:$0xff]
    %v3408 = vld [vmem:[%s3405 + $0x10] sm:$0xff]
    %v3409 = vld [vmem:[%s3405 + $0x18] sm:$0xff]
    %s3410 = scalar_lea.vmem %s5, 8
    %v3411 = vld [vmem:[%s3410] sm:$0x1]
    %v3413 = vlaneseq
    %v3414 = vshrl.u32 %v3413, 7
    %v3415 = vsub.s32 0, %v3414
    %v3416 = vrot.slane %v3411, %v3415
    %v3419 = vsel %vm188, %v3404, 0
    %3421 = vmatprep.subr.mxu0 0.0
    %3422 = vmatpush1.msra.mxu0 0.0
    %3423 = vmatprep.subr.mxu0 0.0
    %3424 = vmatpush1.msra.mxu0 0.0
    %3425 = vmatprep.subr.mxu0 0.0
    %3426 = vmatpush1.msra.mxu0 0.0
    %3427 = vmatprep.subr.mxu0 0.0
    %3428 = vmatpush1.msra.mxu0 0.0
    %3429 = vmatprep.subr.mxu0 0.0
    %3430 = vmatpush1.msra.mxu0 0.0
    %3431 = vmatprep.subr.mxu0 0.0
    %3432 = vmatpush1.msra.mxu0 0.0
    %3433 = vmatprep.subr.mxu0 0.0
    %3434 = vmatpush1.msra.mxu0 0.0
    %3435 = vmatprep.subr.mxu0 0.0
    %3436 = vmatpush1.msra.mxu0 0.0
    %3437 = vmatprep.subr.mxu0 0.0
    %3438 = vmatpush1.msra.mxu0 0.0
    %3439 = vmatprep.subr.mxu0 0.0
    %3440 = vmatpush1.msra.mxu0 0.0
    %3441 = vmatprep.subr.mxu0 0.0
    %3442 = vmatpush1.msra.mxu0 0.0
    %3443 = vmatprep.subr.mxu0 0.0
    %3444 = vmatpush1.msra.mxu0 0.0
    %3445 = vmatprep.subr.mxu0 0.0
    %3446 = vmatpush1.msra.mxu0 %v3409
    %3447 = vmatprep.subr.mxu0 0.0
    %3448 = vmatpush1.msra.mxu0 %v3408
    %3449 = vmatprep.subr.mxu0 0.0
    %3450 = vmatpush1.msra.mxu0 %v3407
    %3451 = vmatprep.subr.mxu0 0.0
    %3452 = vmatpush1.msra.mxu0 %v3406
    %3453 = vmatprep.subr.mxu0 0.0
    %3454 = vmatpush2.msra.mxu0 0.0
    %3455 = vmatprep.subr.mxu0 0.0
    %3456 = vmatpush2.msra.mxu0 0.0
    %3457 = vmatprep.subr.mxu0 0.0
    %3458 = vmatpush2.msra.mxu0 0.0
    %3459 = vmatprep.subr.mxu0 0.0
    %3460 = vmatpush2.msra.mxu0 0.0
    %3461 = vmatprep.subr.mxu0 0.0
    %3462 = vmatpush2.msra.mxu0 0.0
    %3463 = vmatprep.subr.mxu0 0.0
    %3464 = vmatpush2.msra.mxu0 0.0
    %3465 = vmatprep.subr.mxu0 0.0
    %3466 = vmatpush2.msra.mxu0 0.0
    %3467 = vmatprep.subr.mxu0 0.0
    %3468 = vmatpush2.msra.mxu0 0.0
    %3469 = vmatprep.subr.mxu0 0.0
    %3470 = vmatpush2.msra.mxu0 0.0
    %3471 = vmatprep.subr.mxu0 0.0
    %3472 = vmatpush2.msra.mxu0 0.0
    %3473 = vmatprep.subr.mxu0 0.0
    %3474 = vmatpush2.msra.mxu0 0.0
    %3475 = vmatprep.subr.mxu0 0.0
    %3476 = vmatpush2.msra.mxu0 0.0
    %3477 = vmatprep.subr.mxu0 0.0
    %3478 = vmatpush2.msra.mxu0 0.0
    %3479 = vmatprep.subr.mxu0 0.0
    %3480 = vmatpush2.msra.mxu0 0.0
    %3481 = vmatprep.subr.mxu0 0.0
    %3482 = vmatpush2.msra.mxu0 0.0
    %3483 = vmatprep.subr.mxu0 0.0
    %3484 = vmatpush2.msra.mxu0 0.0
    %3485 = vmatprep.mubr.f32.mxu0 0.0
    %3486 = vmatmul.mubr.f32.gmra.mxu0 %v3419
    %v3487 = vpop.f32.mrf.mxu0
    %v3488 = vadd.f32 %v3416, %v3487
    %v3489 = vpop.f32.mrf.mxu0
    %3490 = vdwg.mxu0
    %v3491 = vadd.f32 %v3190, %v3488
    %v3492 = vmul.f32 %v3491, -0.5
    %v3493 = vmul.f32 %v3492, %v3491
    %v3494 = vsub.f32 %v3493, 0.9189385
    %v3495 = vsel %vm188, %v3494, 0.0
    %3496 = vadd.xlane.f32.xlu0 %v3495
    %v3497 = vpop.xlane.xlu0 %3496
    %v3498 = vadd.f32 %v3188, %v3497
    %v3499 = vsub.f32 0.0, %v3498
    %vm3500 = vcmask 7168
    %v3501 = vsel %vm3500, %v3499, 0.0
    %3502 = vadd.xlane.f32.xlu0 %v3501
    %v3503 = vpop.xlane.xlu0 %3502
    %v3504 = vrot.slane %v3503, 4
    %v3505 = vadd.f32 %v3503, %v3504
    %v3506 = vrot.slane %v3505, 2
    %v3507 = vadd.f32 %v3505, %v3506
    %v3508 = vrot.slane %v3507, 1
    %v3509 = vadd.f32 %v3507, %v3508
    %s3510 = vtos %v3509
    %v3511 = vrcp.pop 8.0
    %s3512 = vtos %v3511
    %s3513 = smul.f32 %s3510, %s3512
    %s3514 = smul.f32 %s3513, 0.04508422
    %v3515 = vld [vmem:[#allocation12] sm:$0xff]
    %v3516 = vld [vmem:[#allocation12 + $0x8] sm:$0xff]
    %v3517 = vld [vmem:[#allocation12 + $0x10] sm:$0xff]
    %v3518 = vld [vmem:[#allocation12 + $0x18] sm:$0xff]
    %v3520 = vsel %vm188, %v3491, 0
    %3522 = vmatprep.subr.mxu0 0.0
    %3523 = vmatpush1.msra.mxu0 0.0
    %3524 = vmatprep.subr.mxu0 0.0
    %3525 = vmatpush1.msra.mxu0 0.0
    %3526 = vmatprep.subr.mxu0 0.0
    %3527 = vmatpush1.msra.mxu0 0.0
    %3528 = vmatprep.subr.mxu0 0.0
    %3529 = vmatpush1.msra.mxu0 0.0
    %3530 = vmatprep.subr.mxu0 0.0
    %3531 = vmatpush1.msra.mxu0 0.0
    %3532 = vmatprep.subr.mxu0 0.0
    %3533 = vmatpush1.msra.mxu0 0.0
    %3534 = vmatprep.subr.mxu0 0.0
    %3535 = vmatpush1.msra.mxu0 0.0
    %3536 = vmatprep.subr.mxu0 0.0
    %3537 = vmatpush1.msra.mxu0 0.0
    %3538 = vmatprep.subr.mxu0 0.0
    %3539 = vmatpush1.msra.mxu0 0.0
    %3540 = vmatprep.subr.mxu0 0.0
    %3541 = vmatpush1.msra.mxu0 0.0
    %3542 = vmatprep.subr.mxu0 0.0
    %3543 = vmatpush1.msra.mxu0 0.0
    %3544 = vmatprep.subr.mxu0 0.0
    %3545 = vmatpush1.msra.mxu0 0.0
    %3546 = vmatprep.subr.mxu0 0.0
    %3547 = vmatpush1.msra.mxu0 %v3518
    %3548 = vmatprep.subr.mxu0 0.0
    %3549 = vmatpush1.msra.mxu0 %v3517
    %3550 = vmatprep.subr.mxu0 0.0
    %3551 = vmatpush1.msra.mxu0 %v3516
    %3552 = vmatprep.subr.mxu0 0.0
    %3553 = vmatpush1.msra.mxu0 %v3515
    %3554 = vmatprep.subr.mxu0 0.0
    %3555 = vmatpush2.msra.mxu0 0.0
    %3556 = vmatprep.subr.mxu0 0.0
    %3557 = vmatpush2.msra.mxu0 0.0
    %3558 = vmatprep.subr.mxu0 0.0
    %3559 = vmatpush2.msra.mxu0 0.0
    %3560 = vmatprep.subr.mxu0 0.0
    %3561 = vmatpush2.msra.mxu0 0.0
    %3562 = vmatprep.subr.mxu0 0.0
    %3563 = vmatpush2.msra.mxu0 0.0
    %3564 = vmatprep.subr.mxu0 0.0
    %3565 = vmatpush2.msra.mxu0 0.0
    %3566 = vmatprep.subr.mxu0 0.0
    %3567 = vmatpush2.msra.mxu0 0.0
    %3568 = vmatprep.subr.mxu0 0.0
    %3569 = vmatpush2.msra.mxu0 0.0
    %3570 = vmatprep.subr.mxu0 0.0
    %3571 = vmatpush2.msra.mxu0 0.0
    %3572 = vmatprep.subr.mxu0 0.0
    %3573 = vmatpush2.msra.mxu0 0.0
    %3574 = vmatprep.subr.mxu0 0.0
    %3575 = vmatpush2.msra.mxu0 0.0
    %3576 = vmatprep.subr.mxu0 0.0
    %3577 = vmatpush2.msra.mxu0 0.0
    %3578 = vmatprep.subr.mxu0 0.0
    %3579 = vmatpush2.msra.mxu0 0.0
    %3580 = vmatprep.subr.mxu0 0.0
    %3581 = vmatpush2.msra.mxu0 0.0
    %3582 = vmatprep.subr.mxu0 0.0
    %3583 = vmatpush2.msra.mxu0 0.0
    %3584 = vmatprep.subr.mxu0 0.0
    %3585 = vmatpush2.msra.mxu0 0.0
    %3586 = vmatprep.mubr.f32.mxu0 0.0
    %3587 = vmatmul.mubr.f32.gmra.mxu0 %v3520
    %v3588 = vpop.f32.mrf.mxu0
    %v3589 = vadd.f32 0.0, %v3588
    %v3590 = vpop.f32.mrf.mxu0
    %3591 = vdwg.mxu0
    %3592 = vst.msk [vmem:[#allocation14] sm:$0xff] %vm188, %v3589
    %s3593 = scalar_lea.smem [#allocation15], 0
    %3594 = sst [smem:[%s3593]] %s3514
    // Predicated region
    $region54: #{tpu_custom_call.1} parent=1 // pred_check
      _
    $region55: #{tpu_custom_call.1} parent=1 // pred_check_branch
      %3596 = sbr.rel (0) target = $region57
    $region56: #{tpu_custom_call.1} parent=1 // pred_region
      %s3598 = ssub.s32 128, 128
      %3599 = vsyncadd [#allocation4], %s3598
      %s3601 = sshll.u32 [#allocation14], 4
      %s3602 = int_to_ptr.vmem [resolvable:$true] %s3601
      %3604 = dma.vmem_to_hbm [thread:$0]  %s3602, 128, %s7, [#allocation4]
    $region57: #{tpu_custom_call.1} parent=1 // pred_fallthru
      _
    // Predicated region
    $region58: #{tpu_custom_call.1} parent=1 // pred_check
      _
    $region59: #{tpu_custom_call.1} parent=1 // pred_check_branch
      %3606 = sbr.rel (0) target = $region61
    $region60: #{tpu_custom_call.1} parent=1 // pred_region
      %s3608 = ssub.s32 16, 16
      %3609 = vsyncadd [#allocation5], %s3608
      %3612 = dma.smem_to_hbm [#allocation15], 16, %s8, [#allocation5]
    $region61: #{tpu_custom_call.1} parent=1 // pred_fallthru
      _
    // Predicated region
    $region62: #{tpu_custom_call.1} parent=1 // pred_check
      _
    $region63: #{tpu_custom_call.1} parent=1 // pred_check_branch
      %3614 = sbr.rel (0) target = $region65
    $region64: #{tpu_custom_call.1} parent=1 // pred_region
      %3615 = dma.done [#allocation4], 128
    $region65: #{tpu_custom_call.1} parent=1 // pred_fallthru
      _
    // Predicated region
    $region66: #{tpu_custom_call.1} parent=1 // pred_check
      _
    $region67: #{tpu_custom_call.1} parent=1 // pred_check_branch
      %3617 = sbr.rel (0) target = $region69
    $region68: #{tpu_custom_call.1} parent=1 // pred_region
      %3618 = dma.done [#allocation5], 16
    $region69: #{tpu_custom_call.1} parent=1 // pred_fallthru
      _
    %3619 = sfence
    %3620 = vsyncpa [#allocation3], 1
    %3621 = vsyncpa [#allocation7], 1
    %3622 = vsyncpa [#allocation10], 1
    %3623 = vsyncpa [#allocation13], 1
    %3624 = vsyncpa [#allocation4], 1
    %3625 = vsyncpa [#allocation5], 1

</llo_original>
